<compile_context>
chip_gen: v5e
topology: v5e:2x2
jax: 0.10.0
libtpu: 0.0.40
codegen_flags: <defaults>
</compile_context>

<pallas_src>
import functools

import jax
import jax.numpy as jnp
from jax.experimental import pallas as pl
from jax.experimental.pallas import tpu as pltpu

MATMUL_DTYPE = jnp.bfloat16      # MXU-native operands; accumulation stays f32.
_ALIGN = 16                      # sublane alignment valid for both f32 and bf16
_MAX_ROW_BLOCK = 512             # ~85% of HBM roofline per measured tiling data
_VMEM_LIMIT = 32 * 1024 * 1024   # > v5e 16MiB default, <= v6e/v7x scoped default


def _round_up(v, m):
    return -(-v // m) * m


def _pick_row_block(rows, s_max):
    """Row block (multiple of the halo) and halo (covers the largest tap shift)."""
    halo = _round_up(max(s_max, 1), _ALIGN)
    rb = _round_up(min(_MAX_ROW_BLOCK, _round_up(rows, _ALIGN)), halo)
    return rb, halo


# ----------------------------------------------------------------------------
# Pallas kernel: one fused (strided / transposed) convolution layer, one row
# block per grid step.
#
#   out_phase_p[r, :] = act( bias + concat_t( X[in_phase_t][r + shift_t, :] )
#                                   @ vstack_t( W_t ) )          (ONE matmul)
#
# plan: tuple over output phases, each a tuple of static (in_phase, shift)
# taps.  Per-phase weights are pre-stacked to (n_taps*Cin, Cout) on the host.
# The output packs all phases along lanes: (row_block, P_out*Cout).
# ----------------------------------------------------------------------------
def _phase_conv_kernel(plan, act, xlo_ref, xhi_ref, *rest):
    n_phases = len(plan)
    w_refs = rest[:n_phases]
    b_ref = rest[n_phases]
    o_ref = rest[n_phases + 1]
    rb = o_ref.shape[0]

    # Current row block plus its halo: every tap window below is a static slice.
    xx = jnp.concatenate([xlo_ref[...], xhi_ref[...]], axis=1)   # (P_in, rb+halo, Cin)

    outs = []
    for phase, taps in enumerate(plan):                          # static unroll (<=4)
        win = [xx[ip, shift:shift + rb, :] for (ip, shift) in taps]
        xs = win[0] if len(win) == 1 else jnp.concatenate(win, axis=-1)
        outs.append(jnp.dot(xs, w_refs[phase][...],
                            preferred_element_type=jnp.float32))  # MXU, f32 acc
    y = outs[0] if len(outs) == 1 else jnp.concatenate(outs, axis=-1)
    y = y + b_ref[...]                                            # (1, P*Cout) f32
    if act == "relu":
        y = jnp.maximum(y, 0.0)
    elif act == "tanh":
        y = jnp.tanh(y)
    o_ref[...] = y.astype(o_ref.dtype)


def _phase_conv_call(plan, act, x3, w_list, b_packed, rows, rb, halo, out_dtype):
    p_in, _, cin = x3.shape
    packed_cout = b_packed.shape[-1]
    nb = -(-rows // rb)
    ratio = rb // halo
    vmem = pl.BlockSpec(memory_space=pltpu.MemorySpace.VMEM)      # whole-array resident
    in_specs = [
        pl.BlockSpec((p_in, rb, cin), lambda i: (0, i, 0)),                 # row block
        pl.BlockSpec((p_in, halo, cin), lambda i: (0, (i + 1) * ratio, 0)),  # halo
    ] + [vmem] * (len(plan) + 1)                                  # per-phase W + bias
    return pl.pallas_call(
        functools.partial(_phase_conv_kernel, plan, act),
        grid=(nb,),
        out_shape=jax.ShapeDtypeStruct((nb * rb, packed_cout), out_dtype),
        in_specs=in_specs,
        out_specs=pl.BlockSpec((rb, packed_cout), lambda i: (i, 0)),
        compiler_params=pltpu.CompilerParams(
            dimension_semantics=("parallel",),   # v7x: 2 TCs split the row blocks
            vmem_limit_bytes=_VMEM_LIMIT),
    )(x3, x3, *w_list, b_packed)                 # same array twice: block + halo view


# ----------------------------------------------------------------------------
# Layer wrappers (cheap layout glue only; all MACs are in the Pallas kernel)
# ----------------------------------------------------------------------------
def conv2d_s2_nhwc(x, w, b, act, out_dtype=MATMUL_DTYPE):
    """3x3 conv, stride 2, padding 1.  x: (N,H,W,Cin) NHWC, w: (Cout,Cin,3,3)."""
    x = x.astype(MATMUL_DTYPE)
    n, h, wd, cin = x.shape
    cout = w.shape[0]
    assert w.shape[2] == 3 and h % 2 == 0 and wd % 2 == 0
    ho, wo = h // 2, wd // 2
    hh, wh = ho + 1, wo + 1                       # phase grid of the padded input
    # pad=1, then 2x2 space-to-depth: the strided conv becomes a sum of dense taps.
    xp = jnp.pad(x, ((0, 0), (1, 1), (1, 1), (0, 0)))
    xph = xp.reshape(n, hh, 2, wh, 2, cin).transpose(2, 4, 0, 1, 3, 5)
    rows = n * hh * wh
    x4 = xph.reshape(4, rows, cin)

    taps, w_mats = [], []
    for kh in range(3):
        for kw in range(3):
            taps.append(((kh % 2) * 2 + (kw % 2), (kh // 2) * wh + (kw // 2)))
            w_mats.append(w[:, :, kh, kw].T)      # (Cin, Cout)
    plan = (tuple(taps),)
    s_max = max(s for (_, s) in taps)

    rb, halo = _pick_row_block(rows, s_max)
    nb = -(-rows // rb)
    x4 = jnp.pad(x4, ((0, 0), (0, nb * rb + halo - rows), (0, 0)))
    w_cat = jnp.concatenate(w_mats, axis=0).astype(MATMUL_DTYPE)   # (9*Cin, Cout)
    b_packed = b.reshape(1, cout).astype(jnp.float32)

    out = _phase_conv_call(plan, act, x4, [w_cat], b_packed, rows, rb, halo, out_dtype)
    # TODO(synk): fold the (hh,wh)->(ho,wo) border discard into the kernel row range.
    return out[:rows].reshape(n, hh, wh, cout)[:, :ho, :wo, :]


def conv_transpose2d_s2_nhwc(x, w, b, padding, act, out_dtype=MATMUL_DTYPE):
    """ConvTranspose2d stride 2 via sub-pixel (output-phase) decomposition.
    x: (N,H,W,Cin) NHWC, w: (Cin,Cout,K,K) (PyTorch ConvTranspose2d layout)."""
    x = x.astype(MATMUL_DTYPE)
    n, h, wd, cin = x.shape
    _, cout, k, _ = w.shape
    h_out = (h - 1) * 2 - 2 * padding + k
    w_out = (wd - 1) * 2 - 2 * padding + k

    def phase_taps(r):
        # output index o = 2q+r uses kernel taps with parity (r+padding)%2,
        # reading input index q + d, d = (r + padding - k_) // 2
        return [(k_, (r + padding - k_) // 2)
                for k_ in range(k) if k_ % 2 == (r + padding) % 2]

    q_h = [(h_out - r + 1) // 2 for r in range(2)]
    q_w = [(w_out - r + 1) // 2 for r in range(2)]
    taps_1d = [phase_taps(r) for r in range(2)]
    d_all = [d for tp in taps_1d for (_, d) in tp]
    pf = max(0, -min(d_all))
    pb_h = max(0, max(q_h[r] - 1 + d for r in range(2) for (_, d) in taps_1d[r]) - (h - 1))
    pb_w = max(0, max(q_w[r] - 1 + d for r in range(2) for (_, d) in taps_1d[r]) - (wd - 1))
    hp, wp = h + pf + pb_h, wd + pf + pb_w
    xp = jnp.pad(x, ((0, 0), (pf, pb_h), (pf, pb_w), (0, 0)))
    rows = n * hp * wp
    x1 = xp.reshape(1, rows, cin)

    plan, w_list = [], []
    for rh in range(2):
        for rw in range(2):
            taps, mats = [], []
            for (kh, dh) in taps_1d[rh]:
                for (kw, dw) in taps_1d[rw]:
                    taps.append((0, (dh + pf) * wp + (dw + pf)))
                    mats.append(w[:, :, kh, kw])                   # (Cin, Cout)
            plan.append(tuple(taps))
            w_list.append(jnp.concatenate(mats, axis=0).astype(MATMUL_DTYPE))
    plan = tuple(plan)
    s_max = max(s for tp in plan for (_, s) in tp)

    rb, halo = _pick_row_block(rows, s_max)
    nb = -(-rows // rb)
    x1 = jnp.pad(x1, ((0, 0), (0, nb * rb + halo - rows), (0, 0)))
    b_packed = jnp.tile(b.reshape(1, cout).astype(jnp.float32), (1, 4))  # (1, 4*Cout)

    out = _phase_conv_call(plan, act, x1, w_list, b_packed, rows, rb, halo, out_dtype)

    # Sub-pixel recombination: reshape/transpose interleave (no strided scatters).
    qh, qw = max(q_h), max(q_w)
    assert qh <= hp and qw <= wp
    y = out[:rows].reshape(n, hp, wp, 2, 2, cout)[:, :qh, :qw]     # [n,a,b,rh,rw,c]
    y = y.transpose(0, 1, 3, 2, 4, 5).reshape(n, 2 * qh, 2 * qw, cout)
    return y[:, :h_out, :w_out, :]


# ----------------------------------------------------------------------------
# Parameters (deterministic, PyTorch-default-style uniform init)
# ----------------------------------------------------------------------------
def _init_conv(key, cout, cin, k):
    k1, k2 = jax.random.split(key)
    bound = 1.0 / float(cin * k * k) ** 0.5
    w = jax.random.uniform(k1, (cout, cin, k, k), jnp.float32, -bound, bound)
    b = jax.random.uniform(k2, (cout,), jnp.float32, -bound, bound)
    return w, b


def _init_convT(key, cin, cout, k):
    k1, k2 = jax.random.split(key)
    bound = 1.0 / float(cout * k * k) ** 0.5
    w = jax.random.uniform(k1, (cin, cout, k, k), jnp.float32, -bound, bound)
    b = jax.random.uniform(k2, (cout,), jnp.float32, -bound, bound)
    return w, b


def init_params(key):
    ks = jax.random.split(key, 6)
    return (
        _init_conv(ks[0], 32, 3, 3),    # Conv2d(3, 32, 3, s=2, p=1)
        _init_conv(ks[1], 64, 32, 3),   # Conv2d(32, 64, 3, s=2, p=1)
        _init_conv(ks[2], 32, 64, 3),   # Conv2d(64, 32, 3, s=2, p=1)
        _init_convT(ks[3], 32, 64, 3),  # ConvTranspose2d(32, 64, 3, s=2, p=1)
        _init_convT(ks[4], 64, 32, 3),  # ConvTranspose2d(64, 32, 3, s=2, p=0)
        _init_convT(ks[5], 32, 3, 2),   # ConvTranspose2d(32, 3, 2, s=2, p=1)
    )


# ----------------------------------------------------------------------------
# Forward pass == autoencoder.forward   (NCHW in, NCHW out)
# ----------------------------------------------------------------------------
@jax.jit
def forward(params, x):
    (w1, b1), (w2, b2), (w3, b3), (w4, b4), (w5, b5), (w6, b6) = params
    h = jnp.transpose(x, (0, 2, 3, 1)).astype(MATMUL_DTYPE)       # NCHW->NHWC + bf16 once
    # encoder (intermediates stay bf16; returned tensors are f32)
    h = conv2d_s2_nhwc(h, w1, b1, "relu")
    h = conv2d_s2_nhwc(h, w2, b2, "relu")
    xe = conv2d_s2_nhwc(h, w3, b3, "relu", out_dtype=jnp.float32)
    # decoder
    d = conv_transpose2d_s2_nhwc(xe, w4, b4, 1, "relu")
    d = conv_transpose2d_s2_nhwc(d, w5, b5, 0, "relu")
    xd = conv_transpose2d_s2_nhwc(d, w6, b6, 1, "tanh", out_dtype=jnp.float32)
    return jnp.transpose(xe, (0, 3, 1, 2)), jnp.transpose(xd, (0, 3, 1, 2))


# ----------------------------------------------------------------------------
# Pure-XLA f32 reference (numerical self-check only)
# ----------------------------------------------------------------------------
def _ref_conv(x, w, b, stride, padding):
    y = jax.lax.conv_general_dilated(
        x, w, (stride, stride), [(padding, padding)] * 2,
        dimension_numbers=("NCHW", "OIHW", "NCHW"),
        precision=jax.lax.Precision.HIGHEST)
    return y + b.reshape(1, -1, 1, 1)


def _ref_conv_transpose(x, w, b, stride, padding):
    k = w.shape[2]
    wc = jnp.flip(w, axis=(2, 3)).transpose(1, 0, 2, 3)
    y = jax.lax.conv_general_dilated(
        x, wc, (1, 1), [(k - 1 - padding, k - 1 - padding)] * 2,
        lhs_dilation=(stride, stride),
        dimension_numbers=("NCHW", "OIHW", "NCHW"),
        precision=jax.lax.Precision.HIGHEST)
    return y + b.reshape(1, -1, 1, 1)


@jax.jit
def reference_forward(params, x):
    (w1, b1), (w2, b2), (w3, b3), (w4, b4), (w5, b5), (w6, b6) = params
    relu = lambda t: jnp.maximum(t, 0.0)
    h = relu(_ref_conv(x, w1, b1, 2, 1))
    h = relu(_ref_conv(h, w2, b2, 2, 1))
    xe = relu(_ref_conv(h, w3, b3, 2, 1))
    d = relu(_ref_conv_transpose(xe, w4, b4, 2, 1))
    d = relu(_ref_conv_transpose(d, w5, b5, 2, 0))
    xd = jnp.tanh(_ref_conv_transpose(d, w6, b6, 2, 1))
    return xe, xd


if __name__ == "__main__":
    key = jax.random.PRNGKey(0)
    kx, kp = jax.random.split(key)
    x = jax.random.normal(kx, (2, 3, 16, 16), dtype=jnp.float32)
    params = init_params(kp)

    x_e, x_d = forward(params, x)
    jax.block_until_ready((x_e, x_d))

    # Shape checks mirror the PyTorch module at 16x16 input:
    # encoder: 16 -> 8 -> 4 -> 2 ; decoder: 2 -> 3 -> 7 -> 12
    assert x_e.shape == (2, 32, 2, 2), x_e.shape
    assert x_d.shape == (2, 3, 12, 12), x_d.shape
    assert x_e.dtype == jnp.float32 and x_d.dtype == jnp.float32
    assert bool(jnp.all(x_e >= 0.0))                 # ReLU output
    assert bool(jnp.all(jnp.abs(x_d) <= 1.0))        # Tanh output

    # Numerical self-check against the pure-XLA f32 reference.
    # Tolerance sized for the bf16-operand / f32-accumulation MXU path.
    r_e, r_d = reference_forward(params, x)
    assert bool(jnp.allclose(x_e, r_e, atol=3e-2, rtol=3e-2)), "encoder mismatch"
    assert bool(jnp.allclose(x_d, r_d, atol=3e-2, rtol=3e-2)), "decoder mismatch"

    print("KERNEL_OK")
</pallas_src>

<mosaic_0001>
module attributes {stable_mosaic.version = 11 : i64} {
  func.func @_phase_conv_kernel(%arg0: i32, %arg1: memref<4x176x3xbf16, #tpu.memory_space<vmem>>, %arg2: memref<4x16x3xbf16, #tpu.memory_space<vmem>>, %arg3: memref<27x32xbf16, #tpu.memory_space<vmem>>, %arg4: memref<1x32xf32, #tpu.memory_space<vmem>>, %arg5: memref<176x32xbf16, #tpu.memory_space<vmem>>) attributes {dimension_semantics = [#tpu.dimension_semantics<parallel>], iteration_bounds = array<i64: 1>, scalar_prefetch = 0 : i64, scratch_operands = 0 : i64, tpu.core_type = #tpu.core_type<tc>, window_params = [{transform_indices = @transform_0, window_bounds = array<i64: 4, 176, 3>}, {transform_indices = @transform_1, window_bounds = array<i64: 4, 16, 3>}, {pipeline_mode = #tpu.pipeline_mode<synchronous>, transform_indices = @transform_2, window_bounds = array<i64: 27, 32>}, {pipeline_mode = #tpu.pipeline_mode<synchronous>, transform_indices = @transform_3, window_bounds = array<i64: 1, 32>}, {transform_indices = @transform_4, window_bounds = array<i64: 176, 32>}]} {
    %c0 = arith.constant 0 : index
    %c0_0 = arith.constant 0 : index
    %c0_1 = arith.constant 0 : index
    %0 = vector.load %arg1[%c0, %c0_0, %c0_1] : memref<4x176x3xbf16, #tpu.memory_space<vmem>>, vector<4x176x3xbf16>
    %c0_2 = arith.constant 0 : index
    %c0_3 = arith.constant 0 : index
    %c0_4 = arith.constant 0 : index
    %1 = vector.load %arg2[%c0_2, %c0_3, %c0_4] : memref<4x16x3xbf16, #tpu.memory_space<vmem>>, vector<4x16x3xbf16>
    %2 = tpu.concatenate %0, %1 in 1 : vector<4x176x3xbf16>, vector<4x16x3xbf16> -> vector<4x192x3xbf16>
    %3 = vector.extract_strided_slice %2 {offsets = [0, 0, 0], sizes = [1, 176, 3], strides = [1, 1, 1]} : vector<4x192x3xbf16> to vector<1x176x3xbf16>
    %4 = vector.shape_cast %3 : vector<1x176x3xbf16> to vector<176x3xbf16>
    %5 = vector.extract_strided_slice %2 {offsets = [1, 0, 0], sizes = [1, 176, 3], strides = [1, 1, 1]} : vector<4x192x3xbf16> to vector<1x176x3xbf16>
    %6 = vector.shape_cast %5 : vector<1x176x3xbf16> to vector<176x3xbf16>
    %7 = vector.extract_strided_slice %2 {offsets = [0, 1, 0], sizes = [1, 176, 3], strides = [1, 1, 1]} : vector<4x192x3xbf16> to vector<1x176x3xbf16>
    %8 = vector.shape_cast %7 : vector<1x176x3xbf16> to vector<176x3xbf16>
    %9 = vector.extract_strided_slice %2 {offsets = [2, 0, 0], sizes = [1, 176, 3], strides = [1, 1, 1]} : vector<4x192x3xbf16> to vector<1x176x3xbf16>
    %10 = vector.shape_cast %9 : vector<1x176x3xbf16> to vector<176x3xbf16>
    %11 = vector.extract_strided_slice %2 {offsets = [3, 0, 0], sizes = [1, 176, 3], strides = [1, 1, 1]} : vector<4x192x3xbf16> to vector<1x176x3xbf16>
    %12 = vector.shape_cast %11 : vector<1x176x3xbf16> to vector<176x3xbf16>
    %13 = vector.extract_strided_slice %2 {offsets = [2, 1, 0], sizes = [1, 176, 3], strides = [1, 1, 1]} : vector<4x192x3xbf16> to vector<1x176x3xbf16>
    %14 = vector.shape_cast %13 : vector<1x176x3xbf16> to vector<176x3xbf16>
    %15 = vector.extract_strided_slice %2 {offsets = [0, 9, 0], sizes = [1, 176, 3], strides = [1, 1, 1]} : vector<4x192x3xbf16> to vector<1x176x3xbf16>
    %16 = vector.shape_cast %15 : vector<1x176x3xbf16> to vector<176x3xbf16>
    %17 = vector.extract_strided_slice %2 {offsets = [1, 9, 0], sizes = [1, 176, 3], strides = [1, 1, 1]} : vector<4x192x3xbf16> to vector<1x176x3xbf16>
    %18 = vector.shape_cast %17 : vector<1x176x3xbf16> to vector<176x3xbf16>
    %19 = vector.extract_strided_slice %2 {offsets = [0, 10, 0], sizes = [1, 176, 3], strides = [1, 1, 1]} : vector<4x192x3xbf16> to vector<1x176x3xbf16>
    %20 = vector.shape_cast %19 : vector<1x176x3xbf16> to vector<176x3xbf16>
    %21 = tpu.concatenate %4, %6, %8, %10, %12, %14, %16, %18, %20 in 1 : vector<176x3xbf16>, vector<176x3xbf16>, vector<176x3xbf16>, vector<176x3xbf16>, vector<176x3xbf16>, vector<176x3xbf16>, vector<176x3xbf16>, vector<176x3xbf16>, vector<176x3xbf16> -> vector<176x27xbf16>
    %c0_5 = arith.constant 0 : index
    %c0_6 = arith.constant 0 : index
    %22 = vector.load %arg3[%c0_5, %c0_6] : memref<27x32xbf16, #tpu.memory_space<vmem>>, vector<27x32xbf16>
    %cst = arith.constant dense<0.000000e+00> : vector<176x32xf32>
    %23 = tpu.matmul %21, %22, %cst {dimension_numbers = #tpu.dot_dimension_numbers<[1], [0], [0], [1], [0, 0, 1, 1], [], []>} : vector<176x27xbf16>, vector<27x32xbf16>, vector<176x32xf32> -> vector<176x32xf32>
    %c0_7 = arith.constant 0 : index
    %c0_8 = arith.constant 0 : index
    %24 = vector.load %arg4[%c0_7, %c0_8] : memref<1x32xf32, #tpu.memory_space<vmem>>, vector<1x32xf32>
    %25 = vector.broadcast %24 : vector<1x32xf32> to vector<176x32xf32>
    %26 = arith.addf %23, %25 : vector<176x32xf32>
    %cst_9 = arith.constant 0.000000e+00 : f32
    %27 = vector.broadcast %cst_9 : f32 to vector<176x32xf32>
    %28 = arith.maximumf %26, %27 : vector<176x32xf32>
    %29 = arith.truncf %28 : vector<176x32xf32> to vector<176x32xbf16>
    %c0_10 = arith.constant 0 : index
    %c0_11 = arith.constant 0 : index
    %30 = vector.load %arg5[%c0_10, %c0_11] : memref<176x32xbf16, #tpu.memory_space<vmem>>, vector<176x32xbf16>
    tpu.vector_store %arg5[%c0_10, %c0_11], %29 {strides = array<i32>} : memref<176x32xbf16, #tpu.memory_space<vmem>>, vector<176x32xbf16>,
    return
  }
  func.func @transform_0(%arg0: i32) -> (i32, i32, i32) {
    %c0_i32 = arith.constant 0 : i32
    %c0_i32_0 = arith.constant 0 : i32
    %c0_i32_1 = arith.constant 0 : i32
    return %c0_i32, %arg0, %c0_i32_0 : i32, i32, i32
  }
  func.func @transform_1(%arg0: i32) -> (i32, i32, i32) {
    %c1_i32 = arith.constant 1 : i32
    %0 = arith.addi %arg0, %c1_i32 : i32
    %c11_i32 = arith.constant 11 : i32
    %1 = arith.muli %0, %c11_i32 : i32
    %c0_i32 = arith.constant 0 : i32
    %c0_i32_0 = arith.constant 0 : i32
    %c0_i32_1 = arith.constant 0 : i32
    return %c0_i32, %1, %c0_i32_0 : i32, i32, i32
  }
  func.func @transform_2(%arg0: i32) -> (i32, i32) {
    %c0_i32 = arith.constant 0 : i32
    %c0_i32_0 = arith.constant 0 : i32
    %c0_i32_1 = arith.constant 0 : i32
    return %c0_i32, %c0_i32_0 : i32, i32
  }
  func.func @transform_3(%arg0: i32) -> (i32, i32) {
    %c0_i32 = arith.constant 0 : i32
    %c0_i32_0 = arith.constant 0 : i32
    %c0_i32_1 = arith.constant 0 : i32
    return %c0_i32, %c0_i32_0 : i32, i32
  }
  func.func @transform_4(%arg0: i32) -> (i32, i32) {
    %c0_i32 = arith.constant 0 : i32
    %c0_i32_0 = arith.constant 0 : i32
    return %arg0, %c0_i32 : i32, i32
  }
}

module attributes {stable_mosaic.version = 11 : i64} {
  func.func @_phase_conv_kernel(%arg0: i32, %arg1: memref<4x64x32xbf16, #tpu.memory_space<vmem>>, %arg2: memref<4x16x32xbf16, #tpu.memory_space<vmem>>, %arg3: memref<288x64xbf16, #tpu.memory_space<vmem>>, %arg4: memref<1x64xf32, #tpu.memory_space<vmem>>, %arg5: memref<64x64xbf16, #tpu.memory_space<vmem>>) attributes {dimension_semantics = [#tpu.dimension_semantics<parallel>], iteration_bounds = array<i64: 1>, scalar_prefetch = 0 : i64, scratch_operands = 0 : i64, tpu.core_type = #tpu.core_type<tc>, window_params = [{transform_indices = @transform_0, window_bounds = array<i64: 4, 64, 32>}, {transform_indices = @transform_1, window_bounds = array<i64: 4, 16, 32>}, {pipeline_mode = #tpu.pipeline_mode<synchronous>, transform_indices = @transform_2, window_bounds = array<i64: 288, 64>}, {pipeline_mode = #tpu.pipeline_mode<synchronous>, transform_indices = @transform_3, window_bounds = array<i64: 1, 64>}, {transform_indices = @transform_4, window_bounds = array<i64: 64, 64>}]} {
    %c0 = arith.constant 0 : index
    %c0_0 = arith.constant 0 : index
    %c0_1 = arith.constant 0 : index
    %0 = vector.load %arg1[%c0, %c0_0, %c0_1] : memref<4x64x32xbf16, #tpu.memory_space<vmem>>, vector<4x64x32xbf16>
    %c0_2 = arith.constant 0 : index
    %c0_3 = arith.constant 0 : index
    %c0_4 = arith.constant 0 : index
    %1 = vector.load %arg2[%c0_2, %c0_3, %c0_4] : memref<4x16x32xbf16, #tpu.memory_space<vmem>>, vector<4x16x32xbf16>
    %2 = tpu.concatenate %0, %1 in 1 : vector<4x64x32xbf16>, vector<4x16x32xbf16> -> vector<4x80x32xbf16>
    %3 = vector.extract_strided_slice %2 {offsets = [0, 0, 0], sizes = [1, 64, 32], strides = [1, 1, 1]} : vector<4x80x32xbf16> to vector<1x64x32xbf16>
    %4 = vector.shape_cast %3 : vector<1x64x32xbf16> to vector<64x32xbf16>
    %5 = vector.extract_strided_slice %2 {offsets = [1, 0, 0], sizes = [1, 64, 32], strides = [1, 1, 1]} : vector<4x80x32xbf16> to vector<1x64x32xbf16>
    %6 = vector.shape_cast %5 : vector<1x64x32xbf16> to vector<64x32xbf16>
    %7 = vector.extract_strided_slice %2 {offsets = [0, 1, 0], sizes = [1, 64, 32], strides = [1, 1, 1]} : vector<4x80x32xbf16> to vector<1x64x32xbf16>
    %8 = vector.shape_cast %7 : vector<1x64x32xbf16> to vector<64x32xbf16>
    %9 = vector.extract_strided_slice %2 {offsets = [2, 0, 0], sizes = [1, 64, 32], strides = [1, 1, 1]} : vector<4x80x32xbf16> to vector<1x64x32xbf16>
    %10 = vector.shape_cast %9 : vector<1x64x32xbf16> to vector<64x32xbf16>
    %11 = vector.extract_strided_slice %2 {offsets = [3, 0, 0], sizes = [1, 64, 32], strides = [1, 1, 1]} : vector<4x80x32xbf16> to vector<1x64x32xbf16>
    %12 = vector.shape_cast %11 : vector<1x64x32xbf16> to vector<64x32xbf16>
    %13 = vector.extract_strided_slice %2 {offsets = [2, 1, 0], sizes = [1, 64, 32], strides = [1, 1, 1]} : vector<4x80x32xbf16> to vector<1x64x32xbf16>
    %14 = vector.shape_cast %13 : vector<1x64x32xbf16> to vector<64x32xbf16>
    %15 = vector.extract_strided_slice %2 {offsets = [0, 5, 0], sizes = [1, 64, 32], strides = [1, 1, 1]} : vector<4x80x32xbf16> to vector<1x64x32xbf16>
    %16 = vector.shape_cast %15 : vector<1x64x32xbf16> to vector<64x32xbf16>
    %17 = vector.extract_strided_slice %2 {offsets = [1, 5, 0], sizes = [1, 64, 32], strides = [1, 1, 1]} : vector<4x80x32xbf16> to vector<1x64x32xbf16>
    %18 = vector.shape_cast %17 : vector<1x64x32xbf16> to vector<64x32xbf16>
    %19 = vector.extract_strided_slice %2 {offsets = [0, 6, 0], sizes = [1, 64, 32], strides = [1, 1, 1]} : vector<4x80x32xbf16> to vector<1x64x32xbf16>
    %20 = vector.shape_cast %19 : vector<1x64x32xbf16> to vector<64x32xbf16>
    %21 = tpu.concatenate %4, %6, %8, %10, %12, %14, %16, %18, %20 in 1 : vector<64x32xbf16>, vector<64x32xbf16>, vector<64x32xbf16>, vector<64x32xbf16>, vector<64x32xbf16>, vector<64x32xbf16>, vector<64x32xbf16>, vector<64x32xbf16>, vector<64x32xbf16> -> vector<64x288xbf16>
    %c0_5 = arith.constant 0 : index
    %c0_6 = arith.constant 0 : index
    %22 = vector.load %arg3[%c0_5, %c0_6] : memref<288x64xbf16, #tpu.memory_space<vmem>>, vector<288x64xbf16>
    %cst = arith.constant dense<0.000000e+00> : vector<64x64xf32>
    %23 = tpu.matmul %21, %22, %cst {dimension_numbers = #tpu.dot_dimension_numbers<[1], [0], [0], [1], [0, 0, 1, 1], [], []>} : vector<64x288xbf16>, vector<288x64xbf16>, vector<64x64xf32> -> vector<64x64xf32>
    %c0_7 = arith.constant 0 : index
    %c0_8 = arith.constant 0 : index
    %24 = vector.load %arg4[%c0_7, %c0_8] : memref<1x64xf32, #tpu.memory_space<vmem>>, vector<1x64xf32>
    %25 = vector.broadcast %24 : vector<1x64xf32> to vector<64x64xf32>
    %26 = arith.addf %23, %25 : vector<64x64xf32>
    %cst_9 = arith.constant 0.000000e+00 : f32
    %27 = vector.broadcast %cst_9 : f32 to vector<64x64xf32>
    %28 = arith.maximumf %26, %27 : vector<64x64xf32>
    %29 = arith.truncf %28 : vector<64x64xf32> to vector<64x64xbf16>
    %c0_10 = arith.constant 0 : index
    %c0_11 = arith.constant 0 : index
    %30 = vector.load %arg5[%c0_10, %c0_11] : memref<64x64xbf16, #tpu.memory_space<vmem>>, vector<64x64xbf16>
    tpu.vector_store %arg5[%c0_10, %c0_11], %29 {strides = array<i32>} : memref<64x64xbf16, #tpu.memory_space<vmem>>, vector<64x64xbf16>,
    return
  }
  func.func @transform_0(%arg0: i32) -> (i32, i32, i32) {
    %c0_i32 = arith.constant 0 : i32
    %c0_i32_0 = arith.constant 0 : i32
    %c0_i32_1 = arith.constant 0 : i32
    return %c0_i32, %arg0, %c0_i32_0 : i32, i32, i32
  }
  func.func @transform_1(%arg0: i32) -> (i32, i32, i32) {
    %c1_i32 = arith.constant 1 : i32
    %0 = arith.addi %arg0, %c1_i32 : i32
    %c4_i32 = arith.constant 4 : i32
    %1 = arith.muli %0, %c4_i32 : i32
    %c0_i32 = arith.constant 0 : i32
    %c0_i32_0 = arith.constant 0 : i32
    %c0_i32_1 = arith.constant 0 : i32
    return %c0_i32, %1, %c0_i32_0 : i32, i32, i32
  }
  func.func @transform_2(%arg0: i32) -> (i32, i32) {
    %c0_i32 = arith.constant 0 : i32
    %c0_i32_0 = arith.constant 0 : i32
    %c0_i32_1 = arith.constant 0 : i32
    return %c0_i32, %c0_i32_0 : i32, i32
  }
  func.func @transform_3(%arg0: i32) -> (i32, i32) {
    %c0_i32 = arith.constant 0 : i32
    %c0_i32_0 = arith.constant 0 : i32
    %c0_i32_1 = arith.constant 0 : i32
    return %c0_i32, %c0_i32_0 : i32, i32
  }
  func.func @transform_4(%arg0: i32) -> (i32, i32) {
    %c0_i32 = arith.constant 0 : i32
    %c0_i32_0 = arith.constant 0 : i32
    return %arg0, %c0_i32 : i32, i32
  }
}

module attributes {stable_mosaic.version = 11 : i64} {
  func.func @_phase_conv_kernel(%arg0: i32, %arg1: memref<4x32x64xbf16, #tpu.memory_space<vmem>>, %arg2: memref<4x16x64xbf16, #tpu.memory_space<vmem>>, %arg3: memref<576x32xbf16, #tpu.memory_space<vmem>>, %arg4: memref<1x32xf32, #tpu.memory_space<vmem>>, %arg5: memref<32x32xf32, #tpu.memory_space<vmem>>) attributes {dimension_semantics = [#tpu.dimension_semantics<parallel>], iteration_bounds = array<i64: 1>, scalar_prefetch = 0 : i64, scratch_operands = 0 : i64, tpu.core_type = #tpu.core_type<tc>, window_params = [{transform_indices = @transform_0, window_bounds = array<i64: 4, 32, 64>}, {transform_indices = @transform_1, window_bounds = array<i64: 4, 16, 64>}, {pipeline_mode = #tpu.pipeline_mode<synchronous>, transform_indices = @transform_2, window_bounds = array<i64: 576, 32>}, {pipeline_mode = #tpu.pipeline_mode<synchronous>, transform_indices = @transform_3, window_bounds = array<i64: 1, 32>}, {transform_indices = @transform_4, window_bounds = array<i64: 32, 32>}]} {
    %c0 = arith.constant 0 : index
    %c0_0 = arith.constant 0 : index
    %c0_1 = arith.constant 0 : index
    %0 = vector.load %arg1[%c0, %c0_0, %c0_1] : memref<4x32x64xbf16, #tpu.memory_space<vmem>>, vector<4x32x64xbf16>
    %c0_2 = arith.constant 0 : index
    %c0_3 = arith.constant 0 : index
    %c0_4 = arith.constant 0 : index
    %1 = vector.load %arg2[%c0_2, %c0_3, %c0_4] : memref<4x16x64xbf16, #tpu.memory_space<vmem>>, vector<4x16x64xbf16>
    %2 = tpu.concatenate %0, %1 in 1 : vector<4x32x64xbf16>, vector<4x16x64xbf16> -> vector<4x48x64xbf16>
    %3 = vector.extract_strided_slice %2 {offsets = [0, 0, 0], sizes = [1, 32, 64], strides = [1, 1, 1]} : vector<4x48x64xbf16> to vector<1x32x64xbf16>
    %4 = vector.shape_cast %3 : vector<1x32x64xbf16> to vector<32x64xbf16>
    %5 = vector.extract_strided_slice %2 {offsets = [1, 0, 0], sizes = [1, 32, 64], strides = [1, 1, 1]} : vector<4x48x64xbf16> to vector<1x32x64xbf16>
    %6 = vector.shape_cast %5 : vector<1x32x64xbf16> to vector<32x64xbf16>
    %7 = vector.extract_strided_slice %2 {offsets = [0, 1, 0], sizes = [1, 32, 64], strides = [1, 1, 1]} : vector<4x48x64xbf16> to vector<1x32x64xbf16>
    %8 = vector.shape_cast %7 : vector<1x32x64xbf16> to vector<32x64xbf16>
    %9 = vector.extract_strided_slice %2 {offsets = [2, 0, 0], sizes = [1, 32, 64], strides = [1, 1, 1]} : vector<4x48x64xbf16> to vector<1x32x64xbf16>
    %10 = vector.shape_cast %9 : vector<1x32x64xbf16> to vector<32x64xbf16>
    %11 = vector.extract_strided_slice %2 {offsets = [3, 0, 0], sizes = [1, 32, 64], strides = [1, 1, 1]} : vector<4x48x64xbf16> to vector<1x32x64xbf16>
    %12 = vector.shape_cast %11 : vector<1x32x64xbf16> to vector<32x64xbf16>
    %13 = vector.extract_strided_slice %2 {offsets = [2, 1, 0], sizes = [1, 32, 64], strides = [1, 1, 1]} : vector<4x48x64xbf16> to vector<1x32x64xbf16>
    %14 = vector.shape_cast %13 : vector<1x32x64xbf16> to vector<32x64xbf16>
    %15 = vector.extract_strided_slice %2 {offsets = [0, 3, 0], sizes = [1, 32, 64], strides = [1, 1, 1]} : vector<4x48x64xbf16> to vector<1x32x64xbf16>
    %16 = vector.shape_cast %15 : vector<1x32x64xbf16> to vector<32x64xbf16>
    %17 = vector.extract_strided_slice %2 {offsets = [1, 3, 0], sizes = [1, 32, 64], strides = [1, 1, 1]} : vector<4x48x64xbf16> to vector<1x32x64xbf16>
    %18 = vector.shape_cast %17 : vector<1x32x64xbf16> to vector<32x64xbf16>
    %19 = vector.extract_strided_slice %2 {offsets = [0, 4, 0], sizes = [1, 32, 64], strides = [1, 1, 1]} : vector<4x48x64xbf16> to vector<1x32x64xbf16>
    %20 = vector.shape_cast %19 : vector<1x32x64xbf16> to vector<32x64xbf16>
    %21 = tpu.concatenate %4, %6, %8, %10, %12, %14, %16, %18, %20 in 1 : vector<32x64xbf16>, vector<32x64xbf16>, vector<32x64xbf16>, vector<32x64xbf16>, vector<32x64xbf16>, vector<32x64xbf16>, vector<32x64xbf16>, vector<32x64xbf16>, vector<32x64xbf16> -> vector<32x576xbf16>
    %c0_5 = arith.constant 0 : index
    %c0_6 = arith.constant 0 : index
    %22 = vector.load %arg3[%c0_5, %c0_6] : memref<576x32xbf16, #tpu.memory_space<vmem>>, vector<576x32xbf16>
    %cst = arith.constant dense<0.000000e+00> : vector<32x32xf32>
    %23 = tpu.matmul %21, %22, %cst {dimension_numbers = #tpu.dot_dimension_numbers<[1], [0], [0], [1], [0, 0, 1, 1], [], []>} : vector<32x576xbf16>, vector<576x32xbf16>, vector<32x32xf32> -> vector<32x32xf32>
    %c0_7 = arith.constant 0 : index
    %c0_8 = arith.constant 0 : index
    %24 = vector.load %arg4[%c0_7, %c0_8] : memref<1x32xf32, #tpu.memory_space<vmem>>, vector<1x32xf32>
    %25 = vector.broadcast %24 : vector<1x32xf32> to vector<32x32xf32>
    %26 = arith.addf %23, %25 : vector<32x32xf32>
    %cst_9 = arith.constant 0.000000e+00 : f32
    %27 = vector.broadcast %cst_9 : f32 to vector<32x32xf32>
    %28 = arith.maximumf %26, %27 : vector<32x32xf32>
    %c0_10 = arith.constant 0 : index
    %c0_11 = arith.constant 0 : index
    %29 = vector.load %arg5[%c0_10, %c0_11] : memref<32x32xf32, #tpu.memory_space<vmem>>, vector<32x32xf32>
    tpu.vector_store %arg5[%c0_10, %c0_11], %28 {strides = array<i32>} : memref<32x32xf32, #tpu.memory_space<vmem>>, vector<32x32xf32>,
    return
  }
  func.func @transform_0(%arg0: i32) -> (i32, i32, i32) {
    %c0_i32 = arith.constant 0 : i32
    %c0_i32_0 = arith.constant 0 : i32
    %c0_i32_1 = arith.constant 0 : i32
    return %c0_i32, %arg0, %c0_i32_0 : i32, i32, i32
  }
  func.func @transform_1(%arg0: i32) -> (i32, i32, i32) {
    %c1_i32 = arith.constant 1 : i32
    %0 = arith.addi %arg0, %c1_i32 : i32
    %c2_i32 = arith.constant 2 : i32
    %1 = arith.muli %0, %c2_i32 : i32
    %c0_i32 = arith.constant 0 : i32
    %c0_i32_0 = arith.constant 0 : i32
    %c0_i32_1 = arith.constant 0 : i32
    return %c0_i32, %1, %c0_i32_0 : i32, i32, i32
  }
  func.func @transform_2(%arg0: i32) -> (i32, i32) {
    %c0_i32 = arith.constant 0 : i32
    %c0_i32_0 = arith.constant 0 : i32
    %c0_i32_1 = arith.constant 0 : i32
    return %c0_i32, %c0_i32_0 : i32, i32
  }
  func.func @transform_3(%arg0: i32) -> (i32, i32) {
    %c0_i32 = arith.constant 0 : i32
    %c0_i32_0 = arith.constant 0 : i32
    %c0_i32_1 = arith.constant 0 : i32
    return %c0_i32, %c0_i32_0 : i32, i32
  }
  func.func @transform_4(%arg0: i32) -> (i32, i32) {
    %c0_i32 = arith.constant 0 : i32
    %c0_i32_0 = arith.constant 0 : i32
    return %arg0, %c0_i32 : i32, i32
  }
}

module attributes {stable_mosaic.version = 11 : i64} {
  func.func @_phase_conv_kernel(%arg0: i32, %arg1: memref<1x16x32xbf16, #tpu.memory_space<vmem>>, %arg2: memref<1x16x32xbf16, #tpu.memory_space<vmem>>, %arg3: memref<32x64xbf16, #tpu.memory_space<vmem>>, %arg4: memref<64x64xbf16, #tpu.memory_space<vmem>>, %arg5: memref<64x64xbf16, #tpu.memory_space<vmem>>, %arg6: memref<128x64xbf16, #tpu.memory_space<vmem>>, %arg7: memref<1x256xf32, #tpu.memory_space<vmem>>, %arg8: memref<16x256xbf16, #tpu.memory_space<vmem>>) attributes {dimension_semantics = [#tpu.dimension_semantics<parallel>], iteration_bounds = array<i64: 1>, scalar_prefetch = 0 : i64, scratch_operands = 0 : i64, tpu.core_type = #tpu.core_type<tc>, window_params = [{transform_indices = @transform_0, window_bounds = array<i64: 1, 16, 32>}, {transform_indices = @transform_1, window_bounds = array<i64: 1, 16, 32>}, {pipeline_mode = #tpu.pipeline_mode<synchronous>, transform_indices = @transform_2, window_bounds = array<i64: 32, 64>}, {pipeline_mode = #tpu.pipeline_mode<synchronous>, transform_indices = @transform_3, window_bounds = array<i64: 64, 64>}, {pipeline_mode = #tpu.pipeline_mode<synchronous>, transform_indices = @transform_4, window_bounds = array<i64: 64, 64>}, {pipeline_mode = #tpu.pipeline_mode<synchronous>, transform_indices = @transform_5, window_bounds = array<i64: 128, 64>}, {pipeline_mode = #tpu.pipeline_mode<synchronous>, transform_indices = @transform_6, window_bounds = array<i64: 1, 256>}, {transform_indices = @transform_7, window_bounds = array<i64: 16, 256>}]} {
    %c0 = arith.constant 0 : index
    %c0_0 = arith.constant 0 : index
    %c0_1 = arith.constant 0 : index
    %0 = vector.load %arg1[%c0, %c0_0, %c0_1] : memref<1x16x32xbf16, #tpu.memory_space<vmem>>, vector<1x16x32xbf16>
    %c0_2 = arith.constant 0 : index
    %c0_3 = arith.constant 0 : index
    %c0_4 = arith.constant 0 : index
    %1 = vector.load %arg2[%c0_2, %c0_3, %c0_4] : memref<1x16x32xbf16, #tpu.memory_space<vmem>>, vector<1x16x32xbf16>
    %2 = tpu.concatenate %0, %1 in 1 : vector<1x16x32xbf16>, vector<1x16x32xbf16> -> vector<1x32x32xbf16>
    %3 = vector.extract_strided_slice %2 {offsets = [0, 0, 0], sizes = [1, 16, 32], strides = [1, 1, 1]} : vector<1x32x32xbf16> to vector<1x16x32xbf16>
    %4 = vector.shape_cast %3 : vector<1x16x32xbf16> to vector<16x32xbf16>
    %c0_5 = arith.constant 0 : index
    %c0_6 = arith.constant 0 : index
    %5 = vector.load %arg3[%c0_5, %c0_6] : memref<32x64xbf16, #tpu.memory_space<vmem>>, vector<32x64xbf16>
    %cst = arith.constant dense<0.000000e+00> : vector<16x64xf32>
    %6 = tpu.matmul %4, %5, %cst {dimension_numbers = #tpu.dot_dimension_numbers<[1], [0], [0], [1], [0, 0, 1, 1], [], []>} : vector<16x32xbf16>, vector<32x64xbf16>, vector<16x64xf32> -> vector<16x64xf32>
    %7 = vector.extract_strided_slice %2 {offsets = [0, 1, 0], sizes = [1, 16, 32], strides = [1, 1, 1]} : vector<1x32x32xbf16> to vector<1x16x32xbf16>
    %8 = vector.shape_cast %7 : vector<1x16x32xbf16> to vector<16x32xbf16>
    %9 = vector.extract_strided_slice %2 {offsets = [0, 0, 0], sizes = [1, 16, 32], strides = [1, 1, 1]} : vector<1x32x32xbf16> to vector<1x16x32xbf16>
    %10 = vector.shape_cast %9 : vector<1x16x32xbf16> to vector<16x32xbf16>
    %11 = tpu.concatenate %8, %10 in 1 : vector<16x32xbf16>, vector<16x32xbf16> -> vector<16x64xbf16>
    %c0_7 = arith.constant 0 : index
    %c0_8 = arith.constant 0 : index
    %12 = vector.load %arg4[%c0_7, %c0_8] : memref<64x64xbf16, #tpu.memory_space<vmem>>, vector<64x64xbf16>
    %cst_9 = arith.constant dense<0.000000e+00> : vector<16x64xf32>
    %13 = tpu.matmul %11, %12, %cst_9 {dimension_numbers = #tpu.dot_dimension_numbers<[1], [0], [0], [1], [0, 0, 1, 1], [], []>} : vector<16x64xbf16>, vector<64x64xbf16>, vector<16x64xf32> -> vector<16x64xf32>
    %14 = vector.extract_strided_slice %2 {offsets = [0, 2, 0], sizes = [1, 16, 32], strides = [1, 1, 1]} : vector<1x32x32xbf16> to vector<1x16x32xbf16>
    %15 = vector.shape_cast %14 : vector<1x16x32xbf16> to vector<16x32xbf16>
    %16 = vector.extract_strided_slice %2 {offsets = [0, 0, 0], sizes = [1, 16, 32], strides = [1, 1, 1]} : vector<1x32x32xbf16> to vector<1x16x32xbf16>
    %17 = vector.shape_cast %16 : vector<1x16x32xbf16> to vector<16x32xbf16>
    %18 = tpu.concatenate %15, %17 in 1 : vector<16x32xbf16>, vector<16x32xbf16> -> vector<16x64xbf16>
    %c0_10 = arith.constant 0 : index
    %c0_11 = arith.constant 0 : index
    %19 = vector.load %arg5[%c0_10, %c0_11] : memref<64x64xbf16, #tpu.memory_space<vmem>>, vector<64x64xbf16>
    %cst_12 = arith.constant dense<0.000000e+00> : vector<16x64xf32>
    %20 = tpu.matmul %18, %19, %cst_12 {dimension_numbers = #tpu.dot_dimension_numbers<[1], [0], [0], [1], [0, 0, 1, 1], [], []>} : vector<16x64xbf16>, vector<64x64xbf16>, vector<16x64xf32> -> vector<16x64xf32>
    %21 = vector.extract_strided_slice %2 {offsets = [0, 3, 0], sizes = [1, 16, 32], strides = [1, 1, 1]} : vector<1x32x32xbf16> to vector<1x16x32xbf16>
    %22 = vector.shape_cast %21 : vector<1x16x32xbf16> to vector<16x32xbf16>
    %23 = vector.extract_strided_slice %2 {offsets = [0, 2, 0], sizes = [1, 16, 32], strides = [1, 1, 1]} : vector<1x32x32xbf16> to vector<1x16x32xbf16>
    %24 = vector.shape_cast %23 : vector<1x16x32xbf16> to vector<16x32xbf16>
    %25 = vector.extract_strided_slice %2 {offsets = [0, 1, 0], sizes = [1, 16, 32], strides = [1, 1, 1]} : vector<1x32x32xbf16> to vector<1x16x32xbf16>
    %26 = vector.shape_cast %25 : vector<1x16x32xbf16> to vector<16x32xbf16>
    %27 = vector.extract_strided_slice %2 {offsets = [0, 0, 0], sizes = [1, 16, 32], strides = [1, 1, 1]} : vector<1x32x32xbf16> to vector<1x16x32xbf16>
    %28 = vector.shape_cast %27 : vector<1x16x32xbf16> to vector<16x32xbf16>
    %29 = tpu.concatenate %22, %24, %26, %28 in 1 : vector<16x32xbf16>, vector<16x32xbf16>, vector<16x32xbf16>, vector<16x32xbf16> -> vector<16x128xbf16>
    %c0_13 = arith.constant 0 : index
    %c0_14 = arith.constant 0 : index
    %30 = vector.load %arg6[%c0_13, %c0_14] : memref<128x64xbf16, #tpu.memory_space<vmem>>, vector<128x64xbf16>
    %cst_15 = arith.constant dense<0.000000e+00> : vector<16x64xf32>
    %31 = tpu.matmul %29, %30, %cst_15 {dimension_numbers = #tpu.dot_dimension_numbers<[1], [0], [0], [1], [0, 0, 1, 1], [], []>} : vector<16x128xbf16>, vector<128x64xbf16>, vector<16x64xf32> -> vector<16x64xf32>
    %32 = tpu.concatenate %6, %13, %20, %31 in 1 : vector<16x64xf32>, vector<16x64xf32>, vector<16x64xf32>, vector<16x64xf32> -> vector<16x256xf32>
    %c0_16 = arith.constant 0 : index
    %c0_17 = arith.constant 0 : index
    %33 = vector.load %arg7[%c0_16, %c0_17] : memref<1x256xf32, #tpu.memory_space<vmem>>, vector<1x256xf32>
    %34 = vector.broadcast %33 : vector<1x256xf32> to vector<16x256xf32>
    %35 = arith.addf %32, %34 : vector<16x256xf32>
    %cst_18 = arith.constant 0.000000e+00 : f32
    %36 = vector.broadcast %cst_18 : f32 to vector<16x256xf32>
    %37 = arith.maximumf %35, %36 : vector<16x256xf32>
    %38 = arith.truncf %37 : vector<16x256xf32> to vector<16x256xbf16>
    %c0_19 = arith.constant 0 : index
    %c0_20 = arith.constant 0 : index
    %39 = vector.load %arg8[%c0_19, %c0_20] : memref<16x256xbf16, #tpu.memory_space<vmem>>, vector<16x256xbf16>
    tpu.vector_store %arg8[%c0_19, %c0_20], %38 {strides = array<i32>} : memref<16x256xbf16, #tpu.memory_space<vmem>>, vector<16x256xbf16>,
    return
  }
  func.func @transform_0(%arg0: i32) -> (i32, i32, i32) {
    %c0_i32 = arith.constant 0 : i32
    %c0_i32_0 = arith.constant 0 : i32
    %c0_i32_1 = arith.constant 0 : i32
    return %c0_i32, %arg0, %c0_i32_0 : i32, i32, i32
  }
  func.func @transform_1(%arg0: i32) -> (i32, i32, i32) {
    %c1_i32 = arith.constant 1 : i32
    %0 = arith.addi %arg0, %c1_i32 : i32
    %c1_i32_0 = arith.constant 1 : i32
    %1 = arith.muli %0, %c1_i32_0 : i32
    %c0_i32 = arith.constant 0 : i32
    %c0_i32_1 = arith.constant 0 : i32
    %c0_i32_2 = arith.constant 0 : i32
    return %c0_i32, %1, %c0_i32_1 : i32, i32, i32
  }
  func.func @transform_2(%arg0: i32) -> (i32, i32) {
    %c0_i32 = arith.constant 0 : i32
    %c0_i32_0 = arith.constant 0 : i32
    %c0_i32_1 = arith.constant 0 : i32
    return %c0_i32, %c0_i32_0 : i32, i32
  }
  func.func @transform_3(%arg0: i32) -> (i32, i32) {
    %c0_i32 = arith.constant 0 : i32
    %c0_i32_0 = arith.constant 0 : i32
    %c0_i32_1 = arith.constant 0 : i32
    return %c0_i32, %c0_i32_0 : i32, i32
  }
  func.func @transform_4(%arg0: i32) -> (i32, i32) {
    %c0_i32 = arith.constant 0 : i32
    %c0_i32_0 = arith.constant 0 : i32
    %c0_i32_1 = arith.constant 0 : i32
    return %c0_i32, %c0_i32_0 : i32, i32
  }
  func.func @transform_5(%arg0: i32) -> (i32, i32) {
    %c0_i32 = arith.constant 0 : i32
    %c0_i32_0 = arith.constant 0 : i32
    %c0_i32_1 = arith.constant 0 : i32
    return %c0_i32, %c0_i32_0 : i32, i32
  }
  func.func @transform_6(%arg0: i32) -> (i32, i32) {
    %c0_i32 = arith.constant 0 : i32
    %c0_i32_0 = arith.constant 0 : i32
    %c0_i32_1 = arith.constant 0 : i32
    return %c0_i32, %c0_i32_0 : i32, i32
  }
  func.func @transform_7(%arg0: i32) -> (i32, i32) {
    %c0_i32 = arith.constant 0 : i32
    %c0_i32_0 = arith.constant 0 : i32
    return %arg0, %c0_i32 : i32, i32
  }
}

module attributes {stable_mosaic.version = 11 : i64} {
  func.func @_phase_conv_kernel(%arg0: i32, %arg1: memref<1x64x64xbf16, #tpu.memory_space<vmem>>, %arg2: memref<1x16x64xbf16, #tpu.memory_space<vmem>>, %arg3: memref<256x32xbf16, #tpu.memory_space<vmem>>, %arg4: memref<128x32xbf16, #tpu.memory_space<vmem>>, %arg5: memref<128x32xbf16, #tpu.memory_space<vmem>>, %arg6: memref<64x32xbf16, #tpu.memory_space<vmem>>, %arg7: memref<1x128xf32, #tpu.memory_space<vmem>>, %arg8: memref<64x128xbf16, #tpu.memory_space<vmem>>) attributes {dimension_semantics = [#tpu.dimension_semantics<parallel>], iteration_bounds = array<i64: 1>, scalar_prefetch = 0 : i64, scratch_operands = 0 : i64, tpu.core_type = #tpu.core_type<tc>, window_params = [{transform_indices = @transform_0, window_bounds = array<i64: 1, 64, 64>}, {transform_indices = @transform_1, window_bounds = array<i64: 1, 16, 64>}, {pipeline_mode = #tpu.pipeline_mode<synchronous>, transform_indices = @transform_2, window_bounds = array<i64: 256, 32>}, {pipeline_mode = #tpu.pipeline_mode<synchronous>, transform_indices = @transform_3, window_bounds = array<i64: 128, 32>}, {pipeline_mode = #tpu.pipeline_mode<synchronous>, transform_indices = @transform_4, window_bounds = array<i64: 128, 32>}, {pipeline_mode = #tpu.pipeline_mode<synchronous>, transform_indices = @transform_5, window_bounds = array<i64: 64, 32>}, {pipeline_mode = #tpu.pipeline_mode<synchronous>, transform_indices = @transform_6, window_bounds = array<i64: 1, 128>}, {transform_indices = @transform_7, window_bounds = array<i64: 64, 128>}]} {
    %c0 = arith.constant 0 : index
    %c0_0 = arith.constant 0 : index
    %c0_1 = arith.constant 0 : index
    %0 = vector.load %arg1[%c0, %c0_0, %c0_1] : memref<1x64x64xbf16, #tpu.memory_space<vmem>>, vector<1x64x64xbf16>
    %c0_2 = arith.constant 0 : index
    %c0_3 = arith.constant 0 : index
    %c0_4 = arith.constant 0 : index
    %1 = vector.load %arg2[%c0_2, %c0_3, %c0_4] : memref<1x16x64xbf16, #tpu.memory_space<vmem>>, vector<1x16x64xbf16>
    %2 = tpu.concatenate %0, %1 in 1 : vector<1x64x64xbf16>, vector<1x16x64xbf16> -> vector<1x80x64xbf16>
    %3 = vector.extract_strided_slice %2 {offsets = [0, 6, 0], sizes = [1, 64, 64], strides = [1, 1, 1]} : vector<1x80x64xbf16> to vector<1x64x64xbf16>
    %4 = vector.shape_cast %3 : vector<1x64x64xbf16> to vector<64x64xbf16>
    %5 = vector.extract_strided_slice %2 {offsets = [0, 5, 0], sizes = [1, 64, 64], strides = [1, 1, 1]} : vector<1x80x64xbf16> to vector<1x64x64xbf16>
    %6 = vector.shape_cast %5 : vector<1x64x64xbf16> to vector<64x64xbf16>
    %7 = vector.extract_strided_slice %2 {offsets = [0, 1, 0], sizes = [1, 64, 64], strides = [1, 1, 1]} : vector<1x80x64xbf16> to vector<1x64x64xbf16>
    %8 = vector.shape_cast %7 : vector<1x64x64xbf16> to vector<64x64xbf16>
    %9 = vector.extract_strided_slice %2 {offsets = [0, 0, 0], sizes = [1, 64, 64], strides = [1, 1, 1]} : vector<1x80x64xbf16> to vector<1x64x64xbf16>
    %10 = vector.shape_cast %9 : vector<1x64x64xbf16> to vector<64x64xbf16>
    %11 = tpu.concatenate %4, %6, %8, %10 in 1 : vector<64x64xbf16>, vector<64x64xbf16>, vector<64x64xbf16>, vector<64x64xbf16> -> vector<64x256xbf16>
    %c0_5 = arith.constant 0 : index
    %c0_6 = arith.constant 0 : index
    %12 = vector.load %arg3[%c0_5, %c0_6] : memref<256x32xbf16, #tpu.memory_space<vmem>>, vector<256x32xbf16>
    %cst = arith.constant dense<0.000000e+00> : vector<64x32xf32>
    %13 = tpu.matmul %11, %12, %cst {dimension_numbers = #tpu.dot_dimension_numbers<[1], [0], [0], [1], [0, 0, 1, 1], [], []>} : vector<64x256xbf16>, vector<256x32xbf16>, vector<64x32xf32> -> vector<64x32xf32>
    %14 = vector.extract_strided_slice %2 {offsets = [0, 6, 0], sizes = [1, 64, 64], strides = [1, 1, 1]} : vector<1x80x64xbf16> to vector<1x64x64xbf16>
    %15 = vector.shape_cast %14 : vector<1x64x64xbf16> to vector<64x64xbf16>
    %16 = vector.extract_strided_slice %2 {offsets = [0, 1, 0], sizes = [1, 64, 64], strides = [1, 1, 1]} : vector<1x80x64xbf16> to vector<1x64x64xbf16>
    %17 = vector.shape_cast %16 : vector<1x64x64xbf16> to vector<64x64xbf16>
    %18 = tpu.concatenate %15, %17 in 1 : vector<64x64xbf16>, vector<64x64xbf16> -> vector<64x128xbf16>
    %c0_7 = arith.constant 0 : index
    %c0_8 = arith.constant 0 : index
    %19 = vector.load %arg4[%c0_7, %c0_8] : memref<128x32xbf16, #tpu.memory_space<vmem>>, vector<128x32xbf16>
    %cst_9 = arith.constant dense<0.000000e+00> : vector<64x32xf32>
    %20 = tpu.matmul %18, %19, %cst_9 {dimension_numbers = #tpu.dot_dimension_numbers<[1], [0], [0], [1], [0, 0, 1, 1], [], []>} : vector<64x128xbf16>, vector<128x32xbf16>, vector<64x32xf32> -> vector<64x32xf32>
    %21 = vector.extract_strided_slice %2 {offsets = [0, 6, 0], sizes = [1, 64, 64], strides = [1, 1, 1]} : vector<1x80x64xbf16> to vector<1x64x64xbf16>
    %22 = vector.shape_cast %21 : vector<1x64x64xbf16> to vector<64x64xbf16>
    %23 = vector.extract_strided_slice %2 {offsets = [0, 5, 0], sizes = [1, 64, 64], strides = [1, 1, 1]} : vector<1x80x64xbf16> to vector<1x64x64xbf16>
    %24 = vector.shape_cast %23 : vector<1x64x64xbf16> to vector<64x64xbf16>
    %25 = tpu.concatenate %22, %24 in 1 : vector<64x64xbf16>, vector<64x64xbf16> -> vector<64x128xbf16>
    %c0_10 = arith.constant 0 : index
    %c0_11 = arith.constant 0 : index
    %26 = vector.load %arg5[%c0_10, %c0_11] : memref<128x32xbf16, #tpu.memory_space<vmem>>, vector<128x32xbf16>
    %cst_12 = arith.constant dense<0.000000e+00> : vector<64x32xf32>
    %27 = tpu.matmul %25, %26, %cst_12 {dimension_numbers = #tpu.dot_dimension_numbers<[1], [0], [0], [1], [0, 0, 1, 1], [], []>} : vector<64x128xbf16>, vector<128x32xbf16>, vector<64x32xf32> -> vector<64x32xf32>
    %28 = vector.extract_strided_slice %2 {offsets = [0, 6, 0], sizes = [1, 64, 64], strides = [1, 1, 1]} : vector<1x80x64xbf16> to vector<1x64x64xbf16>
    %29 = vector.shape_cast %28 : vector<1x64x64xbf16> to vector<64x64xbf16>
    %c0_13 = arith.constant 0 : index
    %c0_14 = arith.constant 0 : index
    %30 = vector.load %arg6[%c0_13, %c0_14] : memref<64x32xbf16, #tpu.memory_space<vmem>>, vector<64x32xbf16>
    %cst_15 = arith.constant dense<0.000000e+00> : vector<64x32xf32>
    %31 = tpu.matmul %29, %30, %cst_15 {dimension_numbers = #tpu.dot_dimension_numbers<[1], [0], [0], [1], [0, 0, 1, 1], [], []>} : vector<64x64xbf16>, vector<64x32xbf16>, vector<64x32xf32> -> vector<64x32xf32>
    %32 = tpu.concatenate %13, %20, %27, %31 in 1 : vector<64x32xf32>, vector<64x32xf32>, vector<64x32xf32>, vector<64x32xf32> -> vector<64x128xf32>
    %c0_16 = arith.constant 0 : index
    %c0_17 = arith.constant 0 : index
    %33 = vector.load %arg7[%c0_16, %c0_17] : memref<1x128xf32, #tpu.memory_space<vmem>>, vector<1x128xf32>
    %34 = vector.broadcast %33 : vector<1x128xf32> to vector<64x128xf32>
    %35 = arith.addf %32, %34 : vector<64x128xf32>
    %cst_18 = arith.constant 0.000000e+00 : f32
    %36 = vector.broadcast %cst_18 : f32 to vector<64x128xf32>
    %37 = arith.maximumf %35, %36 : vector<64x128xf32>
    %38 = arith.truncf %37 : vector<64x128xf32> to vector<64x128xbf16>
    %c0_19 = arith.constant 0 : index
    %c0_20 = arith.constant 0 : index
    %39 = vector.load %arg8[%c0_19, %c0_20] : memref<64x128xbf16, #tpu.memory_space<vmem>>, vector<64x128xbf16>
    tpu.vector_store %arg8[%c0_19, %c0_20], %38 {strides = array<i32>} : memref<64x128xbf16, #tpu.memory_space<vmem>>, vector<64x128xbf16>,
    return
  }
  func.func @transform_0(%arg0: i32) -> (i32, i32, i32) {
    %c0_i32 = arith.constant 0 : i32
    %c0_i32_0 = arith.constant 0 : i32
    %c0_i32_1 = arith.constant 0 : i32
    return %c0_i32, %arg0, %c0_i32_0 : i32, i32, i32
  }
  func.func @transform_1(%arg0: i32) -> (i32, i32, i32) {
    %c1_i32 = arith.constant 1 : i32
    %0 = arith.addi %arg0, %c1_i32 : i32
    %c4_i32 = arith.constant 4 : i32
    %1 = arith.muli %0, %c4_i32 : i32
    %c0_i32 = arith.constant 0 : i32
    %c0_i32_0 = arith.constant 0 : i32
    %c0_i32_1 = arith.constant 0 : i32
    return %c0_i32, %1, %c0_i32_0 : i32, i32, i32
  }
  func.func @transform_2(%arg0: i32) -> (i32, i32) {
    %c0_i32 = arith.constant 0 : i32
    %c0_i32_0 = arith.constant 0 : i32
    %c0_i32_1 = arith.constant 0 : i32
    return %c0_i32, %c0_i32_0 : i32, i32
  }
  func.func @transform_3(%arg0: i32) -> (i32, i32) {
    %c0_i32 = arith.constant 0 : i32
    %c0_i32_0 = arith.constant 0 : i32
    %c0_i32_1 = arith.constant 0 : i32
    return %c0_i32, %c0_i32_0 : i32, i32
  }
  func.func @transform_4(%arg0: i32) -> (i32, i32) {
    %c0_i32 = arith.constant 0 : i32
    %c0_i32_0 = arith.constant 0 : i32
    %c0_i32_1 = arith.constant 0 : i32
    return %c0_i32, %c0_i32_0 : i32, i32
  }
  func.func @transform_5(%arg0: i32) -> (i32, i32) {
    %c0_i32 = arith.constant 0 : i32
    %c0_i32_0 = arith.constant 0 : i32
    %c0_i32_1 = arith.constant 0 : i32
    return %c0_i32, %c0_i32_0 : i32, i32
  }
  func.func @transform_6(%arg0: i32) -> (i32, i32) {
    %c0_i32 = arith.constant 0 : i32
    %c0_i32_0 = arith.constant 0 : i32
    %c0_i32_1 = arith.constant 0 : i32
    return %c0_i32, %c0_i32_0 : i32, i32
  }
  func.func @transform_7(%arg0: i32) -> (i32, i32) {
    %c0_i32 = arith.constant 0 : i32
    %c0_i32_0 = arith.constant 0 : i32
    return %arg0, %c0_i32 : i32, i32
  }
}

module attributes {stable_mosaic.version = 11 : i64} {
  func.func @_phase_conv_kernel(%arg0: i32, %arg1: memref<1x112x32xbf16, #tpu.memory_space<vmem>>, %arg2: memref<1x16x32xbf16, #tpu.memory_space<vmem>>, %arg3: memref<32x3xbf16, #tpu.memory_space<vmem>>, %arg4: memref<32x3xbf16, #tpu.memory_space<vmem>>, %arg5: memref<32x3xbf16, #tpu.memory_space<vmem>>, %arg6: memref<32x3xbf16, #tpu.memory_space<vmem>>, %arg7: memref<1x12xf32, #tpu.memory_space<vmem>>, %arg8: memref<112x12xf32, #tpu.memory_space<vmem>>) attributes {dimension_semantics = [#tpu.dimension_semantics<parallel>], iteration_bounds = array<i64: 1>, scalar_prefetch = 0 : i64, scratch_operands = 0 : i64, tpu.core_type = #tpu.core_type<tc>, window_params = [{transform_indices = @transform_0, window_bounds = array<i64: 1, 112, 32>}, {transform_indices = @transform_1, window_bounds = array<i64: 1, 16, 32>}, {pipeline_mode = #tpu.pipeline_mode<synchronous>, transform_indices = @transform_2, window_bounds = array<i64: 32, 3>}, {pipeline_mode = #tpu.pipeline_mode<synchronous>, transform_indices = @transform_3, window_bounds = array<i64: 32, 3>}, {pipeline_mode = #tpu.pipeline_mode<synchronous>, transform_indices = @transform_4, window_bounds = array<i64: 32, 3>}, {pipeline_mode = #tpu.pipeline_mode<synchronous>, transform_indices = @transform_5, window_bounds = array<i64: 32, 3>}, {pipeline_mode = #tpu.pipeline_mode<synchronous>, transform_indices = @transform_6, window_bounds = array<i64: 1, 12>}, {transform_indices = @transform_7, window_bounds = array<i64: 112, 12>}]} {
    %c0 = arith.constant 0 : index
    %c0_0 = arith.constant 0 : index
    %c0_1 = arith.constant 0 : index
    %0 = vector.load %arg1[%c0, %c0_0, %c0_1] : memref<1x112x32xbf16, #tpu.memory_space<vmem>>, vector<1x112x32xbf16>
    %c0_2 = arith.constant 0 : index
    %c0_3 = arith.constant 0 : index
    %c0_4 = arith.constant 0 : index
    %1 = vector.load %arg2[%c0_2, %c0_3, %c0_4] : memref<1x16x32xbf16, #tpu.memory_space<vmem>>, vector<1x16x32xbf16>
    %2 = tpu.concatenate %0, %1 in 1 : vector<1x112x32xbf16>, vector<1x16x32xbf16> -> vector<1x128x32xbf16>
    %3 = vector.extract_strided_slice %2 {offsets = [0, 0, 0], sizes = [1, 112, 32], strides = [1, 1, 1]} : vector<1x128x32xbf16> to vector<1x112x32xbf16>
    %4 = vector.shape_cast %3 : vector<1x112x32xbf16> to vector<112x32xbf16>
    %c0_5 = arith.constant 0 : index
    %c0_6 = arith.constant 0 : index
    %5 = vector.load %arg3[%c0_5, %c0_6] : memref<32x3xbf16, #tpu.memory_space<vmem>>, vector<32x3xbf16>
    %cst = arith.constant dense<0.000000e+00> : vector<112x3xf32>
    %6 = tpu.matmul %4, %5, %cst {dimension_numbers = #tpu.dot_dimension_numbers<[1], [0], [0], [1], [0, 0, 1, 1], [], []>} : vector<112x32xbf16>, vector<32x3xbf16>, vector<112x3xf32> -> vector<112x3xf32>
    %7 = vector.extract_strided_slice %2 {offsets = [0, 1, 0], sizes = [1, 112, 32], strides = [1, 1, 1]} : vector<1x128x32xbf16> to vector<1x112x32xbf16>
    %8 = vector.shape_cast %7 : vector<1x112x32xbf16> to vector<112x32xbf16>
    %c0_7 = arith.constant 0 : index
    %c0_8 = arith.constant 0 : index
    %9 = vector.load %arg4[%c0_7, %c0_8] : memref<32x3xbf16, #tpu.memory_space<vmem>>, vector<32x3xbf16>
    %cst_9 = arith.constant dense<0.000000e+00> : vector<112x3xf32>
    %10 = tpu.matmul %8, %9, %cst_9 {dimension_numbers = #tpu.dot_dimension_numbers<[1], [0], [0], [1], [0, 0, 1, 1], [], []>} : vector<112x32xbf16>, vector<32x3xbf16>, vector<112x3xf32> -> vector<112x3xf32>
    %11 = vector.extract_strided_slice %2 {offsets = [0, 7, 0], sizes = [1, 112, 32], strides = [1, 1, 1]} : vector<1x128x32xbf16> to vector<1x112x32xbf16>
    %12 = vector.shape_cast %11 : vector<1x112x32xbf16> to vector<112x32xbf16>
    %c0_10 = arith.constant 0 : index
    %c0_11 = arith.constant 0 : index
    %13 = vector.load %arg5[%c0_10, %c0_11] : memref<32x3xbf16, #tpu.memory_space<vmem>>, vector<32x3xbf16>
    %cst_12 = arith.constant dense<0.000000e+00> : vector<112x3xf32>
    %14 = tpu.matmul %12, %13, %cst_12 {dimension_numbers = #tpu.dot_dimension_numbers<[1], [0], [0], [1], [0, 0, 1, 1], [], []>} : vector<112x32xbf16>, vector<32x3xbf16>, vector<112x3xf32> -> vector<112x3xf32>
    %15 = vector.extract_strided_slice %2 {offsets = [0, 8, 0], sizes = [1, 112, 32], strides = [1, 1, 1]} : vector<1x128x32xbf16> to vector<1x112x32xbf16>
    %16 = vector.shape_cast %15 : vector<1x112x32xbf16> to vector<112x32xbf16>
    %c0_13 = arith.constant 0 : index
    %c0_14 = arith.constant 0 : index
    %17 = vector.load %arg6[%c0_13, %c0_14] : memref<32x3xbf16, #tpu.memory_space<vmem>>, vector<32x3xbf16>
    %cst_15 = arith.constant dense<0.000000e+00> : vector<112x3xf32>
    %18 = tpu.matmul %16, %17, %cst_15 {dimension_numbers = #tpu.dot_dimension_numbers<[1], [0], [0], [1], [0, 0, 1, 1], [], []>} : vector<112x32xbf16>, vector<32x3xbf16>, vector<112x3xf32> -> vector<112x3xf32>
    %19 = tpu.concatenate %6, %10, %14, %18 in 1 : vector<112x3xf32>, vector<112x3xf32>, vector<112x3xf32>, vector<112x3xf32> -> vector<112x12xf32>
    %c0_16 = arith.constant 0 : index
    %c0_17 = arith.constant 0 : index
    %20 = vector.load %arg7[%c0_16, %c0_17] : memref<1x12xf32, #tpu.memory_space<vmem>>, vector<1x12xf32>
    %21 = vector.broadcast %20 : vector<1x12xf32> to vector<112x12xf32>
    %22 = arith.addf %19, %21 : vector<112x12xf32>
    %23 = math.tanh %22 : vector<112x12xf32>
    %c0_18 = arith.constant 0 : index
    %c0_19 = arith.constant 0 : index
    %24 = vector.load %arg8[%c0_18, %c0_19] : memref<112x12xf32, #tpu.memory_space<vmem>>, vector<112x12xf32>
    tpu.vector_store %arg8[%c0_18, %c0_19], %23 {strides = array<i32>} : memref<112x12xf32, #tpu.memory_space<vmem>>, vector<112x12xf32>,
    return
  }
  func.func @transform_0(%arg0: i32) -> (i32, i32, i32) {
    %c0_i32 = arith.constant 0 : i32
    %c0_i32_0 = arith.constant 0 : i32
    %c0_i32_1 = arith.constant 0 : i32
    return %c0_i32, %arg0, %c0_i32_0 : i32, i32, i32
  }
  func.func @transform_1(%arg0: i32) -> (i32, i32, i32) {
    %c1_i32 = arith.constant 1 : i32
    %0 = arith.addi %arg0, %c1_i32 : i32
    %c7_i32 = arith.constant 7 : i32
    %1 = arith.muli %0, %c7_i32 : i32
    %c0_i32 = arith.constant 0 : i32
    %c0_i32_0 = arith.constant 0 : i32
    %c0_i32_1 = arith.constant 0 : i32
    return %c0_i32, %1, %c0_i32_0 : i32, i32, i32
  }
  func.func @transform_2(%arg0: i32) -> (i32, i32) {
    %c0_i32 = arith.constant 0 : i32
    %c0_i32_0 = arith.constant 0 : i32
    %c0_i32_1 = arith.constant 0 : i32
    return %c0_i32, %c0_i32_0 : i32, i32
  }
  func.func @transform_3(%arg0: i32) -> (i32, i32) {
    %c0_i32 = arith.constant 0 : i32
    %c0_i32_0 = arith.constant 0 : i32
    %c0_i32_1 = arith.constant 0 : i32
    return %c0_i32, %c0_i32_0 : i32, i32
  }
  func.func @transform_4(%arg0: i32) -> (i32, i32) {
    %c0_i32 = arith.constant 0 : i32
    %c0_i32_0 = arith.constant 0 : i32
    %c0_i32_1 = arith.constant 0 : i32
    return %c0_i32, %c0_i32_0 : i32, i32
  }
  func.func @transform_5(%arg0: i32) -> (i32, i32) {
    %c0_i32 = arith.constant 0 : i32
    %c0_i32_0 = arith.constant 0 : i32
    %c0_i32_1 = arith.constant 0 : i32
    return %c0_i32, %c0_i32_0 : i32, i32
  }
  func.func @transform_6(%arg0: i32) -> (i32, i32) {
    %c0_i32 = arith.constant 0 : i32
    %c0_i32_0 = arith.constant 0 : i32
    %c0_i32_1 = arith.constant 0 : i32
    return %c0_i32, %c0_i32_0 : i32, i32
  }
  func.func @transform_7(%arg0: i32) -> (i32, i32) {
    %c0_i32 = arith.constant 0 : i32
    %c0_i32_0 = arith.constant 0 : i32
    return %arg0, %c0_i32 : i32, i32
  }
}

</mosaic_0001>

<llo_original>
// kernel: forward.7
$region0: #{forward.7}
  #allocation0 [shape = 'u32[]', space=smem, size = 0x4, offset = 0x4, fixed_abs, tag = 'smem constant byte address 0x4 - core index']
  #allocation1 [shape = 'u32[72,128]{1,0:T(1,128)}', space=vmem, size = 0x9000, scoped, tag = 'internal scratch']
  %s0 = inlined_call_operand.vmem [shape: bf16[4,80,32], index: 0, kind: input, shape index: {}, may-alias: {0,1}]
  %s1 = inlined_call_operand.vmem [shape: bf16[4,80,32], index: 1, kind: input, shape index: {}, may-alias: {0,1}]
  %s2 = inlined_call_operand.vmem [shape: bf16[288,64], index: 2, kind: input, shape index: {}]
  %s3 = inlined_call_operand.vmem [shape: f32[1,64], index: 3, kind: input, shape index: {}]
  %s4 = inlined_call_operand.vmem [shape: bf16[64,64], index: 4, kind: output, shape index: {}]
  %s5 = sld [smem:[#allocation0]]
  $region108: #{forward.7} parent=0
    _
  %s7 = ssub.s32 1, %s5
  %s8 = scalar_select 0, %s7, %s5
  $region1: #{forward.7} parent=0
    #allocation2 [shape = 'u8[65536]{0}', space=vmem, size = 0x10000, scoped, tag = 'input window, operand 0, single buffered']
    #allocation3 [shape = 'u8[16384]{0}', space=vmem, size = 0x4000, scoped, tag = 'input window, operand 1, single buffered']
    // Predicated region
    $region2: #{forward.7} parent=1 // pred_check
      _
    $region3: #{forward.7} parent=1 // pred_check_branch
      %10 = sbr.rel (0) target = $region5
    $region4: #{forward.7} parent=1 // pred_region
      // Predicated region
      $region6: #{forward.7} parent=4 // pred_check
        _
      $region7: #{forward.7} parent=4 // pred_check_branch
        %12 = sbr.rel (0) target = $region9
      $region8: #{forward.7} parent=4 // pred_region
        // Predicated region
        $region10: #{forward.7} parent=8 // pred_check
          _
        $region11: #{forward.7} parent=8 // pred_check_branch
          %14 = sbr.rel target = $region13
        $region12: #{forward.7} parent=8 // pred_region
          // Predicated region
          $region25: #{forward.7} parent=12 // pred_check
            _
          $region26: #{forward.7} parent=12 // pred_check_branch
            %92 = sbr.rel (0) target = $region28
          $region27: #{forward.7} parent=12 // pred_region
            loop: start=0, step=1, limit=1
            $region29: #{forward.7} parent=27 // loop_pre_header
              _
            $region30: #{forward.7} parent=27 // loop_header
              %s94 = sphi 0, %s98
              %p95 = scmp.ge.s32.totalorder %s94, 1
              %s99 = sphi %s0, %s0
              %s100 = sphi [#allocation2], [#allocation2]
            $region31: #{forward.7} parent=27 // loop_header_branch
              %97 = sbr.rel (%p95) target = $region35
            $region32: #{forward.7} parent=27 // loop_body
              _
            $region33: #{forward.7} parent=27 // loop_footer
              %s98 = sadd.s32 1, %s94
            $region34: #{forward.7} parent=27 // loop_footer_branch
              %93 = sbr.rel target = $region30
            $region35: #{forward.7} parent=27 // loop_exit
              _
            %s102 = ssub.s32 16, 1
            loop: start=0, step=1, limit=1
            $region36: #{forward.7} parent=27 // loop_pre_header
              _
            $region37: #{forward.7} parent=27 // loop_header
              %s104 = sphi 0, %s108
              %p105 = scmp.ge.s32.totalorder %s104, 1
              %s109 = sphi %s0, %s0
              %s110 = sphi [#allocation2], [#allocation2]
            $region38: #{forward.7} parent=27 // loop_header_branch
              %107 = sbr.rel (%p105) target = $region42
            $region39: #{forward.7} parent=27 // loop_body
              %v111 = vld [vmem:[%s109] sm:%s102]
              %112 = vst [vmem:[%s110] sm:%s102] %v111
              %v113 = vld [vmem:[%s109 + $0x4] sm:%s102]
              %114 = vst [vmem:[%s110 + $0x4] sm:%s102] %v113
              %v115 = vld [vmem:[%s109 + $0x8] sm:%s102]
              %116 = vst [vmem:[%s110 + $0x8] sm:%s102] %v115
              %v117 = vld [vmem:[%s109 + $0xc] sm:%s102]
              %118 = vst [vmem:[%s110 + $0xc] sm:%s102] %v117
              %v119 = vld [vmem:[%s109 + $0x10] sm:%s102]
              %120 = vst [vmem:[%s110 + $0x10] sm:%s102] %v119
              %v121 = vld [vmem:[%s109 + $0x14] sm:%s102]
              %122 = vst [vmem:[%s110 + $0x14] sm:%s102] %v121
              %v123 = vld [vmem:[%s109 + $0x18] sm:%s102]
              %124 = vst [vmem:[%s110 + $0x18] sm:%s102] %v123
              %v125 = vld [vmem:[%s109 + $0x1c] sm:%s102]
              %126 = vst [vmem:[%s110 + $0x1c] sm:%s102] %v125
              %v127 = vld [vmem:[%s109 + $0x28] sm:%s102]
              %128 = vst [vmem:[%s110 + $0x20] sm:%s102] %v127
              %v129 = vld [vmem:[%s109 + $0x2c] sm:%s102]
              %130 = vst [vmem:[%s110 + $0x24] sm:%s102] %v129
              %v131 = vld [vmem:[%s109 + $0x30] sm:%s102]
              %132 = vst [vmem:[%s110 + $0x28] sm:%s102] %v131
              %v133 = vld [vmem:[%s109 + $0x34] sm:%s102]
              %134 = vst [vmem:[%s110 + $0x2c] sm:%s102] %v133
              %v135 = vld [vmem:[%s109 + $0x38] sm:%s102]
              %136 = vst [vmem:[%s110 + $0x30] sm:%s102] %v135
              %v137 = vld [vmem:[%s109 + $0x3c] sm:%s102]
              %138 = vst [vmem:[%s110 + $0x34] sm:%s102] %v137
              %v139 = vld [vmem:[%s109 + $0x40] sm:%s102]
              %140 = vst [vmem:[%s110 + $0x38] sm:%s102] %v139
              %v141 = vld [vmem:[%s109 + $0x44] sm:%s102]
              %142 = vst [vmem:[%s110 + $0x3c] sm:%s102] %v141
              %v143 = vld [vmem:[%s109 + $0x50] sm:%s102]
              %144 = vst [vmem:[%s110 + $0x40] sm:%s102] %v143
              %v145 = vld [vmem:[%s109 + $0x54] sm:%s102]
              %146 = vst [vmem:[%s110 + $0x44] sm:%s102] %v145
              %v147 = vld [vmem:[%s109 + $0x58] sm:%s102]
              %148 = vst [vmem:[%s110 + $0x48] sm:%s102] %v147
              %v149 = vld [vmem:[%s109 + $0x5c] sm:%s102]
              %150 = vst [vmem:[%s110 + $0x4c] sm:%s102] %v149
              %v151 = vld [vmem:[%s109 + $0x60] sm:%s102]
              %152 = vst [vmem:[%s110 + $0x50] sm:%s102] %v151
              %v153 = vld [vmem:[%s109 + $0x64] sm:%s102]
              %154 = vst [vmem:[%s110 + $0x54] sm:%s102] %v153
              %v155 = vld [vmem:[%s109 + $0x68] sm:%s102]
              %156 = vst [vmem:[%s110 + $0x58] sm:%s102] %v155
              %v157 = vld [vmem:[%s109 + $0x6c] sm:%s102]
              %158 = vst [vmem:[%s110 + $0x5c] sm:%s102] %v157
              %v159 = vld [vmem:[%s109 + $0x78] sm:%s102]
              %160 = vst [vmem:[%s110 + $0x60] sm:%s102] %v159
              %v161 = vld [vmem:[%s109 + $0x7c] sm:%s102]
              %162 = vst [vmem:[%s110 + $0x64] sm:%s102] %v161
              %v163 = vld [vmem:[%s109 + $0x80] sm:%s102]
              %164 = vst [vmem:[%s110 + $0x68] sm:%s102] %v163
              %v165 = vld [vmem:[%s109 + $0x84] sm:%s102]
              %166 = vst [vmem:[%s110 + $0x6c] sm:%s102] %v165
              %v167 = vld [vmem:[%s109 + $0x88] sm:%s102]
              %168 = vst [vmem:[%s110 + $0x70] sm:%s102] %v167
              %v169 = vld [vmem:[%s109 + $0x8c] sm:%s102]
              %170 = vst [vmem:[%s110 + $0x74] sm:%s102] %v169
              %v171 = vld [vmem:[%s109 + $0x90] sm:%s102]
              %172 = vst [vmem:[%s110 + $0x78] sm:%s102] %v171
              %v173 = vld [vmem:[%s109 + $0x94] sm:%s102]
              %174 = vst [vmem:[%s110 + $0x7c] sm:%s102] %v173
            $region40: #{forward.7} parent=27 // loop_footer
              %s108 = sadd.s32 1, %s104
            $region41: #{forward.7} parent=27 // loop_footer_branch
              %103 = sbr.rel target = $region37
            $region42: #{forward.7} parent=27 // loop_exit
              _
          $region28: #{forward.7} parent=12 // pred_fallthru
            _
        $region13: #{forward.7} parent=8 // pred_fallthru
          _
        // Predicated region
        $region14: #{forward.7} parent=8 // pred_check
          _
        $region15: #{forward.7} parent=8 // pred_check_branch
          %16 = sbr.rel (0) target = $region17
        $region16: #{forward.7} parent=8 // pred_region
          %s18 = ssub.s32 16, 1
          loop: start=0, step=1, limit=1
          $region18: #{forward.7} parent=16 // loop_pre_header
            _
          $region19: #{forward.7} parent=16 // loop_header
            %s20 = sphi 0, %s24
            %p21 = scmp.ge.s32.totalorder %s20, 1
            %s25 = sphi %s0, %s0
            %s26 = sphi [#allocation2], [#allocation2]
          $region20: #{forward.7} parent=16 // loop_header_branch
            %23 = sbr.rel (%p21) target = $region24
          $region21: #{forward.7} parent=16 // loop_body
            %v27 = vld [vmem:[%s25] sm:%s18]
            %28 = vst [vmem:[%s26] sm:%s18] %v27
            %v29 = vld [vmem:[%s25 + $0x4] sm:%s18]
            %30 = vst [vmem:[%s26 + $0x4] sm:%s18] %v29
            %v31 = vld [vmem:[%s25 + $0x8] sm:%s18]
            %32 = vst [vmem:[%s26 + $0x8] sm:%s18] %v31
            %v33 = vld [vmem:[%s25 + $0xc] sm:%s18]
            %34 = vst [vmem:[%s26 + $0xc] sm:%s18] %v33
            %v35 = vld [vmem:[%s25 + $0x10] sm:%s18]
            %36 = vst [vmem:[%s26 + $0x10] sm:%s18] %v35
            %v37 = vld [vmem:[%s25 + $0x14] sm:%s18]
            %38 = vst [vmem:[%s26 + $0x14] sm:%s18] %v37
            %v39 = vld [vmem:[%s25 + $0x18] sm:%s18]
            %40 = vst [vmem:[%s26 + $0x18] sm:%s18] %v39
            %v41 = vld [vmem:[%s25 + $0x1c] sm:%s18]
            %42 = vst [vmem:[%s26 + $0x1c] sm:%s18] %v41
            %v43 = vld [vmem:[%s25 + $0x28] sm:%s18]
            %44 = vst [vmem:[%s26 + $0x20] sm:%s18] %v43
            %v45 = vld [vmem:[%s25 + $0x2c] sm:%s18]
            %46 = vst [vmem:[%s26 + $0x24] sm:%s18] %v45
            %v47 = vld [vmem:[%s25 + $0x30] sm:%s18]
            %48 = vst [vmem:[%s26 + $0x28] sm:%s18] %v47
            %v49 = vld [vmem:[%s25 + $0x34] sm:%s18]
            %50 = vst [vmem:[%s26 + $0x2c] sm:%s18] %v49
            %v51 = vld [vmem:[%s25 + $0x38] sm:%s18]
            %52 = vst [vmem:[%s26 + $0x30] sm:%s18] %v51
            %v53 = vld [vmem:[%s25 + $0x3c] sm:%s18]
            %54 = vst [vmem:[%s26 + $0x34] sm:%s18] %v53
            %v55 = vld [vmem:[%s25 + $0x40] sm:%s18]
            %56 = vst [vmem:[%s26 + $0x38] sm:%s18] %v55
            %v57 = vld [vmem:[%s25 + $0x44] sm:%s18]
            %58 = vst [vmem:[%s26 + $0x3c] sm:%s18] %v57
            %v59 = vld [vmem:[%s25 + $0x50] sm:%s18]
            %60 = vst [vmem:[%s26 + $0x40] sm:%s18] %v59
            %v61 = vld [vmem:[%s25 + $0x54] sm:%s18]
            %62 = vst [vmem:[%s26 + $0x44] sm:%s18] %v61
            %v63 = vld [vmem:[%s25 + $0x58] sm:%s18]
            %64 = vst [vmem:[%s26 + $0x48] sm:%s18] %v63
            %v65 = vld [vmem:[%s25 + $0x5c] sm:%s18]
            %66 = vst [vmem:[%s26 + $0x4c] sm:%s18] %v65
            %v67 = vld [vmem:[%s25 + $0x60] sm:%s18]
            %68 = vst [vmem:[%s26 + $0x50] sm:%s18] %v67
            %v69 = vld [vmem:[%s25 + $0x64] sm:%s18]
            %70 = vst [vmem:[%s26 + $0x54] sm:%s18] %v69
            %v71 = vld [vmem:[%s25 + $0x68] sm:%s18]
            %72 = vst [vmem:[%s26 + $0x58] sm:%s18] %v71
            %v73 = vld [vmem:[%s25 + $0x6c] sm:%s18]
            %74 = vst [vmem:[%s26 + $0x5c] sm:%s18] %v73
            %v75 = vld [vmem:[%s25 + $0x78] sm:%s18]
            %76 = vst [vmem:[%s26 + $0x60] sm:%s18] %v75
            %v77 = vld [vmem:[%s25 + $0x7c] sm:%s18]
            %78 = vst [vmem:[%s26 + $0x64] sm:%s18] %v77
            %v79 = vld [vmem:[%s25 + $0x80] sm:%s18]
            %80 = vst [vmem:[%s26 + $0x68] sm:%s18] %v79
            %v81 = vld [vmem:[%s25 + $0x84] sm:%s18]
            %82 = vst [vmem:[%s26 + $0x6c] sm:%s18] %v81
            %v83 = vld [vmem:[%s25 + $0x88] sm:%s18]
            %84 = vst [vmem:[%s26 + $0x70] sm:%s18] %v83
            %v85 = vld [vmem:[%s25 + $0x8c] sm:%s18]
            %86 = vst [vmem:[%s26 + $0x74] sm:%s18] %v85
            %v87 = vld [vmem:[%s25 + $0x90] sm:%s18]
            %88 = vst [vmem:[%s26 + $0x78] sm:%s18] %v87
            %v89 = vld [vmem:[%s25 + $0x94] sm:%s18]
            %90 = vst [vmem:[%s26 + $0x7c] sm:%s18] %v89
          $region22: #{forward.7} parent=16 // loop_footer
            %s24 = sadd.s32 1, %s20
          $region23: #{forward.7} parent=16 // loop_footer_branch
            %19 = sbr.rel target = $region19
          $region24: #{forward.7} parent=16 // loop_exit
            _
        $region17: #{forward.7} parent=8 // pred_fallthru
          _
      $region9: #{forward.7} parent=4 // pred_fallthru
        _
      %175 = vnop
    $region5: #{forward.7} parent=1 // pred_fallthru
      _
    // Predicated region
    $region43: #{forward.7} parent=1 // pred_check
      _
    $region44: #{forward.7} parent=1 // pred_check_branch
      %177 = sbr.rel (0) target = $region46
    $region45: #{forward.7} parent=1 // pred_region
      %s178 = sadd.s32 0, 1
      %s179 = smul.u32 %s178, 4
      %s180 = smul.u32 2, %s179
      %s181 = smul.addr %s180, 4
      %s182 = scalar_lea.vmem %s1, %s181
      // Predicated region
      $region47: #{forward.7} parent=45 // pred_check
        _
      $region48: #{forward.7} parent=45 // pred_check_branch
        %184 = sbr.rel (0) target = $region50
      $region49: #{forward.7} parent=45 // pred_region
        // Predicated region
        $region51: #{forward.7} parent=49 // pred_check
          _
        $region52: #{forward.7} parent=49 // pred_check_branch
          %186 = sbr.rel target = $region54
        $region53: #{forward.7} parent=49 // pred_region
          // Predicated region
          $region66: #{forward.7} parent=53 // pred_check
            _
          $region67: #{forward.7} parent=53 // pred_check_branch
            %216 = sbr.rel (0) target = $region69
          $region68: #{forward.7} parent=53 // pred_region
            loop: start=0, step=1, limit=1
            $region70: #{forward.7} parent=68 // loop_pre_header
              _
            $region71: #{forward.7} parent=68 // loop_header
              %s218 = sphi 0, %s222
              %p219 = scmp.ge.s32.totalorder %s218, 1
              %s223 = sphi %s182, %s182
              %s224 = sphi [#allocation3], [#allocation3]
            $region72: #{forward.7} parent=68 // loop_header_branch
              %221 = sbr.rel (%p219) target = $region76
            $region73: #{forward.7} parent=68 // loop_body
              _
            $region74: #{forward.7} parent=68 // loop_footer
              %s222 = sadd.s32 1, %s218
            $region75: #{forward.7} parent=68 // loop_footer_branch
              %217 = sbr.rel target = $region71
            $region76: #{forward.7} parent=68 // loop_exit
              _
            %s226 = ssub.s32 16, 1
            loop: start=0, step=1, limit=1
            $region77: #{forward.7} parent=68 // loop_pre_header
              _
            $region78: #{forward.7} parent=68 // loop_header
              %s228 = sphi 0, %s232
              %p229 = scmp.ge.s32.totalorder %s228, 1
              %s233 = sphi %s182, %s182
              %s234 = sphi [#allocation3], [#allocation3]
            $region79: #{forward.7} parent=68 // loop_header_branch
              %231 = sbr.rel (%p229) target = $region83
            $region80: #{forward.7} parent=68 // loop_body
              %v235 = vld [vmem:[%s233] sm:%s226]
              %236 = vst [vmem:[%s234] sm:%s226] %v235
              %v237 = vld [vmem:[%s233 + $0x4] sm:%s226]
              %238 = vst [vmem:[%s234 + $0x4] sm:%s226] %v237
              %v239 = vld [vmem:[%s233 + $0x28] sm:%s226]
              %240 = vst [vmem:[%s234 + $0x8] sm:%s226] %v239
              %v241 = vld [vmem:[%s233 + $0x2c] sm:%s226]
              %242 = vst [vmem:[%s234 + $0xc] sm:%s226] %v241
              %v243 = vld [vmem:[%s233 + $0x50] sm:%s226]
              %244 = vst [vmem:[%s234 + $0x10] sm:%s226] %v243
              %v245 = vld [vmem:[%s233 + $0x54] sm:%s226]
              %246 = vst [vmem:[%s234 + $0x14] sm:%s226] %v245
              %v247 = vld [vmem:[%s233 + $0x78] sm:%s226]
              %248 = vst [vmem:[%s234 + $0x18] sm:%s226] %v247
              %v249 = vld [vmem:[%s233 + $0x7c] sm:%s226]
              %250 = vst [vmem:[%s234 + $0x1c] sm:%s226] %v249
            $region81: #{forward.7} parent=68 // loop_footer
              %s232 = sadd.s32 1, %s228
            $region82: #{forward.7} parent=68 // loop_footer_branch
              %227 = sbr.rel target = $region78
            $region83: #{forward.7} parent=68 // loop_exit
              _
          $region69: #{forward.7} parent=53 // pred_fallthru
            _
        $region54: #{forward.7} parent=49 // pred_fallthru
          _
        // Predicated region
        $region55: #{forward.7} parent=49 // pred_check
          _
        $region56: #{forward.7} parent=49 // pred_check_branch
          %188 = sbr.rel (0) target = $region58
        $region57: #{forward.7} parent=49 // pred_region
          %s190 = ssub.s32 16, 1
          loop: start=0, step=1, limit=1
          $region59: #{forward.7} parent=57 // loop_pre_header
            _
          $region60: #{forward.7} parent=57 // loop_header
            %s192 = sphi 0, %s196
            %p193 = scmp.ge.s32.totalorder %s192, 1
            %s197 = sphi %s182, %s182
            %s198 = sphi [#allocation3], [#allocation3]
          $region61: #{forward.7} parent=57 // loop_header_branch
            %195 = sbr.rel (%p193) target = $region65
          $region62: #{forward.7} parent=57 // loop_body
            %v199 = vld [vmem:[%s197] sm:%s190]
            %200 = vst [vmem:[%s198] sm:%s190] %v199
            %v201 = vld [vmem:[%s197 + $0x4] sm:%s190]
            %202 = vst [vmem:[%s198 + $0x4] sm:%s190] %v201
            %v203 = vld [vmem:[%s197 + $0x28] sm:%s190]
            %204 = vst [vmem:[%s198 + $0x8] sm:%s190] %v203
            %v205 = vld [vmem:[%s197 + $0x2c] sm:%s190]
            %206 = vst [vmem:[%s198 + $0xc] sm:%s190] %v205
            %v207 = vld [vmem:[%s197 + $0x50] sm:%s190]
            %208 = vst [vmem:[%s198 + $0x10] sm:%s190] %v207
            %v209 = vld [vmem:[%s197 + $0x54] sm:%s190]
            %210 = vst [vmem:[%s198 + $0x14] sm:%s190] %v209
            %v211 = vld [vmem:[%s197 + $0x78] sm:%s190]
            %212 = vst [vmem:[%s198 + $0x18] sm:%s190] %v211
            %v213 = vld [vmem:[%s197 + $0x7c] sm:%s190]
            %214 = vst [vmem:[%s198 + $0x1c] sm:%s190] %v213
          $region63: #{forward.7} parent=57 // loop_footer
            %s196 = sadd.s32 1, %s192
          $region64: #{forward.7} parent=57 // loop_footer_branch
            %191 = sbr.rel target = $region60
          $region65: #{forward.7} parent=57 // loop_exit
            _
        $region58: #{forward.7} parent=49 // pred_fallthru
          _
      $region50: #{forward.7} parent=45 // pred_fallthru
        _
      %251 = vnop
    $region46: #{forward.7} parent=1 // pred_fallthru
      _
    // Predicated region
    $region84: #{forward.7} parent=1 // pred_check
      _
    $region85: #{forward.7} parent=1 // pred_check_branch
      %253 = sbr.rel (0) target = $region87
    $region86: #{forward.7} parent=1 // pred_region
      _
    $region87: #{forward.7} parent=1 // pred_fallthru
      _
    // Predicated region
    $region88: #{forward.7} parent=1 // pred_check
      _
    $region89: #{forward.7} parent=1 // pred_check_branch
      %255 = sbr.rel (0) target = $region91
    $region90: #{forward.7} parent=1 // pred_region
      _
    $region91: #{forward.7} parent=1 // pred_fallthru
      _
    // Predicated region
    $region92: #{forward.7} parent=1 // pred_check
      _
    $region93: #{forward.7} parent=1 // pred_check_branch
      %257 = sbr.rel (0) target = $region95
    $region94: #{forward.7} parent=1 // pred_region
      _
    $region95: #{forward.7} parent=1 // pred_fallthru
      _
    // Predicated region
    $region96: #{forward.7} parent=1 // pred_check
      _
    $region97: #{forward.7} parent=1 // pred_check_branch
      %259 = sbr.rel (0) target = $region99
    $region98: #{forward.7} parent=1 // pred_region
      _
    $region99: #{forward.7} parent=1 // pred_fallthru
      _
    %s260 = sadd.s32 0, 1
    %s261 = smul.u32 %s260, 4
    %s262 = smul.u32 2, %s261
    %v264 = vld [vmem:[#allocation2] sm:$0xf]
    %v265 = vld [vmem:[#allocation2 + $0x4] sm:$0xf]
    %v266 = vld [vmem:[#allocation2 + $0x8] sm:$0xf]
    %v267 = vld [vmem:[#allocation2 + $0xc] sm:$0xf]
    %v268 = vld [vmem:[#allocation2 + $0x10] sm:$0xf]
    %v269 = vld [vmem:[#allocation2 + $0x14] sm:$0xf]
    %v270 = vld [vmem:[#allocation2 + $0x18] sm:$0xf]
    %v271 = vld [vmem:[#allocation2 + $0x1c] sm:$0xf]
    %v272 = vld [vmem:[#allocation2 + $0x20] sm:$0xf]
    %v273 = vld [vmem:[#allocation2 + $0x24] sm:$0xf]
    %v274 = vld [vmem:[#allocation2 + $0x28] sm:$0xf]
    %v275 = vld [vmem:[#allocation2 + $0x2c] sm:$0xf]
    %v276 = vld [vmem:[#allocation2 + $0x30] sm:$0xf]
    %v277 = vld [vmem:[#allocation2 + $0x34] sm:$0xf]
    %v278 = vld [vmem:[#allocation2 + $0x38] sm:$0xf]
    %v279 = vld [vmem:[#allocation2 + $0x3c] sm:$0xf]
    %v280 = vld [vmem:[#allocation2 + $0x40] sm:$0xf]
    %v281 = vld [vmem:[#allocation2 + $0x44] sm:$0xf]
    %v282 = vld [vmem:[#allocation2 + $0x48] sm:$0xf]
    %v283 = vld [vmem:[#allocation2 + $0x4c] sm:$0xf]
    %v284 = vld [vmem:[#allocation2 + $0x50] sm:$0xf]
    %v285 = vld [vmem:[#allocation2 + $0x54] sm:$0xf]
    %v286 = vld [vmem:[#allocation2 + $0x58] sm:$0xf]
    %v287 = vld [vmem:[#allocation2 + $0x5c] sm:$0xf]
    %v288 = vld [vmem:[#allocation2 + $0x60] sm:$0xf]
    %v289 = vld [vmem:[#allocation2 + $0x64] sm:$0xf]
    %v290 = vld [vmem:[#allocation2 + $0x68] sm:$0xf]
    %v291 = vld [vmem:[#allocation2 + $0x6c] sm:$0xf]
    %v292 = vld [vmem:[#allocation2 + $0x70] sm:$0xf]
    %v293 = vld [vmem:[#allocation2 + $0x74] sm:$0xf]
    %v294 = vld [vmem:[#allocation2 + $0x78] sm:$0xf]
    %v295 = vld [vmem:[#allocation2 + $0x7c] sm:$0xf]
    %v296 = vld [vmem:[#allocation3] sm:$0xf]
    %v297 = vld [vmem:[#allocation3 + $0x4] sm:$0xf]
    %v298 = vld [vmem:[#allocation3 + $0x8] sm:$0xf]
    %v299 = vld [vmem:[#allocation3 + $0xc] sm:$0xf]
    %v300 = vld [vmem:[#allocation3 + $0x10] sm:$0xf]
    %v301 = vld [vmem:[#allocation3 + $0x14] sm:$0xf]
    %v334 = vunpack.c.l.b16 %v264
    %v335 = vunpack.c.l.b16 %v265
    %v336 = vunpack.c.l.b16 %v266
    %v337 = vunpack.c.l.b16 %v267
    %v338 = vunpack.c.l.b16 %v268
    %v339 = vunpack.c.l.b16 %v269
    %v340 = vunpack.c.l.b16 %v270
    %v341 = vunpack.c.l.b16 %v271
    %v342 = vunpack.c.l.b16 %v272
    %v343 = vunpack.c.l.b16 %v273
    %v344 = vunpack.c.l.b16 %v274
    %v345 = vunpack.c.l.b16 %v275
    %v346 = vunpack.c.l.b16 %v276
    %v347 = vunpack.c.l.b16 %v277
    %v348 = vunpack.c.l.b16 %v278
    %v349 = vunpack.c.l.b16 %v279
    %v350 = vunpack.c.l.b16 %v280
    %v351 = vunpack.c.l.b16 %v281
    %v352 = vunpack.c.l.b16 %v282
    %v353 = vunpack.c.l.b16 %v283
    %v354 = vunpack.c.l.b16 %v284
    %v355 = vunpack.c.l.b16 %v285
    %v356 = vunpack.c.l.b16 %v286
    %v357 = vunpack.c.l.b16 %v287
    %v358 = vunpack.c.l.b16 %v288
    %v359 = vunpack.c.l.b16 %v289
    %v360 = vunpack.c.l.b16 %v290
    %v361 = vunpack.c.l.b16 %v291
    %v362 = vunpack.c.l.b16 %v292
    %v363 = vunpack.c.l.b16 %v293
    %v364 = vunpack.c.l.b16 %v294
    %v365 = vunpack.c.l.b16 %v295
    %v366 = vpack.c.b16 %v335, %v334
    %v367 = vpack.c.b16 %v337, %v336
    %v368 = vpack.c.b16 %v339, %v338
    %v369 = vpack.c.b16 %v341, %v340
    %v370 = vpack.c.b16 %v343, %v342
    %v371 = vpack.c.b16 %v345, %v344
    %v372 = vpack.c.b16 %v347, %v346
    %v373 = vpack.c.b16 %v349, %v348
    %v374 = vpack.c.b16 %v351, %v350
    %v375 = vpack.c.b16 %v353, %v352
    %v376 = vpack.c.b16 %v355, %v354
    %v377 = vpack.c.b16 %v357, %v356
    %v378 = vpack.c.b16 %v359, %v358
    %v379 = vpack.c.b16 %v361, %v360
    %v380 = vpack.c.b16 %v363, %v362
    %v381 = vpack.c.b16 %v365, %v364
    %v388 = vunpack.c.l.b16 %v296
    %v389 = vunpack.c.l.b16 %v297
    %v390 = vunpack.c.l.b16 %v298
    %v391 = vunpack.c.l.b16 %v299
    %v392 = vunpack.c.l.b16 %v300
    %v393 = vunpack.c.l.b16 %v301
    %v394 = vpack.c.b16 %v389, %v388
    %v395 = vpack.c.b16 %v391, %v390
    %v396 = vpack.c.b16 %v393, %v392
    %397 = vrot.lane.b32.xlu0 %v370, 32
    %v398 = vpop.permute.xlu0 %397
    %399 = vrot.lane.b32.xlu0 %v371, 32
    %v400 = vpop.permute.xlu0 %399
    %401 = vrot.lane.b32.xlu0 %v372, 32
    %v402 = vpop.permute.xlu0 %401
    %403 = vrot.lane.b32.xlu0 %v373, 32
    %v404 = vpop.permute.xlu0 %403
    %vm405 = vsmask.f32 7424
    %v407 = vshrl.u32 %v366, 16
    %v409 = vshll.u32 %v366, 16
    %v411 = vrot.slane %v409, 1
    %v412 = vor.u32 %v407, %v411
    %v414 = vshll.u32 %v367, 16
    %v416 = vrot.slane %v414, 1
    %v417 = vsel %vm405, %v412, %v416
    %v418 = vshrl.u32 %v367, 16
    %v420 = vor.u32 %v418, %v416
    %v422 = vshll.u32 %v368, 16
    %v424 = vrot.slane %v422, 1
    %v425 = vsel %vm405, %v420, %v424
    %v426 = vshrl.u32 %v368, 16
    %v428 = vor.u32 %v426, %v424
    %v430 = vshll.u32 %v369, 16
    %v432 = vrot.slane %v430, 1
    %v433 = vsel %vm405, %v428, %v432
    %v434 = vshrl.u32 %v369, 16
    %v436 = vor.u32 %v434, %v432
    %v438 = vshll.u32 %v394, 16
    %v440 = vrot.slane %v438, 1
    %v441 = vsel %vm405, %v436, %v440
    %442 = vrot.lane.b32.xlu0 %v417, 64
    %v443 = vpop.permute.xlu0 %442
    %444 = vrot.lane.b32.xlu0 %v425, 64
    %v445 = vpop.permute.xlu0 %444
    %446 = vrot.lane.b32.xlu0 %v433, 64
    %v447 = vpop.permute.xlu0 %446
    %448 = vrot.lane.b32.xlu0 %v441, 64
    %v449 = vpop.permute.xlu0 %448
    %450 = vrot.lane.b32.xlu0 %v374, 96
    %v451 = vpop.permute.xlu0 %450
    %452 = vrot.lane.b32.xlu0 %v375, 96
    %v453 = vpop.permute.xlu0 %452
    %454 = vrot.lane.b32.xlu0 %v376, 96
    %v455 = vpop.permute.xlu0 %454
    %456 = vrot.lane.b32.xlu0 %v377, 96
    %v457 = vpop.permute.xlu0 %456
    %v459 = vshrl.u32 %v374, 16
    %v461 = vshll.u32 %v374, 16
    %v463 = vrot.slane %v461, 1
    %v464 = vor.u32 %v459, %v463
    %v466 = vshll.u32 %v375, 16
    %v468 = vrot.slane %v466, 1
    %v469 = vsel %vm405, %v464, %v468
    %v470 = vshrl.u32 %v375, 16
    %v472 = vor.u32 %v470, %v468
    %v474 = vshll.u32 %v376, 16
    %v476 = vrot.slane %v474, 1
    %v477 = vsel %vm405, %v472, %v476
    %v478 = vshrl.u32 %v376, 16
    %v480 = vor.u32 %v478, %v476
    %v482 = vshll.u32 %v377, 16
    %v484 = vrot.slane %v482, 1
    %v485 = vsel %vm405, %v480, %v484
    %v486 = vshrl.u32 %v377, 16
    %v488 = vor.u32 %v486, %v484
    %v490 = vshll.u32 %v396, 16
    %v492 = vrot.slane %v490, 1
    %v493 = vsel %vm405, %v488, %v492
    %494 = vrot.lane.b32.xlu0 %v469, 32
    %v495 = vpop.permute.xlu0 %494
    %496 = vrot.lane.b32.xlu0 %v477, 32
    %v497 = vpop.permute.xlu0 %496
    %498 = vrot.lane.b32.xlu0 %v485, 32
    %v499 = vpop.permute.xlu0 %498
    %500 = vrot.lane.b32.xlu0 %v493, 32
    %v501 = vpop.permute.xlu0 %500
    %vm502 = vsmask.f32 5376
    %v503 = vrot.slane %v407, 2
    %v504 = vrot.slane %v409, 3
    %v505 = vor.u32 %v503, %v504
    %v506 = vrot.slane %v418, 2
    %v507 = vrot.slane %v414, 3
    %v508 = vor.u32 %v506, %v507
    %v509 = vsel %vm502, %v505, %v508
    %v510 = vrot.slane %v426, 2
    %v511 = vrot.slane %v422, 3
    %v512 = vor.u32 %v510, %v511
    %v513 = vsel %vm502, %v508, %v512
    %v514 = vrot.slane %v434, 2
    %v515 = vrot.slane %v430, 3
    %v516 = vor.u32 %v514, %v515
    %v517 = vsel %vm502, %v512, %v516
    %v518 = vshrl.u32 %v394, 16
    %v520 = vrot.slane %v518, 2
    %v521 = vrot.slane %v438, 3
    %v522 = vor.u32 %v520, %v521
    %v523 = vsel %vm502, %v516, %v522
    %524 = vrot.lane.b32.xlu0 %v509, 64
    %v525 = vpop.permute.xlu0 %524
    %526 = vrot.lane.b32.xlu0 %v513, 64
    %v527 = vpop.permute.xlu0 %526
    %528 = vrot.lane.b32.xlu0 %v517, 64
    %v529 = vpop.permute.xlu0 %528
    %530 = vrot.lane.b32.xlu0 %v523, 64
    %v531 = vpop.permute.xlu0 %530
    %v533 = vshrl.u32 %v370, 16
    %v535 = vrot.slane %v533, 2
    %v536 = vshll.u32 %v370, 16
    %v538 = vrot.slane %v536, 3
    %v539 = vor.u32 %v535, %v538
    %v541 = vshrl.u32 %v371, 16
    %v543 = vrot.slane %v541, 2
    %v544 = vshll.u32 %v371, 16
    %v546 = vrot.slane %v544, 3
    %v547 = vor.u32 %v543, %v546
    %v548 = vsel %vm502, %v539, %v547
    %v550 = vshrl.u32 %v372, 16
    %v552 = vrot.slane %v550, 2
    %v553 = vshll.u32 %v372, 16
    %v555 = vrot.slane %v553, 3
    %v556 = vor.u32 %v552, %v555
    %v557 = vsel %vm502, %v547, %v556
    %v559 = vshrl.u32 %v373, 16
    %v561 = vrot.slane %v559, 2
    %v562 = vshll.u32 %v373, 16
    %v564 = vrot.slane %v562, 3
    %v565 = vor.u32 %v561, %v564
    %v566 = vsel %vm502, %v556, %v565
    %v568 = vshrl.u32 %v395, 16
    %v570 = vrot.slane %v568, 2
    %v571 = vshll.u32 %v395, 16
    %v573 = vrot.slane %v571, 3
    %v574 = vor.u32 %v570, %v573
    %v575 = vsel %vm502, %v565, %v574
    %576 = vrot.lane.b32.xlu0 %v548, 96
    %v577 = vpop.permute.xlu0 %576
    %578 = vrot.lane.b32.xlu0 %v557, 96
    %v579 = vpop.permute.xlu0 %578
    %580 = vrot.lane.b32.xlu0 %v566, 96
    %v581 = vpop.permute.xlu0 %580
    %582 = vrot.lane.b32.xlu0 %v575, 96
    %v583 = vpop.permute.xlu0 %582
    %vm584 = vcmask 1044480
    %v585 = vrot.slane %v366, 3
    %v586 = vrot.slane %v367, 3
    %v587 = vsel %vm584, %v585, %v586
    %v588 = vrot.slane %v368, 3
    %v589 = vsel %vm584, %v586, %v588
    %v590 = vrot.slane %v369, 3
    %v591 = vsel %vm584, %v588, %v590
    %v592 = vrot.slane %v394, 3
    %v593 = vsel %vm584, %v590, %v592
    %vm594 = vcmask 261120
    %v596 = vsel %vm594, %v366, %v398
    %v598 = vsel %vm594, %v367, %v400
    %v600 = vsel %vm594, %v368, %v402
    %v602 = vsel %vm594, %v369, %v404
    %vm603 = vcmask 523264
    %v605 = vsel %vm603, %v596, %v443
    %v607 = vsel %vm603, %v598, %v445
    %v609 = vsel %vm603, %v600, %v447
    %v611 = vsel %vm603, %v602, %v449
    %vm612 = vcmask 785408
    %v614 = vsel %vm612, %v605, %v451
    %v617 = vsel %vm612, %v607, %v453
    %v620 = vsel %vm612, %v609, %v455
    %v623 = vsel %vm612, %v611, %v457
    %v627 = vsel %vm594, %v378, %v495
    %v630 = vsel %vm594, %v379, %v497
    %v633 = vsel %vm594, %v380, %v499
    %v636 = vsel %vm594, %v381, %v501
    %v638 = vsel %vm603, %v627, %v525
    %v640 = vsel %vm603, %v630, %v527
    %v642 = vsel %vm603, %v633, %v529
    %v644 = vsel %vm603, %v636, %v531
    %v646 = vsel %vm612, %v638, %v577
    %v649 = vsel %vm612, %v640, %v579
    %v652 = vsel %vm612, %v642, %v581
    %v655 = vsel %vm612, %v644, %v583
    %v657 = vld [vmem:[%s2] sm:$0xf]
    %v658 = vld [vmem:[%s2 + $0x4] sm:$0xf]
    %v659 = vld [vmem:[%s2 + $0x8] sm:$0xf]
    %v660 = vld [vmem:[%s2 + $0xc] sm:$0xf]
    %v661 = vld [vmem:[%s2 + $0x10] sm:$0xf]
    %v662 = vld [vmem:[%s2 + $0x14] sm:$0xf]
    %v663 = vld [vmem:[%s2 + $0x18] sm:$0xf]
    %v664 = vld [vmem:[%s2 + $0x1c] sm:$0xf]
    %v665 = vld [vmem:[%s2 + $0x20] sm:$0xf]
    %v666 = vld [vmem:[%s2 + $0x24] sm:$0xf]
    %v667 = vld [vmem:[%s2 + $0x28] sm:$0xf]
    %v668 = vld [vmem:[%s2 + $0x2c] sm:$0xf]
    %v669 = vld [vmem:[%s2 + $0x30] sm:$0xf]
    %v670 = vld [vmem:[%s2 + $0x34] sm:$0xf]
    %v671 = vld [vmem:[%s2 + $0x38] sm:$0xf]
    %v672 = vld [vmem:[%s2 + $0x3c] sm:$0xf]
    %v673 = vld [vmem:[%s2 + $0x40] sm:$0xf]
    %v674 = vld [vmem:[%s2 + $0x44] sm:$0xf]
    %v675 = vld [vmem:[%s2 + $0x48] sm:$0xf]
    %v676 = vld [vmem:[%s2 + $0x4c] sm:$0xf]
    %v677 = vld [vmem:[%s2 + $0x50] sm:$0xf]
    %v678 = vld [vmem:[%s2 + $0x54] sm:$0xf]
    %v679 = vld [vmem:[%s2 + $0x58] sm:$0xf]
    %v680 = vld [vmem:[%s2 + $0x5c] sm:$0xf]
    %v681 = vld [vmem:[%s2 + $0x60] sm:$0xf]
    %v682 = vld [vmem:[%s2 + $0x64] sm:$0xf]
    %v683 = vld [vmem:[%s2 + $0x68] sm:$0xf]
    %v684 = vld [vmem:[%s2 + $0x6c] sm:$0xf]
    %v685 = vld [vmem:[%s2 + $0x70] sm:$0xf]
    %v686 = vld [vmem:[%s2 + $0x74] sm:$0xf]
    %v687 = vld [vmem:[%s2 + $0x78] sm:$0xf]
    %v688 = vld [vmem:[%s2 + $0x7c] sm:$0xf]
    %v689 = vld [vmem:[%s2 + $0x80] sm:$0xf]
    %v690 = vld [vmem:[%s2 + $0x84] sm:$0xf]
    %v691 = vld [vmem:[%s2 + $0x88] sm:$0xf]
    %v692 = vld [vmem:[%s2 + $0x8c] sm:$0xf]
    %v693 = vld [vmem:[%s3] sm:$0x1]
    %v695 = vperm.slane %v693, 0
    %v733 = vunpack.c.l.b16 %v657
    %v734 = vunpack.c.l.b16 %v658
    %v735 = vunpack.c.l.b16 %v659
    %v736 = vunpack.c.l.b16 %v660
    %v737 = vunpack.c.l.b16 %v661
    %v738 = vunpack.c.l.b16 %v662
    %v739 = vunpack.c.l.b16 %v663
    %v740 = vunpack.c.l.b16 %v664
    %v741 = vunpack.c.l.b16 %v665
    %v742 = vunpack.c.l.b16 %v666
    %v743 = vunpack.c.l.b16 %v667
    %v744 = vunpack.c.l.b16 %v668
    %v745 = vunpack.c.l.b16 %v669
    %v746 = vunpack.c.l.b16 %v670
    %v747 = vunpack.c.l.b16 %v671
    %v748 = vunpack.c.l.b16 %v672
    %v749 = vunpack.c.l.b16 %v673
    %v750 = vunpack.c.l.b16 %v674
    %v751 = vunpack.c.l.b16 %v675
    %v752 = vunpack.c.l.b16 %v676
    %v753 = vunpack.c.l.b16 %v677
    %v754 = vunpack.c.l.b16 %v678
    %v755 = vunpack.c.l.b16 %v679
    %v756 = vunpack.c.l.b16 %v680
    %v757 = vunpack.c.l.b16 %v681
    %v758 = vunpack.c.l.b16 %v682
    %v759 = vunpack.c.l.b16 %v683
    %v760 = vunpack.c.l.b16 %v684
    %v761 = vunpack.c.l.b16 %v685
    %v762 = vunpack.c.l.b16 %v686
    %v763 = vunpack.c.l.b16 %v687
    %v764 = vunpack.c.l.b16 %v688
    %v765 = vunpack.c.l.b16 %v689
    %v766 = vunpack.c.l.b16 %v690
    %v767 = vunpack.c.l.b16 %v691
    %v768 = vunpack.c.l.b16 %v692
    %v769 = vpack.c.b16 %v734, %v733
    %v770 = vpack.c.b16 %v736, %v735
    %v771 = vpack.c.b16 %v738, %v737
    %v772 = vpack.c.b16 %v740, %v739
    %v773 = vpack.c.b16 %v742, %v741
    %v774 = vpack.c.b16 %v744, %v743
    %v775 = vpack.c.b16 %v746, %v745
    %v776 = vpack.c.b16 %v748, %v747
    %v777 = vpack.c.b16 %v750, %v749
    %v778 = vpack.c.b16 %v752, %v751
    %v779 = vpack.c.b16 %v754, %v753
    %v780 = vpack.c.b16 %v756, %v755
    %v781 = vpack.c.b16 %v758, %v757
    %v782 = vpack.c.b16 %v760, %v759
    %v783 = vpack.c.b16 %v762, %v761
    %v784 = vpack.c.b16 %v764, %v763
    %v785 = vpack.c.b16 %v766, %v765
    %v786 = vpack.c.b16 %v768, %v767
    %v806 = vsel %vm594, %v587, 0
    %v809 = vsel %vm594, %v589, 0
    %v812 = vsel %vm594, %v591, 0
    %v815 = vsel %vm594, %v593, 0
    %817 = vmatpush.bf16.msra.mxu0 %v776
    %818 = vmatpush.bf16.msra.mxu0 %v775
    %819 = vmatpush.bf16.msra.mxu0 %v774
    %820 = vmatpush.bf16.msra.mxu0 %v773
    %821 = vmatpush.bf16.msra.mxu0 %v772
    %822 = vmatpush.bf16.msra.mxu0 %v771
    %823 = vmatpush.bf16.msra.mxu0 %v770
    %824 = vmatpush.bf16.msra.mxu0 %v769
    %825 = vmatmul.bf16.gmra.mxu0 %v614
    %v826 = vpop.f32.mrf.mxu0
    %v827 = vadd.f32 %v695, %v826
    %v828 = vpop.f32.mrf.mxu0
    %v829 = vadd.f32 %v695, %v828
    %830 = vmatmul.bf16.gmra.mxu0 %v617
    %v831 = vpop.f32.mrf.mxu0
    %v832 = vadd.f32 %v695, %v831
    %v833 = vpop.f32.mrf.mxu0
    %v834 = vadd.f32 %v695, %v833
    %835 = vmatmul.bf16.gmra.mxu0 %v620
    %v836 = vpop.f32.mrf.mxu0
    %v837 = vadd.f32 %v695, %v836
    %v838 = vpop.f32.mrf.mxu0
    %v839 = vadd.f32 %v695, %v838
    %840 = vmatmul.bf16.gmra.mxu0 %v623
    %v841 = vpop.f32.mrf.mxu0
    %v842 = vadd.f32 %v695, %v841
    %v843 = vpop.f32.mrf.mxu0
    %v844 = vadd.f32 %v695, %v843
    %845 = vdwg.mxu0
    %846 = vmatpush.bf16.msra.mxu0 %v784
    %847 = vmatpush.bf16.msra.mxu0 %v783
    %848 = vmatpush.bf16.msra.mxu0 %v782
    %849 = vmatpush.bf16.msra.mxu0 %v781
    %850 = vmatpush.bf16.msra.mxu0 %v780
    %851 = vmatpush.bf16.msra.mxu0 %v779
    %852 = vmatpush.bf16.msra.mxu0 %v778
    %853 = vmatpush.bf16.msra.mxu0 %v777
    %854 = vmatmul.bf16.gmra.mxu0 %v646
    %v855 = vpop.f32.mrf.mxu0
    %v856 = vadd.f32 %v827, %v855
    %v857 = vpop.f32.mrf.mxu0
    %v858 = vadd.f32 %v829, %v857
    %859 = vmatmul.bf16.gmra.mxu0 %v649
    %v860 = vpop.f32.mrf.mxu0
    %v861 = vadd.f32 %v832, %v860
    %v862 = vpop.f32.mrf.mxu0
    %v863 = vadd.f32 %v834, %v862
    %864 = vmatmul.bf16.gmra.mxu0 %v652
    %v865 = vpop.f32.mrf.mxu0
    %v866 = vadd.f32 %v837, %v865
    %v867 = vpop.f32.mrf.mxu0
    %v868 = vadd.f32 %v839, %v867
    %869 = vmatmul.bf16.gmra.mxu0 %v655
    %v870 = vpop.f32.mrf.mxu0
    %v871 = vadd.f32 %v842, %v870
    %v872 = vpop.f32.mrf.mxu0
    %v873 = vadd.f32 %v844, %v872
    %874 = vdwg.mxu0
    %875 = vmatpush.bf16.msra.mxu0 0
    %876 = vmatpush.bf16.msra.mxu0 0
    %877 = vmatpush.bf16.msra.mxu0 0
    %878 = vmatpush.bf16.msra.mxu0 0
    %879 = vmatpush.bf16.msra.mxu0 0
    %880 = vmatpush.bf16.msra.mxu0 0
    %881 = vmatpush.bf16.msra.mxu0 %v786
    %882 = vmatpush.bf16.msra.mxu0 %v785
    %883 = vmatmul.bf16.gmra.mxu0 %v806
    %v884 = vpop.f32.mrf.mxu0
    %v885 = vadd.f32 %v856, %v884
    %v886 = vpop.f32.mrf.mxu0
    %v887 = vadd.f32 %v858, %v886
    %888 = vmatmul.bf16.gmra.mxu0 %v809
    %v889 = vpop.f32.mrf.mxu0
    %v890 = vadd.f32 %v861, %v889
    %v891 = vpop.f32.mrf.mxu0
    %v892 = vadd.f32 %v863, %v891
    %893 = vmatmul.bf16.gmra.mxu0 %v812
    %v894 = vpop.f32.mrf.mxu0
    %v895 = vadd.f32 %v866, %v894
    %v896 = vpop.f32.mrf.mxu0
    %v897 = vadd.f32 %v868, %v896
    %898 = vmatmul.bf16.gmra.mxu0 %v815
    %v899 = vpop.f32.mrf.mxu0
    %v900 = vadd.f32 %v871, %v899
    %v901 = vpop.f32.mrf.mxu0
    %v902 = vadd.f32 %v873, %v901
    %903 = vdwg.mxu0
    %v904 = vmax.f32 %v885, 0.0
    %v905 = vmax.f32 %v887, 0.0
    %v906 = vmax.f32 %v890, 0.0
    %v907 = vmax.f32 %v892, 0.0
    %v908 = vmax.f32 %v895, 0.0
    %v909 = vmax.f32 %v897, 0.0
    %v910 = vmax.f32 %v900, 0.0
    %v911 = vmax.f32 %v902, 0.0
    %v912 = vpack.c.bf16 %v904, %v904
    %v913 = vpack.c.bf16 %v905, %v905
    %v914 = vpack.c.bf16 %v906, %v906
    %v915 = vpack.c.bf16 %v907, %v907
    %v916 = vpack.c.bf16 %v908, %v908
    %v917 = vpack.c.bf16 %v909, %v909
    %v918 = vpack.c.bf16 %v910, %v910
    %v919 = vpack.c.bf16 %v911, %v911
    %vm920 = vcmask 519168
    %921 = vst.msk [vmem:[%s4] sm:$0xf] %vm920, %v912
    %922 = vst.msk [vmem:[%s4 + $0x4] sm:$0xf] %vm920, %v913
    %923 = vst.msk [vmem:[%s4 + $0x8] sm:$0xf] %vm920, %v914
    %924 = vst.msk [vmem:[%s4 + $0xc] sm:$0xf] %vm920, %v915
    %925 = vst.msk [vmem:[%s4 + $0x10] sm:$0xf] %vm920, %v916
    %926 = vst.msk [vmem:[%s4 + $0x14] sm:$0xf] %vm920, %v917
    %927 = vst.msk [vmem:[%s4 + $0x18] sm:$0xf] %vm920, %v918
    %928 = vst.msk [vmem:[%s4 + $0x1c] sm:$0xf] %vm920, %v919
    // Predicated region
    $region100: #{forward.7} parent=1 // pred_check
      _
    $region101: #{forward.7} parent=1 // pred_check_branch
      %930 = sbr.rel (0) target = $region103
    $region102: #{forward.7} parent=1 // pred_region
      _
    $region103: #{forward.7} parent=1 // pred_fallthru
      _
    // Predicated region
    $region104: #{forward.7} parent=1 // pred_check
      _
    $region105: #{forward.7} parent=1 // pred_check_branch
      %932 = sbr.rel (0) target = $region107
    $region106: #{forward.7} parent=1 // pred_region
      _
    $region107: #{forward.7} parent=1 // pred_fallthru
      _

// kernel: forward.6
$region0: #{forward.6}
  #allocation0 [shape = 'u32[]', space=smem, size = 0x4, offset = 0x4, fixed_abs, tag = 'smem constant byte address 0x4 - core index']
  #allocation1 [shape = 'u32[72,128]{1,0:T(1,128)}', space=vmem, size = 0x9000, scoped, tag = 'internal scratch']
  %s0 = inlined_call_operand.vmem [shape: bf16[4,192,3], index: 0, kind: input, shape index: {}, may-alias: {0,1}]
  %s1 = inlined_call_operand.vmem [shape: bf16[4,192,3], index: 1, kind: input, shape index: {}, may-alias: {0,1}]
  %s2 = inlined_call_operand.vmem [shape: bf16[27,32], index: 2, kind: input, shape index: {}]
  %s3 = inlined_call_operand.vmem [shape: f32[1,32], index: 3, kind: input, shape index: {}]
  %s4 = inlined_call_operand.vmem [shape: bf16[176,32], index: 4, kind: output, shape index: {}]
  %s5 = sld [smem:[#allocation0]]
  $region108: #{forward.6} parent=0
    _
  %s7 = ssub.s32 1, %s5
  %s8 = scalar_select 0, %s7, %s5
  $region1: #{forward.6} parent=0
    #allocation2 [shape = 'u8[180224]{0}', space=vmem, size = 0x2c000, scoped, tag = 'input window, operand 0, single buffered']
    #allocation3 [shape = 'u8[16384]{0}', space=vmem, size = 0x4000, scoped, tag = 'input window, operand 1, single buffered']
    // Predicated region
    $region2: #{forward.6} parent=1 // pred_check
      _
    $region3: #{forward.6} parent=1 // pred_check_branch
      %10 = sbr.rel (0) target = $region5
    $region4: #{forward.6} parent=1 // pred_region
      // Predicated region
      $region6: #{forward.6} parent=4 // pred_check
        _
      $region7: #{forward.6} parent=4 // pred_check_branch
        %12 = sbr.rel (0) target = $region9
      $region8: #{forward.6} parent=4 // pred_region
        // Predicated region
        $region10: #{forward.6} parent=8 // pred_check
          _
        $region11: #{forward.6} parent=8 // pred_check_branch
          %14 = sbr.rel target = $region13
        $region12: #{forward.6} parent=8 // pred_region
          // Predicated region
          $region25: #{forward.6} parent=12 // pred_check
            _
          $region26: #{forward.6} parent=12 // pred_check_branch
            %204 = sbr.rel (0) target = $region28
          $region27: #{forward.6} parent=12 // pred_region
            loop: start=0, step=1, limit=1
            $region29: #{forward.6} parent=27 // loop_pre_header
              _
            $region30: #{forward.6} parent=27 // loop_header
              %s206 = sphi 0, %s210
              %p207 = scmp.ge.s32.totalorder %s206, 1
              %s211 = sphi %s0, %s0
              %s212 = sphi [#allocation2], [#allocation2]
            $region31: #{forward.6} parent=27 // loop_header_branch
              %209 = sbr.rel (%p207) target = $region35
            $region32: #{forward.6} parent=27 // loop_body
              _
            $region33: #{forward.6} parent=27 // loop_footer
              %s210 = sadd.s32 1, %s206
            $region34: #{forward.6} parent=27 // loop_footer_branch
              %205 = sbr.rel target = $region30
            $region35: #{forward.6} parent=27 // loop_exit
              _
            %s214 = ssub.s32 16, 1
            loop: start=0, step=1, limit=1
            $region36: #{forward.6} parent=27 // loop_pre_header
              _
            $region37: #{forward.6} parent=27 // loop_header
              %s216 = sphi 0, %s220
              %p217 = scmp.ge.s32.totalorder %s216, 1
              %s221 = sphi %s0, %s0
              %s222 = sphi [#allocation2], [#allocation2]
            $region38: #{forward.6} parent=27 // loop_header_branch
              %219 = sbr.rel (%p217) target = $region42
            $region39: #{forward.6} parent=27 // loop_body
              %v223 = vld [vmem:[%s221] sm:%s214]
              %224 = vst [vmem:[%s222] sm:%s214] %v223
              %v225 = vld [vmem:[%s221 + $0x4] sm:%s214]
              %226 = vst [vmem:[%s222 + $0x4] sm:%s214] %v225
              %v227 = vld [vmem:[%s221 + $0x8] sm:%s214]
              %228 = vst [vmem:[%s222 + $0x8] sm:%s214] %v227
              %v229 = vld [vmem:[%s221 + $0xc] sm:%s214]
              %230 = vst [vmem:[%s222 + $0xc] sm:%s214] %v229
              %v231 = vld [vmem:[%s221 + $0x10] sm:%s214]
              %232 = vst [vmem:[%s222 + $0x10] sm:%s214] %v231
              %v233 = vld [vmem:[%s221 + $0x14] sm:%s214]
              %234 = vst [vmem:[%s222 + $0x14] sm:%s214] %v233
              %v235 = vld [vmem:[%s221 + $0x18] sm:%s214]
              %236 = vst [vmem:[%s222 + $0x18] sm:%s214] %v235
              %v237 = vld [vmem:[%s221 + $0x1c] sm:%s214]
              %238 = vst [vmem:[%s222 + $0x1c] sm:%s214] %v237
              %v239 = vld [vmem:[%s221 + $0x20] sm:%s214]
              %240 = vst [vmem:[%s222 + $0x20] sm:%s214] %v239
              %v241 = vld [vmem:[%s221 + $0x24] sm:%s214]
              %242 = vst [vmem:[%s222 + $0x24] sm:%s214] %v241
              %v243 = vld [vmem:[%s221 + $0x28] sm:%s214]
              %244 = vst [vmem:[%s222 + $0x28] sm:%s214] %v243
              %v245 = vld [vmem:[%s221 + $0x2c] sm:%s214]
              %246 = vst [vmem:[%s222 + $0x2c] sm:%s214] %v245
              %v247 = vld [vmem:[%s221 + $0x30] sm:%s214]
              %248 = vst [vmem:[%s222 + $0x30] sm:%s214] %v247
              %v249 = vld [vmem:[%s221 + $0x34] sm:%s214]
              %250 = vst [vmem:[%s222 + $0x34] sm:%s214] %v249
              %v251 = vld [vmem:[%s221 + $0x38] sm:%s214]
              %252 = vst [vmem:[%s222 + $0x38] sm:%s214] %v251
              %v253 = vld [vmem:[%s221 + $0x3c] sm:%s214]
              %254 = vst [vmem:[%s222 + $0x3c] sm:%s214] %v253
              %v255 = vld [vmem:[%s221 + $0x40] sm:%s214]
              %256 = vst [vmem:[%s222 + $0x40] sm:%s214] %v255
              %v257 = vld [vmem:[%s221 + $0x44] sm:%s214]
              %258 = vst [vmem:[%s222 + $0x44] sm:%s214] %v257
              %v259 = vld [vmem:[%s221 + $0x48] sm:%s214]
              %260 = vst [vmem:[%s222 + $0x48] sm:%s214] %v259
              %v261 = vld [vmem:[%s221 + $0x4c] sm:%s214]
              %262 = vst [vmem:[%s222 + $0x4c] sm:%s214] %v261
              %v263 = vld [vmem:[%s221 + $0x50] sm:%s214]
              %264 = vst [vmem:[%s222 + $0x50] sm:%s214] %v263
              %v265 = vld [vmem:[%s221 + $0x54] sm:%s214]
              %266 = vst [vmem:[%s222 + $0x54] sm:%s214] %v265
              %v267 = vld [vmem:[%s221 + $0x60] sm:%s214]
              %268 = vst [vmem:[%s222 + $0x58] sm:%s214] %v267
              %v269 = vld [vmem:[%s221 + $0x64] sm:%s214]
              %270 = vst [vmem:[%s222 + $0x5c] sm:%s214] %v269
              %v271 = vld [vmem:[%s221 + $0x68] sm:%s214]
              %272 = vst [vmem:[%s222 + $0x60] sm:%s214] %v271
              %v273 = vld [vmem:[%s221 + $0x6c] sm:%s214]
              %274 = vst [vmem:[%s222 + $0x64] sm:%s214] %v273
              %v275 = vld [vmem:[%s221 + $0x70] sm:%s214]
              %276 = vst [vmem:[%s222 + $0x68] sm:%s214] %v275
              %v277 = vld [vmem:[%s221 + $0x74] sm:%s214]
              %278 = vst [vmem:[%s222 + $0x6c] sm:%s214] %v277
              %v279 = vld [vmem:[%s221 + $0x78] sm:%s214]
              %280 = vst [vmem:[%s222 + $0x70] sm:%s214] %v279
              %v281 = vld [vmem:[%s221 + $0x7c] sm:%s214]
              %282 = vst [vmem:[%s222 + $0x74] sm:%s214] %v281
              %v283 = vld [vmem:[%s221 + $0x80] sm:%s214]
              %284 = vst [vmem:[%s222 + $0x78] sm:%s214] %v283
              %v285 = vld [vmem:[%s221 + $0x84] sm:%s214]
              %286 = vst [vmem:[%s222 + $0x7c] sm:%s214] %v285
              %v287 = vld [vmem:[%s221 + $0x88] sm:%s214]
              %288 = vst [vmem:[%s222 + $0x80] sm:%s214] %v287
              %v289 = vld [vmem:[%s221 + $0x8c] sm:%s214]
              %290 = vst [vmem:[%s222 + $0x84] sm:%s214] %v289
              %v291 = vld [vmem:[%s221 + $0x90] sm:%s214]
              %292 = vst [vmem:[%s222 + $0x88] sm:%s214] %v291
              %v293 = vld [vmem:[%s221 + $0x94] sm:%s214]
              %294 = vst [vmem:[%s222 + $0x8c] sm:%s214] %v293
              %v295 = vld [vmem:[%s221 + $0x98] sm:%s214]
              %296 = vst [vmem:[%s222 + $0x90] sm:%s214] %v295
              %v297 = vld [vmem:[%s221 + $0x9c] sm:%s214]
              %298 = vst [vmem:[%s222 + $0x94] sm:%s214] %v297
              %v299 = vld [vmem:[%s221 + $0xa0] sm:%s214]
              %300 = vst [vmem:[%s222 + $0x98] sm:%s214] %v299
              %v301 = vld [vmem:[%s221 + $0xa4] sm:%s214]
              %302 = vst [vmem:[%s222 + $0x9c] sm:%s214] %v301
              %v303 = vld [vmem:[%s221 + $0xa8] sm:%s214]
              %304 = vst [vmem:[%s222 + $0xa0] sm:%s214] %v303
              %v305 = vld [vmem:[%s221 + $0xac] sm:%s214]
              %306 = vst [vmem:[%s222 + $0xa4] sm:%s214] %v305
              %v307 = vld [vmem:[%s221 + $0xb0] sm:%s214]
              %308 = vst [vmem:[%s222 + $0xa8] sm:%s214] %v307
              %v309 = vld [vmem:[%s221 + $0xb4] sm:%s214]
              %310 = vst [vmem:[%s222 + $0xac] sm:%s214] %v309
              %v311 = vld [vmem:[%s221 + $0xc0] sm:%s214]
              %312 = vst [vmem:[%s222 + $0xb0] sm:%s214] %v311
              %v313 = vld [vmem:[%s221 + $0xc4] sm:%s214]
              %314 = vst [vmem:[%s222 + $0xb4] sm:%s214] %v313
              %v315 = vld [vmem:[%s221 + $0xc8] sm:%s214]
              %316 = vst [vmem:[%s222 + $0xb8] sm:%s214] %v315
              %v317 = vld [vmem:[%s221 + $0xcc] sm:%s214]
              %318 = vst [vmem:[%s222 + $0xbc] sm:%s214] %v317
              %v319 = vld [vmem:[%s221 + $0xd0] sm:%s214]
              %320 = vst [vmem:[%s222 + $0xc0] sm:%s214] %v319
              %v321 = vld [vmem:[%s221 + $0xd4] sm:%s214]
              %322 = vst [vmem:[%s222 + $0xc4] sm:%s214] %v321
              %v323 = vld [vmem:[%s221 + $0xd8] sm:%s214]
              %324 = vst [vmem:[%s222 + $0xc8] sm:%s214] %v323
              %v325 = vld [vmem:[%s221 + $0xdc] sm:%s214]
              %326 = vst [vmem:[%s222 + $0xcc] sm:%s214] %v325
              %v327 = vld [vmem:[%s221 + $0xe0] sm:%s214]
              %328 = vst [vmem:[%s222 + $0xd0] sm:%s214] %v327
              %v329 = vld [vmem:[%s221 + $0xe4] sm:%s214]
              %330 = vst [vmem:[%s222 + $0xd4] sm:%s214] %v329
              %v331 = vld [vmem:[%s221 + $0xe8] sm:%s214]
              %332 = vst [vmem:[%s222 + $0xd8] sm:%s214] %v331
              %v333 = vld [vmem:[%s221 + $0xec] sm:%s214]
              %334 = vst [vmem:[%s222 + $0xdc] sm:%s214] %v333
              %v335 = vld [vmem:[%s221 + $0xf0] sm:%s214]
              %336 = vst [vmem:[%s222 + $0xe0] sm:%s214] %v335
              %v337 = vld [vmem:[%s221 + $0xf4] sm:%s214]
              %338 = vst [vmem:[%s222 + $0xe4] sm:%s214] %v337
              %v339 = vld [vmem:[%s221 + $0xf8] sm:%s214]
              %340 = vst [vmem:[%s222 + $0xe8] sm:%s214] %v339
              %v341 = vld [vmem:[%s221 + $0xfc] sm:%s214]
              %342 = vst [vmem:[%s222 + $0xec] sm:%s214] %v341
              %v343 = vld [vmem:[%s221 + $0x100] sm:%s214]
              %344 = vst [vmem:[%s222 + $0xf0] sm:%s214] %v343
              %v345 = vld [vmem:[%s221 + $0x104] sm:%s214]
              %346 = vst [vmem:[%s222 + $0xf4] sm:%s214] %v345
              %v347 = vld [vmem:[%s221 + $0x108] sm:%s214]
              %348 = vst [vmem:[%s222 + $0xf8] sm:%s214] %v347
              %v349 = vld [vmem:[%s221 + $0x10c] sm:%s214]
              %350 = vst [vmem:[%s222 + $0xfc] sm:%s214] %v349
              %v351 = vld [vmem:[%s221 + $0x110] sm:%s214]
              %352 = vst [vmem:[%s222 + $0x100] sm:%s214] %v351
              %v353 = vld [vmem:[%s221 + $0x114] sm:%s214]
              %354 = vst [vmem:[%s222 + $0x104] sm:%s214] %v353
              %v355 = vld [vmem:[%s221 + $0x120] sm:%s214]
              %356 = vst [vmem:[%s222 + $0x108] sm:%s214] %v355
              %v357 = vld [vmem:[%s221 + $0x124] sm:%s214]
              %358 = vst [vmem:[%s222 + $0x10c] sm:%s214] %v357
              %v359 = vld [vmem:[%s221 + $0x128] sm:%s214]
              %360 = vst [vmem:[%s222 + $0x110] sm:%s214] %v359
              %v361 = vld [vmem:[%s221 + $0x12c] sm:%s214]
              %362 = vst [vmem:[%s222 + $0x114] sm:%s214] %v361
              %v363 = vld [vmem:[%s221 + $0x130] sm:%s214]
              %364 = vst [vmem:[%s222 + $0x118] sm:%s214] %v363
              %v365 = vld [vmem:[%s221 + $0x134] sm:%s214]
              %366 = vst [vmem:[%s222 + $0x11c] sm:%s214] %v365
              %v367 = vld [vmem:[%s221 + $0x138] sm:%s214]
              %368 = vst [vmem:[%s222 + $0x120] sm:%s214] %v367
              %v369 = vld [vmem:[%s221 + $0x13c] sm:%s214]
              %370 = vst [vmem:[%s222 + $0x124] sm:%s214] %v369
              %v371 = vld [vmem:[%s221 + $0x140] sm:%s214]
              %372 = vst [vmem:[%s222 + $0x128] sm:%s214] %v371
              %v373 = vld [vmem:[%s221 + $0x144] sm:%s214]
              %374 = vst [vmem:[%s222 + $0x12c] sm:%s214] %v373
              %v375 = vld [vmem:[%s221 + $0x148] sm:%s214]
              %376 = vst [vmem:[%s222 + $0x130] sm:%s214] %v375
              %v377 = vld [vmem:[%s221 + $0x14c] sm:%s214]
              %378 = vst [vmem:[%s222 + $0x134] sm:%s214] %v377
              %v379 = vld [vmem:[%s221 + $0x150] sm:%s214]
              %380 = vst [vmem:[%s222 + $0x138] sm:%s214] %v379
              %v381 = vld [vmem:[%s221 + $0x154] sm:%s214]
              %382 = vst [vmem:[%s222 + $0x13c] sm:%s214] %v381
              %v383 = vld [vmem:[%s221 + $0x158] sm:%s214]
              %384 = vst [vmem:[%s222 + $0x140] sm:%s214] %v383
              %v385 = vld [vmem:[%s221 + $0x15c] sm:%s214]
              %386 = vst [vmem:[%s222 + $0x144] sm:%s214] %v385
              %v387 = vld [vmem:[%s221 + $0x160] sm:%s214]
              %388 = vst [vmem:[%s222 + $0x148] sm:%s214] %v387
              %v389 = vld [vmem:[%s221 + $0x164] sm:%s214]
              %390 = vst [vmem:[%s222 + $0x14c] sm:%s214] %v389
              %v391 = vld [vmem:[%s221 + $0x168] sm:%s214]
              %392 = vst [vmem:[%s222 + $0x150] sm:%s214] %v391
              %v393 = vld [vmem:[%s221 + $0x16c] sm:%s214]
              %394 = vst [vmem:[%s222 + $0x154] sm:%s214] %v393
              %v395 = vld [vmem:[%s221 + $0x170] sm:%s214]
              %396 = vst [vmem:[%s222 + $0x158] sm:%s214] %v395
              %v397 = vld [vmem:[%s221 + $0x174] sm:%s214]
              %398 = vst [vmem:[%s222 + $0x15c] sm:%s214] %v397
            $region40: #{forward.6} parent=27 // loop_footer
              %s220 = sadd.s32 1, %s216
            $region41: #{forward.6} parent=27 // loop_footer_branch
              %215 = sbr.rel target = $region37
            $region42: #{forward.6} parent=27 // loop_exit
              _
          $region28: #{forward.6} parent=12 // pred_fallthru
            _
        $region13: #{forward.6} parent=8 // pred_fallthru
          _
        // Predicated region
        $region14: #{forward.6} parent=8 // pred_check
          _
        $region15: #{forward.6} parent=8 // pred_check_branch
          %16 = sbr.rel (0) target = $region17
        $region16: #{forward.6} parent=8 // pred_region
          %s18 = ssub.s32 16, 1
          loop: start=0, step=1, limit=1
          $region18: #{forward.6} parent=16 // loop_pre_header
            _
          $region19: #{forward.6} parent=16 // loop_header
            %s20 = sphi 0, %s24
            %p21 = scmp.ge.s32.totalorder %s20, 1
            %s25 = sphi %s0, %s0
            %s26 = sphi [#allocation2], [#allocation2]
          $region20: #{forward.6} parent=16 // loop_header_branch
            %23 = sbr.rel (%p21) target = $region24
          $region21: #{forward.6} parent=16 // loop_body
            %v27 = vld [vmem:[%s25] sm:%s18]
            %28 = vst [vmem:[%s26] sm:%s18] %v27
            %v29 = vld [vmem:[%s25 + $0x4] sm:%s18]
            %30 = vst [vmem:[%s26 + $0x4] sm:%s18] %v29
            %v31 = vld [vmem:[%s25 + $0x8] sm:%s18]
            %32 = vst [vmem:[%s26 + $0x8] sm:%s18] %v31
            %v33 = vld [vmem:[%s25 + $0xc] sm:%s18]
            %34 = vst [vmem:[%s26 + $0xc] sm:%s18] %v33
            %v35 = vld [vmem:[%s25 + $0x10] sm:%s18]
            %36 = vst [vmem:[%s26 + $0x10] sm:%s18] %v35
            %v37 = vld [vmem:[%s25 + $0x14] sm:%s18]
            %38 = vst [vmem:[%s26 + $0x14] sm:%s18] %v37
            %v39 = vld [vmem:[%s25 + $0x18] sm:%s18]
            %40 = vst [vmem:[%s26 + $0x18] sm:%s18] %v39
            %v41 = vld [vmem:[%s25 + $0x1c] sm:%s18]
            %42 = vst [vmem:[%s26 + $0x1c] sm:%s18] %v41
            %v43 = vld [vmem:[%s25 + $0x20] sm:%s18]
            %44 = vst [vmem:[%s26 + $0x20] sm:%s18] %v43
            %v45 = vld [vmem:[%s25 + $0x24] sm:%s18]
            %46 = vst [vmem:[%s26 + $0x24] sm:%s18] %v45
            %v47 = vld [vmem:[%s25 + $0x28] sm:%s18]
            %48 = vst [vmem:[%s26 + $0x28] sm:%s18] %v47
            %v49 = vld [vmem:[%s25 + $0x2c] sm:%s18]
            %50 = vst [vmem:[%s26 + $0x2c] sm:%s18] %v49
            %v51 = vld [vmem:[%s25 + $0x30] sm:%s18]
            %52 = vst [vmem:[%s26 + $0x30] sm:%s18] %v51
            %v53 = vld [vmem:[%s25 + $0x34] sm:%s18]
            %54 = vst [vmem:[%s26 + $0x34] sm:%s18] %v53
            %v55 = vld [vmem:[%s25 + $0x38] sm:%s18]
            %56 = vst [vmem:[%s26 + $0x38] sm:%s18] %v55
            %v57 = vld [vmem:[%s25 + $0x3c] sm:%s18]
            %58 = vst [vmem:[%s26 + $0x3c] sm:%s18] %v57
            %v59 = vld [vmem:[%s25 + $0x40] sm:%s18]
            %60 = vst [vmem:[%s26 + $0x40] sm:%s18] %v59
            %v61 = vld [vmem:[%s25 + $0x44] sm:%s18]
            %62 = vst [vmem:[%s26 + $0x44] sm:%s18] %v61
            %v63 = vld [vmem:[%s25 + $0x48] sm:%s18]
            %64 = vst [vmem:[%s26 + $0x48] sm:%s18] %v63
            %v65 = vld [vmem:[%s25 + $0x4c] sm:%s18]
            %66 = vst [vmem:[%s26 + $0x4c] sm:%s18] %v65
            %v67 = vld [vmem:[%s25 + $0x50] sm:%s18]
            %68 = vst [vmem:[%s26 + $0x50] sm:%s18] %v67
            %v69 = vld [vmem:[%s25 + $0x54] sm:%s18]
            %70 = vst [vmem:[%s26 + $0x54] sm:%s18] %v69
            %v71 = vld [vmem:[%s25 + $0x60] sm:%s18]
            %72 = vst [vmem:[%s26 + $0x58] sm:%s18] %v71
            %v73 = vld [vmem:[%s25 + $0x64] sm:%s18]
            %74 = vst [vmem:[%s26 + $0x5c] sm:%s18] %v73
            %v75 = vld [vmem:[%s25 + $0x68] sm:%s18]
            %76 = vst [vmem:[%s26 + $0x60] sm:%s18] %v75
            %v77 = vld [vmem:[%s25 + $0x6c] sm:%s18]
            %78 = vst [vmem:[%s26 + $0x64] sm:%s18] %v77
            %v79 = vld [vmem:[%s25 + $0x70] sm:%s18]
            %80 = vst [vmem:[%s26 + $0x68] sm:%s18] %v79
            %v81 = vld [vmem:[%s25 + $0x74] sm:%s18]
            %82 = vst [vmem:[%s26 + $0x6c] sm:%s18] %v81
            %v83 = vld [vmem:[%s25 + $0x78] sm:%s18]
            %84 = vst [vmem:[%s26 + $0x70] sm:%s18] %v83
            %v85 = vld [vmem:[%s25 + $0x7c] sm:%s18]
            %86 = vst [vmem:[%s26 + $0x74] sm:%s18] %v85
            %v87 = vld [vmem:[%s25 + $0x80] sm:%s18]
            %88 = vst [vmem:[%s26 + $0x78] sm:%s18] %v87
            %v89 = vld [vmem:[%s25 + $0x84] sm:%s18]
            %90 = vst [vmem:[%s26 + $0x7c] sm:%s18] %v89
            %v91 = vld [vmem:[%s25 + $0x88] sm:%s18]
            %92 = vst [vmem:[%s26 + $0x80] sm:%s18] %v91
            %v93 = vld [vmem:[%s25 + $0x8c] sm:%s18]
            %94 = vst [vmem:[%s26 + $0x84] sm:%s18] %v93
            %v95 = vld [vmem:[%s25 + $0x90] sm:%s18]
            %96 = vst [vmem:[%s26 + $0x88] sm:%s18] %v95
            %v97 = vld [vmem:[%s25 + $0x94] sm:%s18]
            %98 = vst [vmem:[%s26 + $0x8c] sm:%s18] %v97
            %v99 = vld [vmem:[%s25 + $0x98] sm:%s18]
            %100 = vst [vmem:[%s26 + $0x90] sm:%s18] %v99
            %v101 = vld [vmem:[%s25 + $0x9c] sm:%s18]
            %102 = vst [vmem:[%s26 + $0x94] sm:%s18] %v101
            %v103 = vld [vmem:[%s25 + $0xa0] sm:%s18]
            %104 = vst [vmem:[%s26 + $0x98] sm:%s18] %v103
            %v105 = vld [vmem:[%s25 + $0xa4] sm:%s18]
            %106 = vst [vmem:[%s26 + $0x9c] sm:%s18] %v105
            %v107 = vld [vmem:[%s25 + $0xa8] sm:%s18]
            %108 = vst [vmem:[%s26 + $0xa0] sm:%s18] %v107
            %v109 = vld [vmem:[%s25 + $0xac] sm:%s18]
            %110 = vst [vmem:[%s26 + $0xa4] sm:%s18] %v109
            %v111 = vld [vmem:[%s25 + $0xb0] sm:%s18]
            %112 = vst [vmem:[%s26 + $0xa8] sm:%s18] %v111
            %v113 = vld [vmem:[%s25 + $0xb4] sm:%s18]
            %114 = vst [vmem:[%s26 + $0xac] sm:%s18] %v113
            %v115 = vld [vmem:[%s25 + $0xc0] sm:%s18]
            %116 = vst [vmem:[%s26 + $0xb0] sm:%s18] %v115
            %v117 = vld [vmem:[%s25 + $0xc4] sm:%s18]
            %118 = vst [vmem:[%s26 + $0xb4] sm:%s18] %v117
            %v119 = vld [vmem:[%s25 + $0xc8] sm:%s18]
            %120 = vst [vmem:[%s26 + $0xb8] sm:%s18] %v119
            %v121 = vld [vmem:[%s25 + $0xcc] sm:%s18]
            %122 = vst [vmem:[%s26 + $0xbc] sm:%s18] %v121
            %v123 = vld [vmem:[%s25 + $0xd0] sm:%s18]
            %124 = vst [vmem:[%s26 + $0xc0] sm:%s18] %v123
            %v125 = vld [vmem:[%s25 + $0xd4] sm:%s18]
            %126 = vst [vmem:[%s26 + $0xc4] sm:%s18] %v125
            %v127 = vld [vmem:[%s25 + $0xd8] sm:%s18]
            %128 = vst [vmem:[%s26 + $0xc8] sm:%s18] %v127
            %v129 = vld [vmem:[%s25 + $0xdc] sm:%s18]
            %130 = vst [vmem:[%s26 + $0xcc] sm:%s18] %v129
            %v131 = vld [vmem:[%s25 + $0xe0] sm:%s18]
            %132 = vst [vmem:[%s26 + $0xd0] sm:%s18] %v131
            %v133 = vld [vmem:[%s25 + $0xe4] sm:%s18]
            %134 = vst [vmem:[%s26 + $0xd4] sm:%s18] %v133
            %v135 = vld [vmem:[%s25 + $0xe8] sm:%s18]
            %136 = vst [vmem:[%s26 + $0xd8] sm:%s18] %v135
            %v137 = vld [vmem:[%s25 + $0xec] sm:%s18]
            %138 = vst [vmem:[%s26 + $0xdc] sm:%s18] %v137
            %v139 = vld [vmem:[%s25 + $0xf0] sm:%s18]
            %140 = vst [vmem:[%s26 + $0xe0] sm:%s18] %v139
            %v141 = vld [vmem:[%s25 + $0xf4] sm:%s18]
            %142 = vst [vmem:[%s26 + $0xe4] sm:%s18] %v141
            %v143 = vld [vmem:[%s25 + $0xf8] sm:%s18]
            %144 = vst [vmem:[%s26 + $0xe8] sm:%s18] %v143
            %v145 = vld [vmem:[%s25 + $0xfc] sm:%s18]
            %146 = vst [vmem:[%s26 + $0xec] sm:%s18] %v145
            %v147 = vld [vmem:[%s25 + $0x100] sm:%s18]
            %148 = vst [vmem:[%s26 + $0xf0] sm:%s18] %v147
            %v149 = vld [vmem:[%s25 + $0x104] sm:%s18]
            %150 = vst [vmem:[%s26 + $0xf4] sm:%s18] %v149
            %v151 = vld [vmem:[%s25 + $0x108] sm:%s18]
            %152 = vst [vmem:[%s26 + $0xf8] sm:%s18] %v151
            %v153 = vld [vmem:[%s25 + $0x10c] sm:%s18]
            %154 = vst [vmem:[%s26 + $0xfc] sm:%s18] %v153
            %v155 = vld [vmem:[%s25 + $0x110] sm:%s18]
            %156 = vst [vmem:[%s26 + $0x100] sm:%s18] %v155
            %v157 = vld [vmem:[%s25 + $0x114] sm:%s18]
            %158 = vst [vmem:[%s26 + $0x104] sm:%s18] %v157
            %v159 = vld [vmem:[%s25 + $0x120] sm:%s18]
            %160 = vst [vmem:[%s26 + $0x108] sm:%s18] %v159
            %v161 = vld [vmem:[%s25 + $0x124] sm:%s18]
            %162 = vst [vmem:[%s26 + $0x10c] sm:%s18] %v161
            %v163 = vld [vmem:[%s25 + $0x128] sm:%s18]
            %164 = vst [vmem:[%s26 + $0x110] sm:%s18] %v163
            %v165 = vld [vmem:[%s25 + $0x12c] sm:%s18]
            %166 = vst [vmem:[%s26 + $0x114] sm:%s18] %v165
            %v167 = vld [vmem:[%s25 + $0x130] sm:%s18]
            %168 = vst [vmem:[%s26 + $0x118] sm:%s18] %v167
            %v169 = vld [vmem:[%s25 + $0x134] sm:%s18]
            %170 = vst [vmem:[%s26 + $0x11c] sm:%s18] %v169
            %v171 = vld [vmem:[%s25 + $0x138] sm:%s18]
            %172 = vst [vmem:[%s26 + $0x120] sm:%s18] %v171
            %v173 = vld [vmem:[%s25 + $0x13c] sm:%s18]
            %174 = vst [vmem:[%s26 + $0x124] sm:%s18] %v173
            %v175 = vld [vmem:[%s25 + $0x140] sm:%s18]
            %176 = vst [vmem:[%s26 + $0x128] sm:%s18] %v175
            %v177 = vld [vmem:[%s25 + $0x144] sm:%s18]
            %178 = vst [vmem:[%s26 + $0x12c] sm:%s18] %v177
            %v179 = vld [vmem:[%s25 + $0x148] sm:%s18]
            %180 = vst [vmem:[%s26 + $0x130] sm:%s18] %v179
            %v181 = vld [vmem:[%s25 + $0x14c] sm:%s18]
            %182 = vst [vmem:[%s26 + $0x134] sm:%s18] %v181
            %v183 = vld [vmem:[%s25 + $0x150] sm:%s18]
            %184 = vst [vmem:[%s26 + $0x138] sm:%s18] %v183
            %v185 = vld [vmem:[%s25 + $0x154] sm:%s18]
            %186 = vst [vmem:[%s26 + $0x13c] sm:%s18] %v185
            %v187 = vld [vmem:[%s25 + $0x158] sm:%s18]
            %188 = vst [vmem:[%s26 + $0x140] sm:%s18] %v187
            %v189 = vld [vmem:[%s25 + $0x15c] sm:%s18]
            %190 = vst [vmem:[%s26 + $0x144] sm:%s18] %v189
            %v191 = vld [vmem:[%s25 + $0x160] sm:%s18]
            %192 = vst [vmem:[%s26 + $0x148] sm:%s18] %v191
            %v193 = vld [vmem:[%s25 + $0x164] sm:%s18]
            %194 = vst [vmem:[%s26 + $0x14c] sm:%s18] %v193
            %v195 = vld [vmem:[%s25 + $0x168] sm:%s18]
            %196 = vst [vmem:[%s26 + $0x150] sm:%s18] %v195
            %v197 = vld [vmem:[%s25 + $0x16c] sm:%s18]
            %198 = vst [vmem:[%s26 + $0x154] sm:%s18] %v197
            %v199 = vld [vmem:[%s25 + $0x170] sm:%s18]
            %200 = vst [vmem:[%s26 + $0x158] sm:%s18] %v199
            %v201 = vld [vmem:[%s25 + $0x174] sm:%s18]
            %202 = vst [vmem:[%s26 + $0x15c] sm:%s18] %v201
          $region22: #{forward.6} parent=16 // loop_footer
            %s24 = sadd.s32 1, %s20
          $region23: #{forward.6} parent=16 // loop_footer_branch
            %19 = sbr.rel target = $region19
          $region24: #{forward.6} parent=16 // loop_exit
            _
        $region17: #{forward.6} parent=8 // pred_fallthru
          _
      $region9: #{forward.6} parent=4 // pred_fallthru
        _
      %399 = vnop
    $region5: #{forward.6} parent=1 // pred_fallthru
      _
    // Predicated region
    $region43: #{forward.6} parent=1 // pred_check
      _
    $region44: #{forward.6} parent=1 // pred_check_branch
      %401 = sbr.rel (0) target = $region46
    $region45: #{forward.6} parent=1 // pred_region
      %s402 = sadd.s32 0, 1
      %s403 = smul.u32 %s402, 11
      %s404 = smul.u32 2, %s403
      %s405 = smul.addr %s404, 4
      %s406 = scalar_lea.vmem %s1, %s405
      // Predicated region
      $region47: #{forward.6} parent=45 // pred_check
        _
      $region48: #{forward.6} parent=45 // pred_check_branch
        %408 = sbr.rel (0) target = $region50
      $region49: #{forward.6} parent=45 // pred_region
        // Predicated region
        $region51: #{forward.6} parent=49 // pred_check
          _
        $region52: #{forward.6} parent=49 // pred_check_branch
          %410 = sbr.rel target = $region54
        $region53: #{forward.6} parent=49 // pred_region
          // Predicated region
          $region66: #{forward.6} parent=53 // pred_check
            _
          $region67: #{forward.6} parent=53 // pred_check_branch
            %440 = sbr.rel (0) target = $region69
          $region68: #{forward.6} parent=53 // pred_region
            loop: start=0, step=1, limit=1
            $region70: #{forward.6} parent=68 // loop_pre_header
              _
            $region71: #{forward.6} parent=68 // loop_header
              %s442 = sphi 0, %s446
              %p443 = scmp.ge.s32.totalorder %s442, 1
              %s447 = sphi %s406, %s406
              %s448 = sphi [#allocation3], [#allocation3]
            $region72: #{forward.6} parent=68 // loop_header_branch
              %445 = sbr.rel (%p443) target = $region76
            $region73: #{forward.6} parent=68 // loop_body
              _
            $region74: #{forward.6} parent=68 // loop_footer
              %s446 = sadd.s32 1, %s442
            $region75: #{forward.6} parent=68 // loop_footer_branch
              %441 = sbr.rel target = $region71
            $region76: #{forward.6} parent=68 // loop_exit
              _
            %s450 = ssub.s32 16, 1
            loop: start=0, step=1, limit=1
            $region77: #{forward.6} parent=68 // loop_pre_header
              _
            $region78: #{forward.6} parent=68 // loop_header
              %s452 = sphi 0, %s456
              %p453 = scmp.ge.s32.totalorder %s452, 1
              %s457 = sphi %s406, %s406
              %s458 = sphi [#allocation3], [#allocation3]
            $region79: #{forward.6} parent=68 // loop_header_branch
              %455 = sbr.rel (%p453) target = $region83
            $region80: #{forward.6} parent=68 // loop_body
              %v459 = vld [vmem:[%s457] sm:%s450]
              %460 = vst [vmem:[%s458] sm:%s450] %v459
              %v461 = vld [vmem:[%s457 + $0x4] sm:%s450]
              %462 = vst [vmem:[%s458 + $0x4] sm:%s450] %v461
              %v463 = vld [vmem:[%s457 + $0x60] sm:%s450]
              %464 = vst [vmem:[%s458 + $0x8] sm:%s450] %v463
              %v465 = vld [vmem:[%s457 + $0x64] sm:%s450]
              %466 = vst [vmem:[%s458 + $0xc] sm:%s450] %v465
              %v467 = vld [vmem:[%s457 + $0xc0] sm:%s450]
              %468 = vst [vmem:[%s458 + $0x10] sm:%s450] %v467
              %v469 = vld [vmem:[%s457 + $0xc4] sm:%s450]
              %470 = vst [vmem:[%s458 + $0x14] sm:%s450] %v469
              %v471 = vld [vmem:[%s457 + $0x120] sm:%s450]
              %472 = vst [vmem:[%s458 + $0x18] sm:%s450] %v471
              %v473 = vld [vmem:[%s457 + $0x124] sm:%s450]
              %474 = vst [vmem:[%s458 + $0x1c] sm:%s450] %v473
            $region81: #{forward.6} parent=68 // loop_footer
              %s456 = sadd.s32 1, %s452
            $region82: #{forward.6} parent=68 // loop_footer_branch
              %451 = sbr.rel target = $region78
            $region83: #{forward.6} parent=68 // loop_exit
              _
          $region69: #{forward.6} parent=53 // pred_fallthru
            _
        $region54: #{forward.6} parent=49 // pred_fallthru
          _
        // Predicated region
        $region55: #{forward.6} parent=49 // pred_check
          _
        $region56: #{forward.6} parent=49 // pred_check_branch
          %412 = sbr.rel (0) target = $region58
        $region57: #{forward.6} parent=49 // pred_region
          %s414 = ssub.s32 16, 1
          loop: start=0, step=1, limit=1
          $region59: #{forward.6} parent=57 // loop_pre_header
            _
          $region60: #{forward.6} parent=57 // loop_header
            %s416 = sphi 0, %s420
            %p417 = scmp.ge.s32.totalorder %s416, 1
            %s421 = sphi %s406, %s406
            %s422 = sphi [#allocation3], [#allocation3]
          $region61: #{forward.6} parent=57 // loop_header_branch
            %419 = sbr.rel (%p417) target = $region65
          $region62: #{forward.6} parent=57 // loop_body
            %v423 = vld [vmem:[%s421] sm:%s414]
            %424 = vst [vmem:[%s422] sm:%s414] %v423
            %v425 = vld [vmem:[%s421 + $0x4] sm:%s414]
            %426 = vst [vmem:[%s422 + $0x4] sm:%s414] %v425
            %v427 = vld [vmem:[%s421 + $0x60] sm:%s414]
            %428 = vst [vmem:[%s422 + $0x8] sm:%s414] %v427
            %v429 = vld [vmem:[%s421 + $0x64] sm:%s414]
            %430 = vst [vmem:[%s422 + $0xc] sm:%s414] %v429
            %v431 = vld [vmem:[%s421 + $0xc0] sm:%s414]
            %432 = vst [vmem:[%s422 + $0x10] sm:%s414] %v431
            %v433 = vld [vmem:[%s421 + $0xc4] sm:%s414]
            %434 = vst [vmem:[%s422 + $0x14] sm:%s414] %v433
            %v435 = vld [vmem:[%s421 + $0x120] sm:%s414]
            %436 = vst [vmem:[%s422 + $0x18] sm:%s414] %v435
            %v437 = vld [vmem:[%s421 + $0x124] sm:%s414]
            %438 = vst [vmem:[%s422 + $0x1c] sm:%s414] %v437
          $region63: #{forward.6} parent=57 // loop_footer
            %s420 = sadd.s32 1, %s416
          $region64: #{forward.6} parent=57 // loop_footer_branch
            %415 = sbr.rel target = $region60
          $region65: #{forward.6} parent=57 // loop_exit
            _
        $region58: #{forward.6} parent=49 // pred_fallthru
          _
      $region50: #{forward.6} parent=45 // pred_fallthru
        _
      %475 = vnop
    $region46: #{forward.6} parent=1 // pred_fallthru
      _
    // Predicated region
    $region84: #{forward.6} parent=1 // pred_check
      _
    $region85: #{forward.6} parent=1 // pred_check_branch
      %477 = sbr.rel (0) target = $region87
    $region86: #{forward.6} parent=1 // pred_region
      _
    $region87: #{forward.6} parent=1 // pred_fallthru
      _
    // Predicated region
    $region88: #{forward.6} parent=1 // pred_check
      _
    $region89: #{forward.6} parent=1 // pred_check_branch
      %479 = sbr.rel (0) target = $region91
    $region90: #{forward.6} parent=1 // pred_region
      _
    $region91: #{forward.6} parent=1 // pred_fallthru
      _
    // Predicated region
    $region92: #{forward.6} parent=1 // pred_check
      _
    $region93: #{forward.6} parent=1 // pred_check_branch
      %481 = sbr.rel (0) target = $region95
    $region94: #{forward.6} parent=1 // pred_region
      _
    $region95: #{forward.6} parent=1 // pred_fallthru
      _
    // Predicated region
    $region96: #{forward.6} parent=1 // pred_check
      _
    $region97: #{forward.6} parent=1 // pred_check_branch
      %483 = sbr.rel (0) target = $region99
    $region98: #{forward.6} parent=1 // pred_region
      _
    $region99: #{forward.6} parent=1 // pred_fallthru
      _
    %s484 = sadd.s32 0, 1
    %s485 = smul.u32 %s484, 11
    %s486 = smul.u32 2, %s485
    %v488 = vld [vmem:[#allocation2] sm:$0xf]
    %v489 = vld [vmem:[#allocation2 + $0x4] sm:$0xf]
    %v490 = vld [vmem:[#allocation2 + $0x8] sm:$0xf]
    %v491 = vld [vmem:[#allocation2 + $0xc] sm:$0xf]
    %v492 = vld [vmem:[#allocation2 + $0x10] sm:$0xf]
    %v493 = vld [vmem:[#allocation2 + $0x14] sm:$0xf]
    %v494 = vld [vmem:[#allocation2 + $0x18] sm:$0xf]
    %v495 = vld [vmem:[#allocation2 + $0x1c] sm:$0xf]
    %v496 = vld [vmem:[#allocation2 + $0x20] sm:$0xf]
    %v497 = vld [vmem:[#allocation2 + $0x24] sm:$0xf]
    %v498 = vld [vmem:[#allocation2 + $0x28] sm:$0xf]
    %v499 = vld [vmem:[#allocation2 + $0x2c] sm:$0xf]
    %v500 = vld [vmem:[#allocation2 + $0x30] sm:$0xf]
    %v501 = vld [vmem:[#allocation2 + $0x34] sm:$0xf]
    %v502 = vld [vmem:[#allocation2 + $0x38] sm:$0xf]
    %v503 = vld [vmem:[#allocation2 + $0x3c] sm:$0xf]
    %v504 = vld [vmem:[#allocation2 + $0x40] sm:$0xf]
    %v505 = vld [vmem:[#allocation2 + $0x44] sm:$0xf]
    %v506 = vld [vmem:[#allocation2 + $0x48] sm:$0xf]
    %v507 = vld [vmem:[#allocation2 + $0x4c] sm:$0xf]
    %v508 = vld [vmem:[#allocation2 + $0x50] sm:$0xf]
    %v509 = vld [vmem:[#allocation2 + $0x54] sm:$0xf]
    %v510 = vld [vmem:[#allocation2 + $0x58] sm:$0xf]
    %v511 = vld [vmem:[#allocation2 + $0x5c] sm:$0xf]
    %v512 = vld [vmem:[#allocation2 + $0x60] sm:$0xf]
    %v513 = vld [vmem:[#allocation2 + $0x64] sm:$0xf]
    %v514 = vld [vmem:[#allocation2 + $0x68] sm:$0xf]
    %v515 = vld [vmem:[#allocation2 + $0x6c] sm:$0xf]
    %v516 = vld [vmem:[#allocation2 + $0x70] sm:$0xf]
    %v517 = vld [vmem:[#allocation2 + $0x74] sm:$0xf]
    %v518 = vld [vmem:[#allocation2 + $0x78] sm:$0xf]
    %v519 = vld [vmem:[#allocation2 + $0x7c] sm:$0xf]
    %v520 = vld [vmem:[#allocation2 + $0x80] sm:$0xf]
    %v521 = vld [vmem:[#allocation2 + $0x84] sm:$0xf]
    %v522 = vld [vmem:[#allocation2 + $0x88] sm:$0xf]
    %v523 = vld [vmem:[#allocation2 + $0x8c] sm:$0xf]
    %v524 = vld [vmem:[#allocation2 + $0x90] sm:$0xf]
    %v525 = vld [vmem:[#allocation2 + $0x94] sm:$0xf]
    %v526 = vld [vmem:[#allocation2 + $0x98] sm:$0xf]
    %v527 = vld [vmem:[#allocation2 + $0x9c] sm:$0xf]
    %v528 = vld [vmem:[#allocation2 + $0xa0] sm:$0xf]
    %v529 = vld [vmem:[#allocation2 + $0xa4] sm:$0xf]
    %v530 = vld [vmem:[#allocation2 + $0xa8] sm:$0xf]
    %v531 = vld [vmem:[#allocation2 + $0xac] sm:$0xf]
    %v532 = vld [vmem:[#allocation2 + $0xb0] sm:$0xf]
    %v533 = vld [vmem:[#allocation2 + $0xb4] sm:$0xf]
    %v534 = vld [vmem:[#allocation2 + $0xb8] sm:$0xf]
    %v535 = vld [vmem:[#allocation2 + $0xbc] sm:$0xf]
    %v536 = vld [vmem:[#allocation2 + $0xc0] sm:$0xf]
    %v537 = vld [vmem:[#allocation2 + $0xc4] sm:$0xf]
    %v538 = vld [vmem:[#allocation2 + $0xc8] sm:$0xf]
    %v539 = vld [vmem:[#allocation2 + $0xcc] sm:$0xf]
    %v540 = vld [vmem:[#allocation2 + $0xd0] sm:$0xf]
    %v541 = vld [vmem:[#allocation2 + $0xd4] sm:$0xf]
    %v542 = vld [vmem:[#allocation2 + $0xd8] sm:$0xf]
    %v543 = vld [vmem:[#allocation2 + $0xdc] sm:$0xf]
    %v544 = vld [vmem:[#allocation2 + $0xe0] sm:$0xf]
    %v545 = vld [vmem:[#allocation2 + $0xe4] sm:$0xf]
    %v546 = vld [vmem:[#allocation2 + $0xe8] sm:$0xf]
    %v547 = vld [vmem:[#allocation2 + $0xec] sm:$0xf]
    %v548 = vld [vmem:[#allocation2 + $0xf0] sm:$0xf]
    %v549 = vld [vmem:[#allocation2 + $0xf4] sm:$0xf]
    %v550 = vld [vmem:[#allocation2 + $0xf8] sm:$0xf]
    %v551 = vld [vmem:[#allocation2 + $0xfc] sm:$0xf]
    %v552 = vld [vmem:[#allocation2 + $0x100] sm:$0xf]
    %v553 = vld [vmem:[#allocation2 + $0x104] sm:$0xf]
    %v554 = vld [vmem:[#allocation2 + $0x108] sm:$0xf]
    %v555 = vld [vmem:[#allocation2 + $0x10c] sm:$0xf]
    %v556 = vld [vmem:[#allocation2 + $0x110] sm:$0xf]
    %v557 = vld [vmem:[#allocation2 + $0x114] sm:$0xf]
    %v558 = vld [vmem:[#allocation2 + $0x118] sm:$0xf]
    %v559 = vld [vmem:[#allocation2 + $0x11c] sm:$0xf]
    %v560 = vld [vmem:[#allocation2 + $0x120] sm:$0xf]
    %v561 = vld [vmem:[#allocation2 + $0x124] sm:$0xf]
    %v562 = vld [vmem:[#allocation2 + $0x128] sm:$0xf]
    %v563 = vld [vmem:[#allocation2 + $0x12c] sm:$0xf]
    %v564 = vld [vmem:[#allocation2 + $0x130] sm:$0xf]
    %v565 = vld [vmem:[#allocation2 + $0x134] sm:$0xf]
    %v566 = vld [vmem:[#allocation2 + $0x138] sm:$0xf]
    %v567 = vld [vmem:[#allocation2 + $0x13c] sm:$0xf]
    %v568 = vld [vmem:[#allocation2 + $0x140] sm:$0xf]
    %v569 = vld [vmem:[#allocation2 + $0x144] sm:$0xf]
    %v570 = vld [vmem:[#allocation2 + $0x148] sm:$0xf]
    %v571 = vld [vmem:[#allocation2 + $0x14c] sm:$0xf]
    %v572 = vld [vmem:[#allocation2 + $0x150] sm:$0xf]
    %v573 = vld [vmem:[#allocation2 + $0x154] sm:$0xf]
    %v574 = vld [vmem:[#allocation2 + $0x158] sm:$0xf]
    %v575 = vld [vmem:[#allocation2 + $0x15c] sm:$0xf]
    %v576 = vld [vmem:[#allocation3] sm:$0xf]
    %v577 = vld [vmem:[#allocation3 + $0x4] sm:$0xf]
    %v578 = vld [vmem:[#allocation3 + $0x8] sm:$0xf]
    %v579 = vld [vmem:[#allocation3 + $0xc] sm:$0xf]
    %v580 = vld [vmem:[#allocation3 + $0x10] sm:$0xf]
    %v581 = vld [vmem:[#allocation3 + $0x14] sm:$0xf]
    %v670 = vunpack.c.l.b16 %v488
    %v671 = vunpack.c.l.b16 %v489
    %v672 = vunpack.c.l.b16 %v490
    %v673 = vunpack.c.l.b16 %v491
    %v674 = vunpack.c.l.b16 %v492
    %v675 = vunpack.c.l.b16 %v493
    %v676 = vunpack.c.l.b16 %v494
    %v677 = vunpack.c.l.b16 %v495
    %v678 = vunpack.c.l.b16 %v496
    %v679 = vunpack.c.l.b16 %v497
    %v680 = vunpack.c.l.b16 %v498
    %v681 = vunpack.c.l.b16 %v499
    %v682 = vunpack.c.l.b16 %v500
    %v683 = vunpack.c.l.b16 %v501
    %v684 = vunpack.c.l.b16 %v502
    %v685 = vunpack.c.l.b16 %v503
    %v686 = vunpack.c.l.b16 %v504
    %v687 = vunpack.c.l.b16 %v505
    %v688 = vunpack.c.l.b16 %v506
    %v689 = vunpack.c.l.b16 %v507
    %v690 = vunpack.c.l.b16 %v508
    %v691 = vunpack.c.l.b16 %v509
    %v692 = vunpack.c.l.b16 %v510
    %v693 = vunpack.c.l.b16 %v511
    %v694 = vunpack.c.l.b16 %v512
    %v695 = vunpack.c.l.b16 %v513
    %v696 = vunpack.c.l.b16 %v514
    %v697 = vunpack.c.l.b16 %v515
    %v698 = vunpack.c.l.b16 %v516
    %v699 = vunpack.c.l.b16 %v517
    %v700 = vunpack.c.l.b16 %v518
    %v701 = vunpack.c.l.b16 %v519
    %v702 = vunpack.c.l.b16 %v520
    %v703 = vunpack.c.l.b16 %v521
    %v704 = vunpack.c.l.b16 %v522
    %v705 = vunpack.c.l.b16 %v523
    %v706 = vunpack.c.l.b16 %v524
    %v707 = vunpack.c.l.b16 %v525
    %v708 = vunpack.c.l.b16 %v526
    %v709 = vunpack.c.l.b16 %v527
    %v710 = vunpack.c.l.b16 %v528
    %v711 = vunpack.c.l.b16 %v529
    %v712 = vunpack.c.l.b16 %v530
    %v713 = vunpack.c.l.b16 %v531
    %v714 = vunpack.c.l.b16 %v532
    %v715 = vunpack.c.l.b16 %v533
    %v716 = vunpack.c.l.b16 %v534
    %v717 = vunpack.c.l.b16 %v535
    %v718 = vunpack.c.l.b16 %v536
    %v719 = vunpack.c.l.b16 %v537
    %v720 = vunpack.c.l.b16 %v538
    %v721 = vunpack.c.l.b16 %v539
    %v722 = vunpack.c.l.b16 %v540
    %v723 = vunpack.c.l.b16 %v541
    %v724 = vunpack.c.l.b16 %v542
    %v725 = vunpack.c.l.b16 %v543
    %v726 = vunpack.c.l.b16 %v544
    %v727 = vunpack.c.l.b16 %v545
    %v728 = vunpack.c.l.b16 %v546
    %v729 = vunpack.c.l.b16 %v547
    %v730 = vunpack.c.l.b16 %v548
    %v731 = vunpack.c.l.b16 %v549
    %v732 = vunpack.c.l.b16 %v550
    %v733 = vunpack.c.l.b16 %v551
    %v734 = vunpack.c.l.b16 %v552
    %v735 = vunpack.c.l.b16 %v553
    %v736 = vunpack.c.l.b16 %v554
    %v737 = vunpack.c.l.b16 %v555
    %v738 = vunpack.c.l.b16 %v556
    %v739 = vunpack.c.l.b16 %v557
    %v740 = vunpack.c.l.b16 %v558
    %v741 = vunpack.c.l.b16 %v559
    %v742 = vunpack.c.l.b16 %v560
    %v743 = vunpack.c.l.b16 %v561
    %v744 = vunpack.c.l.b16 %v562
    %v745 = vunpack.c.l.b16 %v563
    %v746 = vunpack.c.l.b16 %v564
    %v747 = vunpack.c.l.b16 %v565
    %v748 = vunpack.c.l.b16 %v566
    %v749 = vunpack.c.l.b16 %v567
    %v750 = vunpack.c.l.b16 %v568
    %v751 = vunpack.c.l.b16 %v569
    %v752 = vunpack.c.l.b16 %v570
    %v753 = vunpack.c.l.b16 %v571
    %v754 = vunpack.c.l.b16 %v572
    %v755 = vunpack.c.l.b16 %v573
    %v756 = vunpack.c.l.b16 %v574
    %v757 = vunpack.c.l.b16 %v575
    %v758 = vpack.c.b16 %v671, %v670
    %v759 = vpack.c.b16 %v673, %v672
    %v760 = vpack.c.b16 %v675, %v674
    %v761 = vpack.c.b16 %v677, %v676
    %v762 = vpack.c.b16 %v679, %v678
    %v763 = vpack.c.b16 %v681, %v680
    %v764 = vpack.c.b16 %v683, %v682
    %v765 = vpack.c.b16 %v685, %v684
    %v766 = vpack.c.b16 %v687, %v686
    %v767 = vpack.c.b16 %v689, %v688
    %v768 = vpack.c.b16 %v691, %v690
    %v769 = vpack.c.b16 %v693, %v692
    %v770 = vpack.c.b16 %v695, %v694
    %v771 = vpack.c.b16 %v697, %v696
    %v772 = vpack.c.b16 %v699, %v698
    %v773 = vpack.c.b16 %v701, %v700
    %v774 = vpack.c.b16 %v703, %v702
    %v775 = vpack.c.b16 %v705, %v704
    %v776 = vpack.c.b16 %v707, %v706
    %v777 = vpack.c.b16 %v709, %v708
    %v778 = vpack.c.b16 %v711, %v710
    %v779 = vpack.c.b16 %v713, %v712
    %v780 = vpack.c.b16 %v715, %v714
    %v781 = vpack.c.b16 %v717, %v716
    %v782 = vpack.c.b16 %v719, %v718
    %v783 = vpack.c.b16 %v721, %v720
    %v784 = vpack.c.b16 %v723, %v722
    %v785 = vpack.c.b16 %v725, %v724
    %v786 = vpack.c.b16 %v727, %v726
    %v787 = vpack.c.b16 %v729, %v728
    %v788 = vpack.c.b16 %v731, %v730
    %v789 = vpack.c.b16 %v733, %v732
    %v790 = vpack.c.b16 %v735, %v734
    %v791 = vpack.c.b16 %v737, %v736
    %v792 = vpack.c.b16 %v739, %v738
    %v793 = vpack.c.b16 %v741, %v740
    %v794 = vpack.c.b16 %v743, %v742
    %v795 = vpack.c.b16 %v745, %v744
    %v796 = vpack.c.b16 %v747, %v746
    %v797 = vpack.c.b16 %v749, %v748
    %v798 = vpack.c.b16 %v751, %v750
    %v799 = vpack.c.b16 %v753, %v752
    %v800 = vpack.c.b16 %v755, %v754
    %v801 = vpack.c.b16 %v757, %v756
    %v808 = vunpack.c.l.b16 %v576
    %v809 = vunpack.c.l.b16 %v577
    %v810 = vunpack.c.l.b16 %v578
    %v811 = vunpack.c.l.b16 %v579
    %v812 = vunpack.c.l.b16 %v580
    %v813 = vunpack.c.l.b16 %v581
    %v814 = vpack.c.b16 %v809, %v808
    %v815 = vpack.c.b16 %v811, %v810
    %v816 = vpack.c.b16 %v813, %v812
    %817 = vrot.lane.b32.xlu0 %v769, 3
    %v818 = vpop.permute.xlu0 %817
    %819 = vrot.lane.b32.xlu0 %v770, 3
    %v820 = vpop.permute.xlu0 %819
    %821 = vrot.lane.b32.xlu0 %v771, 3
    %v822 = vpop.permute.xlu0 %821
    %823 = vrot.lane.b32.xlu0 %v772, 3
    %v824 = vpop.permute.xlu0 %823
    %825 = vrot.lane.b32.xlu0 %v773, 3
    %v826 = vpop.permute.xlu0 %825
    %827 = vrot.lane.b32.xlu0 %v774, 3
    %v828 = vpop.permute.xlu0 %827
    %829 = vrot.lane.b32.xlu0 %v775, 3
    %v830 = vpop.permute.xlu0 %829
    %831 = vrot.lane.b32.xlu0 %v776, 3
    %v832 = vpop.permute.xlu0 %831
    %833 = vrot.lane.b32.xlu0 %v777, 3
    %v834 = vpop.permute.xlu0 %833
    %835 = vrot.lane.b32.xlu0 %v778, 3
    %v836 = vpop.permute.xlu0 %835
    %837 = vrot.lane.b32.xlu0 %v779, 3
    %v838 = vpop.permute.xlu0 %837
    %vm839 = vsmask.f32 7424
    %v841 = vshrl.u32 %v758, 16
    %v843 = vshll.u32 %v758, 16
    %v845 = vrot.slane %v843, 1
    %v846 = vor.u32 %v841, %v845
    %v848 = vshll.u32 %v759, 16
    %v850 = vrot.slane %v848, 1
    %v851 = vsel %vm839, %v846, %v850
    %v852 = vshrl.u32 %v759, 16
    %v854 = vor.u32 %v852, %v850
    %v856 = vshll.u32 %v760, 16
    %v858 = vrot.slane %v856, 1
    %v859 = vsel %vm839, %v854, %v858
    %v860 = vshrl.u32 %v760, 16
    %v862 = vor.u32 %v860, %v858
    %v864 = vshll.u32 %v761, 16
    %v866 = vrot.slane %v864, 1
    %v867 = vsel %vm839, %v862, %v866
    %v868 = vshrl.u32 %v761, 16
    %v870 = vor.u32 %v868, %v866
    %v872 = vshll.u32 %v762, 16
    %v874 = vrot.slane %v872, 1
    %v875 = vsel %vm839, %v870, %v874
    %v876 = vshrl.u32 %v762, 16
    %v878 = vor.u32 %v876, %v874
    %v880 = vshll.u32 %v763, 16
    %v882 = vrot.slane %v880, 1
    %v883 = vsel %vm839, %v878, %v882
    %v884 = vshrl.u32 %v763, 16
    %v886 = vor.u32 %v884, %v882
    %v888 = vshll.u32 %v764, 16
    %v890 = vrot.slane %v888, 1
    %v891 = vsel %vm839, %v886, %v890
    %v892 = vshrl.u32 %v764, 16
    %v894 = vor.u32 %v892, %v890
    %v896 = vshll.u32 %v765, 16
    %v898 = vrot.slane %v896, 1
    %v899 = vsel %vm839, %v894, %v898
    %v900 = vshrl.u32 %v765, 16
    %v902 = vor.u32 %v900, %v898
    %v904 = vshll.u32 %v766, 16
    %v906 = vrot.slane %v904, 1
    %v907 = vsel %vm839, %v902, %v906
    %v908 = vshrl.u32 %v766, 16
    %v910 = vor.u32 %v908, %v906
    %v912 = vshll.u32 %v767, 16
    %v914 = vrot.slane %v912, 1
    %v915 = vsel %vm839, %v910, %v914
    %v916 = vshrl.u32 %v767, 16
    %v918 = vor.u32 %v916, %v914
    %v920 = vshll.u32 %v768, 16
    %v922 = vrot.slane %v920, 1
    %v923 = vsel %vm839, %v918, %v922
    %v924 = vshrl.u32 %v768, 16
    %v926 = vor.u32 %v924, %v922
    %v928 = vshll.u32 %v814, 16
    %v930 = vrot.slane %v928, 1
    %v931 = vsel %vm839, %v926, %v930
    %932 = vrot.lane.b32.xlu0 %v851, 6
    %v933 = vpop.permute.xlu0 %932
    %934 = vrot.lane.b32.xlu0 %v859, 6
    %v935 = vpop.permute.xlu0 %934
    %936 = vrot.lane.b32.xlu0 %v867, 6
    %v937 = vpop.permute.xlu0 %936
    %938 = vrot.lane.b32.xlu0 %v875, 6
    %v939 = vpop.permute.xlu0 %938
    %940 = vrot.lane.b32.xlu0 %v883, 6
    %v941 = vpop.permute.xlu0 %940
    %942 = vrot.lane.b32.xlu0 %v891, 6
    %v943 = vpop.permute.xlu0 %942
    %944 = vrot.lane.b32.xlu0 %v899, 6
    %v945 = vpop.permute.xlu0 %944
    %946 = vrot.lane.b32.xlu0 %v907, 6
    %v947 = vpop.permute.xlu0 %946
    %948 = vrot.lane.b32.xlu0 %v915, 6
    %v949 = vpop.permute.xlu0 %948
    %950 = vrot.lane.b32.xlu0 %v923, 6
    %v951 = vpop.permute.xlu0 %950
    %952 = vrot.lane.b32.xlu0 %v931, 6
    %v953 = vpop.permute.xlu0 %952
    %954 = vrot.lane.b32.xlu0 %v780, 9
    %v955 = vpop.permute.xlu0 %954
    %956 = vrot.lane.b32.xlu0 %v781, 9
    %v957 = vpop.permute.xlu0 %956
    %958 = vrot.lane.b32.xlu0 %v782, 9
    %v959 = vpop.permute.xlu0 %958
    %960 = vrot.lane.b32.xlu0 %v783, 9
    %v961 = vpop.permute.xlu0 %960
    %962 = vrot.lane.b32.xlu0 %v784, 9
    %v963 = vpop.permute.xlu0 %962
    %964 = vrot.lane.b32.xlu0 %v785, 9
    %v965 = vpop.permute.xlu0 %964
    %966 = vrot.lane.b32.xlu0 %v786, 9
    %v967 = vpop.permute.xlu0 %966
    %968 = vrot.lane.b32.xlu0 %v787, 9
    %v969 = vpop.permute.xlu0 %968
    %970 = vrot.lane.b32.xlu0 %v788, 9
    %v971 = vpop.permute.xlu0 %970
    %972 = vrot.lane.b32.xlu0 %v789, 9
    %v973 = vpop.permute.xlu0 %972
    %974 = vrot.lane.b32.xlu0 %v790, 9
    %v975 = vpop.permute.xlu0 %974
    %976 = vrot.lane.b32.xlu0 %v791, 12
    %v977 = vpop.permute.xlu0 %976
    %978 = vrot.lane.b32.xlu0 %v792, 12
    %v979 = vpop.permute.xlu0 %978
    %980 = vrot.lane.b32.xlu0 %v793, 12
    %v981 = vpop.permute.xlu0 %980
    %982 = vrot.lane.b32.xlu0 %v794, 12
    %v983 = vpop.permute.xlu0 %982
    %984 = vrot.lane.b32.xlu0 %v795, 12
    %v985 = vpop.permute.xlu0 %984
    %986 = vrot.lane.b32.xlu0 %v796, 12
    %v987 = vpop.permute.xlu0 %986
    %988 = vrot.lane.b32.xlu0 %v797, 12
    %v989 = vpop.permute.xlu0 %988
    %990 = vrot.lane.b32.xlu0 %v798, 12
    %v991 = vpop.permute.xlu0 %990
    %992 = vrot.lane.b32.xlu0 %v799, 12
    %v993 = vpop.permute.xlu0 %992
    %994 = vrot.lane.b32.xlu0 %v800, 12
    %v995 = vpop.permute.xlu0 %994
    %996 = vrot.lane.b32.xlu0 %v801, 12
    %v997 = vpop.permute.xlu0 %996
    %v999 = vshrl.u32 %v780, 16
    %v1001 = vshll.u32 %v780, 16
    %v1003 = vrot.slane %v1001, 1
    %v1004 = vor.u32 %v999, %v1003
    %v1006 = vshll.u32 %v781, 16
    %v1008 = vrot.slane %v1006, 1
    %v1009 = vsel %vm839, %v1004, %v1008
    %v1010 = vshrl.u32 %v781, 16
    %v1012 = vor.u32 %v1010, %v1008
    %v1014 = vshll.u32 %v782, 16
    %v1016 = vrot.slane %v1014, 1
    %v1017 = vsel %vm839, %v1012, %v1016
    %v1018 = vshrl.u32 %v782, 16
    %v1020 = vor.u32 %v1018, %v1016
    %v1022 = vshll.u32 %v783, 16
    %v1024 = vrot.slane %v1022, 1
    %v1025 = vsel %vm839, %v1020, %v1024
    %v1026 = vshrl.u32 %v783, 16
    %v1028 = vor.u32 %v1026, %v1024
    %v1030 = vshll.u32 %v784, 16
    %v1032 = vrot.slane %v1030, 1
    %v1033 = vsel %vm839, %v1028, %v1032
    %v1034 = vshrl.u32 %v784, 16
    %v1036 = vor.u32 %v1034, %v1032
    %v1038 = vshll.u32 %v785, 16
    %v1040 = vrot.slane %v1038, 1
    %v1041 = vsel %vm839, %v1036, %v1040
    %v1042 = vshrl.u32 %v785, 16
    %v1044 = vor.u32 %v1042, %v1040
    %v1046 = vshll.u32 %v786, 16
    %v1048 = vrot.slane %v1046, 1
    %v1049 = vsel %vm839, %v1044, %v1048
    %v1050 = vshrl.u32 %v786, 16
    %v1052 = vor.u32 %v1050, %v1048
    %v1054 = vshll.u32 %v787, 16
    %v1056 = vrot.slane %v1054, 1
    %v1057 = vsel %vm839, %v1052, %v1056
    %v1058 = vshrl.u32 %v787, 16
    %v1060 = vor.u32 %v1058, %v1056
    %v1062 = vshll.u32 %v788, 16
    %v1064 = vrot.slane %v1062, 1
    %v1065 = vsel %vm839, %v1060, %v1064
    %v1066 = vshrl.u32 %v788, 16
    %v1068 = vor.u32 %v1066, %v1064
    %v1070 = vshll.u32 %v789, 16
    %v1072 = vrot.slane %v1070, 1
    %v1073 = vsel %vm839, %v1068, %v1072
    %v1074 = vshrl.u32 %v789, 16
    %v1076 = vor.u32 %v1074, %v1072
    %v1078 = vshll.u32 %v790, 16
    %v1080 = vrot.slane %v1078, 1
    %v1081 = vsel %vm839, %v1076, %v1080
    %v1082 = vshrl.u32 %v790, 16
    %v1084 = vor.u32 %v1082, %v1080
    %v1086 = vshll.u32 %v816, 16
    %v1088 = vrot.slane %v1086, 1
    %v1089 = vsel %vm839, %v1084, %v1088
    %1090 = vrot.lane.b32.xlu0 %v1009, 15
    %v1091 = vpop.permute.xlu0 %1090
    %1092 = vrot.lane.b32.xlu0 %v1017, 15
    %v1093 = vpop.permute.xlu0 %1092
    %1094 = vrot.lane.b32.xlu0 %v1025, 15
    %v1095 = vpop.permute.xlu0 %1094
    %1096 = vrot.lane.b32.xlu0 %v1033, 15
    %v1097 = vpop.permute.xlu0 %1096
    %1098 = vrot.lane.b32.xlu0 %v1041, 15
    %v1099 = vpop.permute.xlu0 %1098
    %1100 = vrot.lane.b32.xlu0 %v1049, 15
    %v1101 = vpop.permute.xlu0 %1100
    %1102 = vrot.lane.b32.xlu0 %v1057, 15
    %v1103 = vpop.permute.xlu0 %1102
    %1104 = vrot.lane.b32.xlu0 %v1065, 15
    %v1105 = vpop.permute.xlu0 %1104
    %1106 = vrot.lane.b32.xlu0 %v1073, 15
    %v1107 = vpop.permute.xlu0 %1106
    %1108 = vrot.lane.b32.xlu0 %v1081, 15
    %v1109 = vpop.permute.xlu0 %1108
    %1110 = vrot.lane.b32.xlu0 %v1089, 15
    %v1111 = vpop.permute.xlu0 %1110
    %vm1112 = vsmask.f32 3328
    %v1113 = vrot.slane %v841, 4
    %v1114 = vrot.slane %v843, 5
    %v1115 = vor.u32 %v1113, %v1114
    %v1116 = vrot.slane %v852, 4
    %v1117 = vrot.slane %v848, 5
    %v1118 = vor.u32 %v1116, %v1117
    %v1119 = vsel %vm1112, %v1115, %v1118
    %v1120 = vrot.slane %v860, 4
    %v1121 = vrot.slane %v856, 5
    %v1122 = vor.u32 %v1120, %v1121
    %v1123 = vsel %vm1112, %v1118, %v1122
    %v1124 = vrot.slane %v868, 4
    %v1125 = vrot.slane %v864, 5
    %v1126 = vor.u32 %v1124, %v1125
    %v1127 = vsel %vm1112, %v1122, %v1126
    %v1128 = vrot.slane %v876, 4
    %v1129 = vrot.slane %v872, 5
    %v1130 = vor.u32 %v1128, %v1129
    %v1131 = vsel %vm1112, %v1126, %v1130
    %v1132 = vrot.slane %v884, 4
    %v1133 = vrot.slane %v880, 5
    %v1134 = vor.u32 %v1132, %v1133
    %v1135 = vsel %vm1112, %v1130, %v1134
    %v1136 = vrot.slane %v892, 4
    %v1137 = vrot.slane %v888, 5
    %v1138 = vor.u32 %v1136, %v1137
    %v1139 = vsel %vm1112, %v1134, %v1138
    %v1140 = vrot.slane %v900, 4
    %v1141 = vrot.slane %v896, 5
    %v1142 = vor.u32 %v1140, %v1141
    %v1143 = vsel %vm1112, %v1138, %v1142
    %v1144 = vrot.slane %v908, 4
    %v1145 = vrot.slane %v904, 5
    %v1146 = vor.u32 %v1144, %v1145
    %v1147 = vsel %vm1112, %v1142, %v1146
    %v1148 = vrot.slane %v916, 4
    %v1149 = vrot.slane %v912, 5
    %v1150 = vor.u32 %v1148, %v1149
    %v1151 = vsel %vm1112, %v1146, %v1150
    %v1152 = vrot.slane %v924, 4
    %v1153 = vrot.slane %v920, 5
    %v1154 = vor.u32 %v1152, %v1153
    %v1155 = vsel %vm1112, %v1150, %v1154
    %v1156 = vshrl.u32 %v814, 16
    %v1158 = vrot.slane %v1156, 4
    %v1159 = vrot.slane %v928, 5
    %v1160 = vor.u32 %v1158, %v1159
    %v1161 = vsel %vm1112, %v1154, %v1160
    %1162 = vrot.lane.b32.xlu0 %v1119, 18
    %v1163 = vpop.permute.xlu0 %1162
    %1164 = vrot.lane.b32.xlu0 %v1123, 18
    %v1165 = vpop.permute.xlu0 %1164
    %1166 = vrot.lane.b32.xlu0 %v1127, 18
    %v1167 = vpop.permute.xlu0 %1166
    %1168 = vrot.lane.b32.xlu0 %v1131, 18
    %v1169 = vpop.permute.xlu0 %1168
    %1170 = vrot.lane.b32.xlu0 %v1135, 18
    %v1171 = vpop.permute.xlu0 %1170
    %1172 = vrot.lane.b32.xlu0 %v1139, 18
    %v1173 = vpop.permute.xlu0 %1172
    %1174 = vrot.lane.b32.xlu0 %v1143, 18
    %v1175 = vpop.permute.xlu0 %1174
    %1176 = vrot.lane.b32.xlu0 %v1147, 18
    %v1177 = vpop.permute.xlu0 %1176
    %1178 = vrot.lane.b32.xlu0 %v1151, 18
    %v1179 = vpop.permute.xlu0 %1178
    %1180 = vrot.lane.b32.xlu0 %v1155, 18
    %v1181 = vpop.permute.xlu0 %1180
    %1182 = vrot.lane.b32.xlu0 %v1161, 18
    %v1183 = vpop.permute.xlu0 %1182
    %v1185 = vshrl.u32 %v769, 16
    %v1187 = vrot.slane %v1185, 4
    %v1188 = vshll.u32 %v769, 16
    %v1190 = vrot.slane %v1188, 5
    %v1191 = vor.u32 %v1187, %v1190
    %v1193 = vshrl.u32 %v770, 16
    %v1195 = vrot.slane %v1193, 4
    %v1196 = vshll.u32 %v770, 16
    %v1198 = vrot.slane %v1196, 5
    %v1199 = vor.u32 %v1195, %v1198
    %v1200 = vsel %vm1112, %v1191, %v1199
    %v1202 = vshrl.u32 %v771, 16
    %v1204 = vrot.slane %v1202, 4
    %v1205 = vshll.u32 %v771, 16
    %v1207 = vrot.slane %v1205, 5
    %v1208 = vor.u32 %v1204, %v1207
    %v1209 = vsel %vm1112, %v1199, %v1208
    %v1211 = vshrl.u32 %v772, 16
    %v1213 = vrot.slane %v1211, 4
    %v1214 = vshll.u32 %v772, 16
    %v1216 = vrot.slane %v1214, 5
    %v1217 = vor.u32 %v1213, %v1216
    %v1218 = vsel %vm1112, %v1208, %v1217
    %v1220 = vshrl.u32 %v773, 16
    %v1222 = vrot.slane %v1220, 4
    %v1223 = vshll.u32 %v773, 16
    %v1225 = vrot.slane %v1223, 5
    %v1226 = vor.u32 %v1222, %v1225
    %v1227 = vsel %vm1112, %v1217, %v1226
    %v1229 = vshrl.u32 %v774, 16
    %v1231 = vrot.slane %v1229, 4
    %v1232 = vshll.u32 %v774, 16
    %v1234 = vrot.slane %v1232, 5
    %v1235 = vor.u32 %v1231, %v1234
    %v1236 = vsel %vm1112, %v1226, %v1235
    %v1238 = vshrl.u32 %v775, 16
    %v1240 = vrot.slane %v1238, 4
    %v1241 = vshll.u32 %v775, 16
    %v1243 = vrot.slane %v1241, 5
    %v1244 = vor.u32 %v1240, %v1243
    %v1245 = vsel %vm1112, %v1235, %v1244
    %v1247 = vshrl.u32 %v776, 16
    %v1249 = vrot.slane %v1247, 4
    %v1250 = vshll.u32 %v776, 16
    %v1252 = vrot.slane %v1250, 5
    %v1253 = vor.u32 %v1249, %v1252
    %v1254 = vsel %vm1112, %v1244, %v1253
    %v1256 = vshrl.u32 %v777, 16
    %v1258 = vrot.slane %v1256, 4
    %v1259 = vshll.u32 %v777, 16
    %v1261 = vrot.slane %v1259, 5
    %v1262 = vor.u32 %v1258, %v1261
    %v1263 = vsel %vm1112, %v1253, %v1262
    %v1265 = vshrl.u32 %v778, 16
    %v1267 = vrot.slane %v1265, 4
    %v1268 = vshll.u32 %v778, 16
    %v1270 = vrot.slane %v1268, 5
    %v1271 = vor.u32 %v1267, %v1270
    %v1272 = vsel %vm1112, %v1262, %v1271
    %v1274 = vshrl.u32 %v779, 16
    %v1276 = vrot.slane %v1274, 4
    %v1277 = vshll.u32 %v779, 16
    %v1279 = vrot.slane %v1277, 5
    %v1280 = vor.u32 %v1276, %v1279
    %v1281 = vsel %vm1112, %v1271, %v1280
    %v1283 = vshrl.u32 %v815, 16
    %v1285 = vrot.slane %v1283, 4
    %v1286 = vshll.u32 %v815, 16
    %v1288 = vrot.slane %v1286, 5
    %v1289 = vor.u32 %v1285, %v1288
    %v1290 = vsel %vm1112, %v1280, %v1289
    %1291 = vrot.lane.b32.xlu0 %v1200, 21
    %v1292 = vpop.permute.xlu0 %1291
    %1293 = vrot.lane.b32.xlu0 %v1209, 21
    %v1294 = vpop.permute.xlu0 %1293
    %1295 = vrot.lane.b32.xlu0 %v1218, 21
    %v1296 = vpop.permute.xlu0 %1295
    %1297 = vrot.lane.b32.xlu0 %v1227, 21
    %v1298 = vpop.permute.xlu0 %1297
    %1299 = vrot.lane.b32.xlu0 %v1236, 21
    %v1300 = vpop.permute.xlu0 %1299
    %1301 = vrot.lane.b32.xlu0 %v1245, 21
    %v1302 = vpop.permute.xlu0 %1301
    %1303 = vrot.lane.b32.xlu0 %v1254, 21
    %v1304 = vpop.permute.xlu0 %1303
    %1305 = vrot.lane.b32.xlu0 %v1263, 21
    %v1306 = vpop.permute.xlu0 %1305
    %1307 = vrot.lane.b32.xlu0 %v1272, 21
    %v1308 = vpop.permute.xlu0 %1307
    %1309 = vrot.lane.b32.xlu0 %v1281, 21
    %v1310 = vpop.permute.xlu0 %1309
    %1311 = vrot.lane.b32.xlu0 %v1290, 21
    %v1312 = vpop.permute.xlu0 %1311
    %vm1313 = vcmask 1042432
    %v1314 = vrot.slane %v758, 5
    %v1315 = vrot.slane %v759, 5
    %v1316 = vsel %vm1313, %v1314, %v1315
    %v1317 = vrot.slane %v760, 5
    %v1318 = vsel %vm1313, %v1315, %v1317
    %v1319 = vrot.slane %v761, 5
    %v1320 = vsel %vm1313, %v1317, %v1319
    %v1321 = vrot.slane %v762, 5
    %v1322 = vsel %vm1313, %v1319, %v1321
    %v1323 = vrot.slane %v763, 5
    %v1324 = vsel %vm1313, %v1321, %v1323
    %v1325 = vrot.slane %v764, 5
    %v1326 = vsel %vm1313, %v1323, %v1325
    %v1327 = vrot.slane %v765, 5
    %v1328 = vsel %vm1313, %v1325, %v1327
    %v1329 = vrot.slane %v766, 5
    %v1330 = vsel %vm1313, %v1327, %v1329
    %v1331 = vrot.slane %v767, 5
    %v1332 = vsel %vm1313, %v1329, %v1331
    %v1333 = vrot.slane %v768, 5
    %v1334 = vsel %vm1313, %v1331, %v1333
    %v1335 = vrot.slane %v814, 5
    %v1336 = vsel %vm1313, %v1333, %v1335
    %1337 = vrot.lane.b32.xlu0 %v1316, 24
    %v1338 = vpop.permute.xlu0 %1337
    %1339 = vrot.lane.b32.xlu0 %v1318, 24
    %v1340 = vpop.permute.xlu0 %1339
    %1341 = vrot.lane.b32.xlu0 %v1320, 24
    %v1342 = vpop.permute.xlu0 %1341
    %1343 = vrot.lane.b32.xlu0 %v1322, 24
    %v1344 = vpop.permute.xlu0 %1343
    %1345 = vrot.lane.b32.xlu0 %v1324, 24
    %v1346 = vpop.permute.xlu0 %1345
    %1347 = vrot.lane.b32.xlu0 %v1326, 24
    %v1348 = vpop.permute.xlu0 %1347
    %1349 = vrot.lane.b32.xlu0 %v1328, 24
    %v1350 = vpop.permute.xlu0 %1349
    %1351 = vrot.lane.b32.xlu0 %v1330, 24
    %v1352 = vpop.permute.xlu0 %1351
    %1353 = vrot.lane.b32.xlu0 %v1332, 24
    %v1354 = vpop.permute.xlu0 %1353
    %1355 = vrot.lane.b32.xlu0 %v1334, 24
    %v1356 = vpop.permute.xlu0 %1355
    %1357 = vrot.lane.b32.xlu0 %v1336, 24
    %v1358 = vpop.permute.xlu0 %1357
    %vm1359 = vcmask 23552
    %v1361 = vsel %vm1359, %v758, %v818
    %v1363 = vsel %vm1359, %v759, %v820
    %v1365 = vsel %vm1359, %v760, %v822
    %v1367 = vsel %vm1359, %v761, %v824
    %v1369 = vsel %vm1359, %v762, %v826
    %v1371 = vsel %vm1359, %v763, %v828
    %v1373 = vsel %vm1359, %v764, %v830
    %v1375 = vsel %vm1359, %v765, %v832
    %v1377 = vsel %vm1359, %v766, %v834
    %v1379 = vsel %vm1359, %v767, %v836
    %v1381 = vsel %vm1359, %v768, %v838
    %vm1382 = vcmask 48128
    %v1384 = vsel %vm1382, %v1361, %v933
    %v1386 = vsel %vm1382, %v1363, %v935
    %v1388 = vsel %vm1382, %v1365, %v937
    %v1390 = vsel %vm1382, %v1367, %v939
    %v1392 = vsel %vm1382, %v1369, %v941
    %v1394 = vsel %vm1382, %v1371, %v943
    %v1396 = vsel %vm1382, %v1373, %v945
    %v1398 = vsel %vm1382, %v1375, %v947
    %v1400 = vsel %vm1382, %v1377, %v949
    %v1402 = vsel %vm1382, %v1379, %v951
    %v1404 = vsel %vm1382, %v1381, %v953
    %vm1405 = vcmask 72704
    %v1407 = vsel %vm1405, %v1384, %v955
    %v1409 = vsel %vm1405, %v1386, %v957
    %v1411 = vsel %vm1405, %v1388, %v959
    %v1413 = vsel %vm1405, %v1390, %v961
    %v1415 = vsel %vm1405, %v1392, %v963
    %v1417 = vsel %vm1405, %v1394, %v965
    %v1419 = vsel %vm1405, %v1396, %v967
    %v1421 = vsel %vm1405, %v1398, %v969
    %v1423 = vsel %vm1405, %v1400, %v971
    %v1425 = vsel %vm1405, %v1402, %v973
    %v1427 = vsel %vm1405, %v1404, %v975
    %vm1428 = vcmask 97280
    %v1430 = vsel %vm1428, %v1407, %v977
    %v1432 = vsel %vm1428, %v1409, %v979
    %v1434 = vsel %vm1428, %v1411, %v981
    %v1436 = vsel %vm1428, %v1413, %v983
    %v1438 = vsel %vm1428, %v1415, %v985
    %v1440 = vsel %vm1428, %v1417, %v987
    %v1442 = vsel %vm1428, %v1419, %v989
    %v1444 = vsel %vm1428, %v1421, %v991
    %v1446 = vsel %vm1428, %v1423, %v993
    %v1448 = vsel %vm1428, %v1425, %v995
    %v1450 = vsel %vm1428, %v1427, %v997
    %vm1451 = vcmask 121856
    %v1453 = vsel %vm1451, %v1430, %v1091
    %v1455 = vsel %vm1451, %v1432, %v1093
    %v1457 = vsel %vm1451, %v1434, %v1095
    %v1459 = vsel %vm1451, %v1436, %v1097
    %v1461 = vsel %vm1451, %v1438, %v1099
    %v1463 = vsel %vm1451, %v1440, %v1101
    %v1465 = vsel %vm1451, %v1442, %v1103
    %v1467 = vsel %vm1451, %v1444, %v1105
    %v1469 = vsel %vm1451, %v1446, %v1107
    %v1471 = vsel %vm1451, %v1448, %v1109
    %v1473 = vsel %vm1451, %v1450, %v1111
    %vm1474 = vcmask 146432
    %v1476 = vsel %vm1474, %v1453, %v1163
    %v1478 = vsel %vm1474, %v1455, %v1165
    %v1480 = vsel %vm1474, %v1457, %v1167
    %v1482 = vsel %vm1474, %v1459, %v1169
    %v1484 = vsel %vm1474, %v1461, %v1171
    %v1486 = vsel %vm1474, %v1463, %v1173
    %v1488 = vsel %vm1474, %v1465, %v1175
    %v1490 = vsel %vm1474, %v1467, %v1177
    %v1492 = vsel %vm1474, %v1469, %v1179
    %v1494 = vsel %vm1474, %v1471, %v1181
    %v1496 = vsel %vm1474, %v1473, %v1183
    %vm1497 = vcmask 171008
    %v1499 = vsel %vm1497, %v1476, %v1292
    %v1501 = vsel %vm1497, %v1478, %v1294
    %v1503 = vsel %vm1497, %v1480, %v1296
    %v1505 = vsel %vm1497, %v1482, %v1298
    %v1507 = vsel %vm1497, %v1484, %v1300
    %v1509 = vsel %vm1497, %v1486, %v1302
    %v1511 = vsel %vm1497, %v1488, %v1304
    %v1513 = vsel %vm1497, %v1490, %v1306
    %v1515 = vsel %vm1497, %v1492, %v1308
    %v1517 = vsel %vm1497, %v1494, %v1310
    %v1519 = vsel %vm1497, %v1496, %v1312
    %vm1520 = vcmask 195584
    %v1522 = vsel %vm1520, %v1499, %v1338
    %v1524 = vsel %vm1520, %v1501, %v1340
    %v1526 = vsel %vm1520, %v1503, %v1342
    %v1528 = vsel %vm1520, %v1505, %v1344
    %v1530 = vsel %vm1520, %v1507, %v1346
    %v1532 = vsel %vm1520, %v1509, %v1348
    %v1534 = vsel %vm1520, %v1511, %v1350
    %v1536 = vsel %vm1520, %v1513, %v1352
    %v1538 = vsel %vm1520, %v1515, %v1354
    %v1540 = vsel %vm1520, %v1517, %v1356
    %v1542 = vsel %vm1520, %v1519, %v1358
    %v1543 = vld [vmem:[%s2] sm:$0xf]
    %v1544 = vld [vmem:[%s2 + $0x4] sm:$0xf]
    %v1545 = vld [vmem:[%s2 + $0x8] sm:$0xf]
    %v1546 = vld [vmem:[%s2 + $0xc] sm:$0x3]
    %v1547 = vld [vmem:[%s3] sm:$0x1]
    %v1549 = vperm.slane %v1547, 0
    %v1555 = vunpack.c.l.b16 %v1543
    %v1556 = vunpack.c.l.b16 %v1544
    %v1557 = vunpack.c.l.b16 %v1545
    %v1558 = vunpack.c.l.b16 %v1546
    %v1559 = vpack.c.b16 %v1556, %v1555
    %v1560 = vpack.c.b16 %v1558, %v1557
    %vm1562 = vcmask 220160
    %v1563 = vsel %vm1562, %v1522, 0
    %v1565 = vsel %vm1562, %v1524, 0
    %v1567 = vsel %vm1562, %v1526, 0
    %v1569 = vsel %vm1562, %v1528, 0
    %v1571 = vsel %vm1562, %v1530, 0
    %v1573 = vsel %vm1562, %v1532, 0
    %v1575 = vsel %vm1562, %v1534, 0
    %v1577 = vsel %vm1562, %v1536, 0
    %v1579 = vsel %vm1562, %v1538, 0
    %v1581 = vsel %vm1562, %v1540, 0
    %v1583 = vsel %vm1562, %v1542, 0
    %vm1585 = vcmask 1044480
    %vm1586 = vcmask 1045504
    %v1587 = vsel %vm1585, 4294967295, 65535
    %v1588 = vsel %vm1586, %v1587, 0
    %v1590 = vand.u32 %v1560, %v1588
    %1592 = vmatpush.bf16.msra.mxu0 0
    %1593 = vmatpush.bf16.msra.mxu0 0
    %1594 = vmatpush.bf16.msra.mxu0 0
    %1595 = vmatpush.bf16.msra.mxu0 0
    %1596 = vmatpush.bf16.msra.mxu0 0
    %1597 = vmatpush.bf16.msra.mxu0 0
    %1598 = vmatpush.bf16.msra.mxu0 %v1590
    %1599 = vmatpush.bf16.msra.mxu0 %v1559
    %1600 = vmatmul.bf16.gmra.mxu0 %v1563
    %v1601 = vpop.f32.mrf.mxu0
    %v1602 = vadd.f32 %v1549, %v1601
    %v1603 = vpop.f32.mrf.mxu0
    %v1604 = vadd.f32 %v1549, %v1603
    %1605 = vmatmul.bf16.gmra.mxu0 %v1565
    %v1606 = vpop.f32.mrf.mxu0
    %v1607 = vadd.f32 %v1549, %v1606
    %v1608 = vpop.f32.mrf.mxu0
    %v1609 = vadd.f32 %v1549, %v1608
    %1610 = vmatmul.bf16.gmra.mxu0 %v1567
    %v1611 = vpop.f32.mrf.mxu0
    %v1612 = vadd.f32 %v1549, %v1611
    %v1613 = vpop.f32.mrf.mxu0
    %v1614 = vadd.f32 %v1549, %v1613
    %1615 = vmatmul.bf16.gmra.mxu0 %v1569
    %v1616 = vpop.f32.mrf.mxu0
    %v1617 = vadd.f32 %v1549, %v1616
    %v1618 = vpop.f32.mrf.mxu0
    %v1619 = vadd.f32 %v1549, %v1618
    %1620 = vmatmul.bf16.gmra.mxu0 %v1571
    %v1621 = vpop.f32.mrf.mxu0
    %v1622 = vadd.f32 %v1549, %v1621
    %v1623 = vpop.f32.mrf.mxu0
    %v1624 = vadd.f32 %v1549, %v1623
    %1625 = vmatmul.bf16.gmra.mxu0 %v1573
    %v1626 = vpop.f32.mrf.mxu0
    %v1627 = vadd.f32 %v1549, %v1626
    %v1628 = vpop.f32.mrf.mxu0
    %v1629 = vadd.f32 %v1549, %v1628
    %1630 = vmatmul.bf16.gmra.mxu0 %v1575
    %v1631 = vpop.f32.mrf.mxu0
    %v1632 = vadd.f32 %v1549, %v1631
    %v1633 = vpop.f32.mrf.mxu0
    %v1634 = vadd.f32 %v1549, %v1633
    %1635 = vmatmul.bf16.gmra.mxu0 %v1577
    %v1636 = vpop.f32.mrf.mxu0
    %v1637 = vadd.f32 %v1549, %v1636
    %v1638 = vpop.f32.mrf.mxu0
    %v1639 = vadd.f32 %v1549, %v1638
    %1640 = vmatmul.bf16.gmra.mxu0 %v1579
    %v1641 = vpop.f32.mrf.mxu0
    %v1642 = vadd.f32 %v1549, %v1641
    %v1643 = vpop.f32.mrf.mxu0
    %v1644 = vadd.f32 %v1549, %v1643
    %1645 = vmatmul.bf16.gmra.mxu0 %v1581
    %v1646 = vpop.f32.mrf.mxu0
    %v1647 = vadd.f32 %v1549, %v1646
    %v1648 = vpop.f32.mrf.mxu0
    %v1649 = vadd.f32 %v1549, %v1648
    %1650 = vmatmul.bf16.gmra.mxu0 %v1583
    %v1651 = vpop.f32.mrf.mxu0
    %v1652 = vadd.f32 %v1549, %v1651
    %v1653 = vpop.f32.mrf.mxu0
    %v1654 = vadd.f32 %v1549, %v1653
    %1655 = vdwg.mxu0
    %v1656 = vmax.f32 %v1602, 0.0
    %v1657 = vmax.f32 %v1604, 0.0
    %v1658 = vmax.f32 %v1607, 0.0
    %v1659 = vmax.f32 %v1609, 0.0
    %v1660 = vmax.f32 %v1612, 0.0
    %v1661 = vmax.f32 %v1614, 0.0
    %v1662 = vmax.f32 %v1617, 0.0
    %v1663 = vmax.f32 %v1619, 0.0
    %v1664 = vmax.f32 %v1622, 0.0
    %v1665 = vmax.f32 %v1624, 0.0
    %v1666 = vmax.f32 %v1627, 0.0
    %v1667 = vmax.f32 %v1629, 0.0
    %v1668 = vmax.f32 %v1632, 0.0
    %v1669 = vmax.f32 %v1634, 0.0
    %v1670 = vmax.f32 %v1637, 0.0
    %v1671 = vmax.f32 %v1639, 0.0
    %v1672 = vmax.f32 %v1642, 0.0
    %v1673 = vmax.f32 %v1644, 0.0
    %v1674 = vmax.f32 %v1647, 0.0
    %v1675 = vmax.f32 %v1649, 0.0
    %v1676 = vmax.f32 %v1652, 0.0
    %v1677 = vmax.f32 %v1654, 0.0
    %v1678 = vpack.c.bf16 %v1656, %v1656
    %v1679 = vpack.c.bf16 %v1657, %v1657
    %v1680 = vpack.c.bf16 %v1658, %v1658
    %v1681 = vpack.c.bf16 %v1659, %v1659
    %v1682 = vpack.c.bf16 %v1660, %v1660
    %v1683 = vpack.c.bf16 %v1661, %v1661
    %v1684 = vpack.c.bf16 %v1662, %v1662
    %v1685 = vpack.c.bf16 %v1663, %v1663
    %v1686 = vpack.c.bf16 %v1664, %v1664
    %v1687 = vpack.c.bf16 %v1665, %v1665
    %v1688 = vpack.c.bf16 %v1666, %v1666
    %v1689 = vpack.c.bf16 %v1667, %v1667
    %v1690 = vpack.c.bf16 %v1668, %v1668
    %v1691 = vpack.c.bf16 %v1669, %v1669
    %v1692 = vpack.c.bf16 %v1670, %v1670
    %v1693 = vpack.c.bf16 %v1671, %v1671
    %v1694 = vpack.c.bf16 %v1672, %v1672
    %v1695 = vpack.c.bf16 %v1673, %v1673
    %v1696 = vpack.c.bf16 %v1674, %v1674
    %v1697 = vpack.c.bf16 %v1675, %v1675
    %v1698 = vpack.c.bf16 %v1676, %v1676
    %v1699 = vpack.c.bf16 %v1677, %v1677
    %vm1700 = vcmask 257024
    %1701 = vst.msk [vmem:[%s4] sm:$0xf] %vm1700, %v1678
    %1702 = vst.msk [vmem:[%s4 + $0x4] sm:$0xf] %vm1700, %v1679
    %1703 = vst.msk [vmem:[%s4 + $0x8] sm:$0xf] %vm1700, %v1680
    %1704 = vst.msk [vmem:[%s4 + $0xc] sm:$0xf] %vm1700, %v1681
    %1705 = vst.msk [vmem:[%s4 + $0x10] sm:$0xf] %vm1700, %v1682
    %1706 = vst.msk [vmem:[%s4 + $0x14] sm:$0xf] %vm1700, %v1683
    %1707 = vst.msk [vmem:[%s4 + $0x18] sm:$0xf] %vm1700, %v1684
    %1708 = vst.msk [vmem:[%s4 + $0x1c] sm:$0xf] %vm1700, %v1685
    %1709 = vst.msk [vmem:[%s4 + $0x20] sm:$0xf] %vm1700, %v1686
    %1710 = vst.msk [vmem:[%s4 + $0x24] sm:$0xf] %vm1700, %v1687
    %1711 = vst.msk [vmem:[%s4 + $0x28] sm:$0xf] %vm1700, %v1688
    %1712 = vst.msk [vmem:[%s4 + $0x2c] sm:$0xf] %vm1700, %v1689
    %1713 = vst.msk [vmem:[%s4 + $0x30] sm:$0xf] %vm1700, %v1690
    %1714 = vst.msk [vmem:[%s4 + $0x34] sm:$0xf] %vm1700, %v1691
    %1715 = vst.msk [vmem:[%s4 + $0x38] sm:$0xf] %vm1700, %v1692
    %1716 = vst.msk [vmem:[%s4 + $0x3c] sm:$0xf] %vm1700, %v1693
    %1717 = vst.msk [vmem:[%s4 + $0x40] sm:$0xf] %vm1700, %v1694
    %1718 = vst.msk [vmem:[%s4 + $0x44] sm:$0xf] %vm1700, %v1695
    %1719 = vst.msk [vmem:[%s4 + $0x48] sm:$0xf] %vm1700, %v1696
    %1720 = vst.msk [vmem:[%s4 + $0x4c] sm:$0xf] %vm1700, %v1697
    %1721 = vst.msk [vmem:[%s4 + $0x50] sm:$0xf] %vm1700, %v1698
    %1722 = vst.msk [vmem:[%s4 + $0x54] sm:$0xf] %vm1700, %v1699
    // Predicated region
    $region100: #{forward.6} parent=1 // pred_check
      _
    $region101: #{forward.6} parent=1 // pred_check_branch
      %1724 = sbr.rel (0) target = $region103
    $region102: #{forward.6} parent=1 // pred_region
      _
    $region103: #{forward.6} parent=1 // pred_fallthru
      _
    // Predicated region
    $region104: #{forward.6} parent=1 // pred_check
      _
    $region105: #{forward.6} parent=1 // pred_check_branch
      %1726 = sbr.rel (0) target = $region107
    $region106: #{forward.6} parent=1 // pred_region
      _
    $region107: #{forward.6} parent=1 // pred_fallthru
      _

// kernel: forward.8
$region0: #{forward.8}
  #allocation0 [shape = 'u32[]', space=smem, size = 0x4, offset = 0x4, fixed_abs, tag = 'smem constant byte address 0x4 - core index']
  #allocation1 [shape = 'u32[72,128]{1,0:T(1,128)}', space=vmem, size = 0x9000, scoped, tag = 'internal scratch']
  %s0 = inlined_call_operand.vmem [shape: bf16[4,48,64], index: 0, kind: input, shape index: {}, may-alias: {0,1}]
  %s1 = inlined_call_operand.vmem [shape: bf16[4,48,64], index: 1, kind: input, shape index: {}, may-alias: {0,1}]
  %s2 = inlined_call_operand.vmem [shape: bf16[576,32], index: 2, kind: input, shape index: {}]
  %s3 = inlined_call_operand.vmem [shape: f32[1,32], index: 3, kind: input, shape index: {}]
  %s4 = inlined_call_operand.vmem [shape: f32[32,32], index: 4, kind: output, shape index: {}]
  %s5 = sld [smem:[#allocation0]]
  $region108: #{forward.8} parent=0
    _
  %s7 = ssub.s32 1, %s5
  %s8 = scalar_select 0, %s7, %s5
  $region1: #{forward.8} parent=0
    #allocation2 [shape = 'u8[32768]{0}', space=vmem, size = 0x8000, scoped, tag = 'input window, operand 0, single buffered']
    #allocation3 [shape = 'u8[16384]{0}', space=vmem, size = 0x4000, scoped, tag = 'input window, operand 1, single buffered']
    // Predicated region
    $region2: #{forward.8} parent=1 // pred_check
      _
    $region3: #{forward.8} parent=1 // pred_check_branch
      %10 = sbr.rel (0) target = $region5
    $region4: #{forward.8} parent=1 // pred_region
      // Predicated region
      $region6: #{forward.8} parent=4 // pred_check
        _
      $region7: #{forward.8} parent=4 // pred_check_branch
        %12 = sbr.rel (0) target = $region9
      $region8: #{forward.8} parent=4 // pred_region
        // Predicated region
        $region10: #{forward.8} parent=8 // pred_check
          _
        $region11: #{forward.8} parent=8 // pred_check_branch
          %14 = sbr.rel target = $region13
        $region12: #{forward.8} parent=8 // pred_region
          // Predicated region
          $region25: #{forward.8} parent=12 // pred_check
            _
          $region26: #{forward.8} parent=12 // pred_check_branch
            %60 = sbr.rel (0) target = $region28
          $region27: #{forward.8} parent=12 // pred_region
            loop: start=0, step=1, limit=1
            $region29: #{forward.8} parent=27 // loop_pre_header
              _
            $region30: #{forward.8} parent=27 // loop_header
              %s62 = sphi 0, %s66
              %p63 = scmp.ge.s32.totalorder %s62, 1
              %s67 = sphi %s0, %s0
              %s68 = sphi [#allocation2], [#allocation2]
            $region31: #{forward.8} parent=27 // loop_header_branch
              %65 = sbr.rel (%p63) target = $region35
            $region32: #{forward.8} parent=27 // loop_body
              _
            $region33: #{forward.8} parent=27 // loop_footer
              %s66 = sadd.s32 1, %s62
            $region34: #{forward.8} parent=27 // loop_footer_branch
              %61 = sbr.rel target = $region30
            $region35: #{forward.8} parent=27 // loop_exit
              _
            %s70 = ssub.s32 16, 1
            loop: start=0, step=1, limit=1
            $region36: #{forward.8} parent=27 // loop_pre_header
              _
            $region37: #{forward.8} parent=27 // loop_header
              %s72 = sphi 0, %s76
              %p73 = scmp.ge.s32.totalorder %s72, 1
              %s77 = sphi %s0, %s0
              %s78 = sphi [#allocation2], [#allocation2]
            $region38: #{forward.8} parent=27 // loop_header_branch
              %75 = sbr.rel (%p73) target = $region42
            $region39: #{forward.8} parent=27 // loop_body
              %v79 = vld [vmem:[%s77] sm:%s70]
              %80 = vst [vmem:[%s78] sm:%s70] %v79
              %v81 = vld [vmem:[%s77 + $0x4] sm:%s70]
              %82 = vst [vmem:[%s78 + $0x4] sm:%s70] %v81
              %v83 = vld [vmem:[%s77 + $0x8] sm:%s70]
              %84 = vst [vmem:[%s78 + $0x8] sm:%s70] %v83
              %v85 = vld [vmem:[%s77 + $0xc] sm:%s70]
              %86 = vst [vmem:[%s78 + $0xc] sm:%s70] %v85
              %v87 = vld [vmem:[%s77 + $0x18] sm:%s70]
              %88 = vst [vmem:[%s78 + $0x10] sm:%s70] %v87
              %v89 = vld [vmem:[%s77 + $0x1c] sm:%s70]
              %90 = vst [vmem:[%s78 + $0x14] sm:%s70] %v89
              %v91 = vld [vmem:[%s77 + $0x20] sm:%s70]
              %92 = vst [vmem:[%s78 + $0x18] sm:%s70] %v91
              %v93 = vld [vmem:[%s77 + $0x24] sm:%s70]
              %94 = vst [vmem:[%s78 + $0x1c] sm:%s70] %v93
              %v95 = vld [vmem:[%s77 + $0x30] sm:%s70]
              %96 = vst [vmem:[%s78 + $0x20] sm:%s70] %v95
              %v97 = vld [vmem:[%s77 + $0x34] sm:%s70]
              %98 = vst [vmem:[%s78 + $0x24] sm:%s70] %v97
              %v99 = vld [vmem:[%s77 + $0x38] sm:%s70]
              %100 = vst [vmem:[%s78 + $0x28] sm:%s70] %v99
              %v101 = vld [vmem:[%s77 + $0x3c] sm:%s70]
              %102 = vst [vmem:[%s78 + $0x2c] sm:%s70] %v101
              %v103 = vld [vmem:[%s77 + $0x48] sm:%s70]
              %104 = vst [vmem:[%s78 + $0x30] sm:%s70] %v103
              %v105 = vld [vmem:[%s77 + $0x4c] sm:%s70]
              %106 = vst [vmem:[%s78 + $0x34] sm:%s70] %v105
              %v107 = vld [vmem:[%s77 + $0x50] sm:%s70]
              %108 = vst [vmem:[%s78 + $0x38] sm:%s70] %v107
              %v109 = vld [vmem:[%s77 + $0x54] sm:%s70]
              %110 = vst [vmem:[%s78 + $0x3c] sm:%s70] %v109
            $region40: #{forward.8} parent=27 // loop_footer
              %s76 = sadd.s32 1, %s72
            $region41: #{forward.8} parent=27 // loop_footer_branch
              %71 = sbr.rel target = $region37
            $region42: #{forward.8} parent=27 // loop_exit
              _
          $region28: #{forward.8} parent=12 // pred_fallthru
            _
        $region13: #{forward.8} parent=8 // pred_fallthru
          _
        // Predicated region
        $region14: #{forward.8} parent=8 // pred_check
          _
        $region15: #{forward.8} parent=8 // pred_check_branch
          %16 = sbr.rel (0) target = $region17
        $region16: #{forward.8} parent=8 // pred_region
          %s18 = ssub.s32 16, 1
          loop: start=0, step=1, limit=1
          $region18: #{forward.8} parent=16 // loop_pre_header
            _
          $region19: #{forward.8} parent=16 // loop_header
            %s20 = sphi 0, %s24
            %p21 = scmp.ge.s32.totalorder %s20, 1
            %s25 = sphi %s0, %s0
            %s26 = sphi [#allocation2], [#allocation2]
          $region20: #{forward.8} parent=16 // loop_header_branch
            %23 = sbr.rel (%p21) target = $region24
          $region21: #{forward.8} parent=16 // loop_body
            %v27 = vld [vmem:[%s25] sm:%s18]
            %28 = vst [vmem:[%s26] sm:%s18] %v27
            %v29 = vld [vmem:[%s25 + $0x4] sm:%s18]
            %30 = vst [vmem:[%s26 + $0x4] sm:%s18] %v29
            %v31 = vld [vmem:[%s25 + $0x8] sm:%s18]
            %32 = vst [vmem:[%s26 + $0x8] sm:%s18] %v31
            %v33 = vld [vmem:[%s25 + $0xc] sm:%s18]
            %34 = vst [vmem:[%s26 + $0xc] sm:%s18] %v33
            %v35 = vld [vmem:[%s25 + $0x18] sm:%s18]
            %36 = vst [vmem:[%s26 + $0x10] sm:%s18] %v35
            %v37 = vld [vmem:[%s25 + $0x1c] sm:%s18]
            %38 = vst [vmem:[%s26 + $0x14] sm:%s18] %v37
            %v39 = vld [vmem:[%s25 + $0x20] sm:%s18]
            %40 = vst [vmem:[%s26 + $0x18] sm:%s18] %v39
            %v41 = vld [vmem:[%s25 + $0x24] sm:%s18]
            %42 = vst [vmem:[%s26 + $0x1c] sm:%s18] %v41
            %v43 = vld [vmem:[%s25 + $0x30] sm:%s18]
            %44 = vst [vmem:[%s26 + $0x20] sm:%s18] %v43
            %v45 = vld [vmem:[%s25 + $0x34] sm:%s18]
            %46 = vst [vmem:[%s26 + $0x24] sm:%s18] %v45
            %v47 = vld [vmem:[%s25 + $0x38] sm:%s18]
            %48 = vst [vmem:[%s26 + $0x28] sm:%s18] %v47
            %v49 = vld [vmem:[%s25 + $0x3c] sm:%s18]
            %50 = vst [vmem:[%s26 + $0x2c] sm:%s18] %v49
            %v51 = vld [vmem:[%s25 + $0x48] sm:%s18]
            %52 = vst [vmem:[%s26 + $0x30] sm:%s18] %v51
            %v53 = vld [vmem:[%s25 + $0x4c] sm:%s18]
            %54 = vst [vmem:[%s26 + $0x34] sm:%s18] %v53
            %v55 = vld [vmem:[%s25 + $0x50] sm:%s18]
            %56 = vst [vmem:[%s26 + $0x38] sm:%s18] %v55
            %v57 = vld [vmem:[%s25 + $0x54] sm:%s18]
            %58 = vst [vmem:[%s26 + $0x3c] sm:%s18] %v57
          $region22: #{forward.8} parent=16 // loop_footer
            %s24 = sadd.s32 1, %s20
          $region23: #{forward.8} parent=16 // loop_footer_branch
            %19 = sbr.rel target = $region19
          $region24: #{forward.8} parent=16 // loop_exit
            _
        $region17: #{forward.8} parent=8 // pred_fallthru
          _
      $region9: #{forward.8} parent=4 // pred_fallthru
        _
      %111 = vnop
    $region5: #{forward.8} parent=1 // pred_fallthru
      _
    // Predicated region
    $region43: #{forward.8} parent=1 // pred_check
      _
    $region44: #{forward.8} parent=1 // pred_check_branch
      %113 = sbr.rel (0) target = $region46
    $region45: #{forward.8} parent=1 // pred_region
      %s114 = sadd.s32 0, 1
      %s115 = smul.u32 %s114, 2
      %s116 = smul.u32 2, %s115
      %s117 = smul.addr %s116, 4
      %s118 = scalar_lea.vmem %s1, %s117
      // Predicated region
      $region47: #{forward.8} parent=45 // pred_check
        _
      $region48: #{forward.8} parent=45 // pred_check_branch
        %120 = sbr.rel (0) target = $region50
      $region49: #{forward.8} parent=45 // pred_region
        // Predicated region
        $region51: #{forward.8} parent=49 // pred_check
          _
        $region52: #{forward.8} parent=49 // pred_check_branch
          %122 = sbr.rel target = $region54
        $region53: #{forward.8} parent=49 // pred_region
          // Predicated region
          $region66: #{forward.8} parent=53 // pred_check
            _
          $region67: #{forward.8} parent=53 // pred_check_branch
            %152 = sbr.rel (0) target = $region69
          $region68: #{forward.8} parent=53 // pred_region
            loop: start=0, step=1, limit=1
            $region70: #{forward.8} parent=68 // loop_pre_header
              _
            $region71: #{forward.8} parent=68 // loop_header
              %s154 = sphi 0, %s158
              %p155 = scmp.ge.s32.totalorder %s154, 1
              %s159 = sphi %s118, %s118
              %s160 = sphi [#allocation3], [#allocation3]
            $region72: #{forward.8} parent=68 // loop_header_branch
              %157 = sbr.rel (%p155) target = $region76
            $region73: #{forward.8} parent=68 // loop_body
              _
            $region74: #{forward.8} parent=68 // loop_footer
              %s158 = sadd.s32 1, %s154
            $region75: #{forward.8} parent=68 // loop_footer_branch
              %153 = sbr.rel target = $region71
            $region76: #{forward.8} parent=68 // loop_exit
              _
            %s162 = ssub.s32 16, 1
            loop: start=0, step=1, limit=1
            $region77: #{forward.8} parent=68 // loop_pre_header
              _
            $region78: #{forward.8} parent=68 // loop_header
              %s164 = sphi 0, %s168
              %p165 = scmp.ge.s32.totalorder %s164, 1
              %s169 = sphi %s118, %s118
              %s170 = sphi [#allocation3], [#allocation3]
            $region79: #{forward.8} parent=68 // loop_header_branch
              %167 = sbr.rel (%p165) target = $region83
            $region80: #{forward.8} parent=68 // loop_body
              %v171 = vld [vmem:[%s169] sm:%s162]
              %172 = vst [vmem:[%s170] sm:%s162] %v171
              %v173 = vld [vmem:[%s169 + $0x4] sm:%s162]
              %174 = vst [vmem:[%s170 + $0x4] sm:%s162] %v173
              %v175 = vld [vmem:[%s169 + $0x18] sm:%s162]
              %176 = vst [vmem:[%s170 + $0x8] sm:%s162] %v175
              %v177 = vld [vmem:[%s169 + $0x1c] sm:%s162]
              %178 = vst [vmem:[%s170 + $0xc] sm:%s162] %v177
              %v179 = vld [vmem:[%s169 + $0x30] sm:%s162]
              %180 = vst [vmem:[%s170 + $0x10] sm:%s162] %v179
              %v181 = vld [vmem:[%s169 + $0x34] sm:%s162]
              %182 = vst [vmem:[%s170 + $0x14] sm:%s162] %v181
              %v183 = vld [vmem:[%s169 + $0x48] sm:%s162]
              %184 = vst [vmem:[%s170 + $0x18] sm:%s162] %v183
              %v185 = vld [vmem:[%s169 + $0x4c] sm:%s162]
              %186 = vst [vmem:[%s170 + $0x1c] sm:%s162] %v185
            $region81: #{forward.8} parent=68 // loop_footer
              %s168 = sadd.s32 1, %s164
            $region82: #{forward.8} parent=68 // loop_footer_branch
              %163 = sbr.rel target = $region78
            $region83: #{forward.8} parent=68 // loop_exit
              _
          $region69: #{forward.8} parent=53 // pred_fallthru
            _
        $region54: #{forward.8} parent=49 // pred_fallthru
          _
        // Predicated region
        $region55: #{forward.8} parent=49 // pred_check
          _
        $region56: #{forward.8} parent=49 // pred_check_branch
          %124 = sbr.rel (0) target = $region58
        $region57: #{forward.8} parent=49 // pred_region
          %s126 = ssub.s32 16, 1
          loop: start=0, step=1, limit=1
          $region59: #{forward.8} parent=57 // loop_pre_header
            _
          $region60: #{forward.8} parent=57 // loop_header
            %s128 = sphi 0, %s132
            %p129 = scmp.ge.s32.totalorder %s128, 1
            %s133 = sphi %s118, %s118
            %s134 = sphi [#allocation3], [#allocation3]
          $region61: #{forward.8} parent=57 // loop_header_branch
            %131 = sbr.rel (%p129) target = $region65
          $region62: #{forward.8} parent=57 // loop_body
            %v135 = vld [vmem:[%s133] sm:%s126]
            %136 = vst [vmem:[%s134] sm:%s126] %v135
            %v137 = vld [vmem:[%s133 + $0x4] sm:%s126]
            %138 = vst [vmem:[%s134 + $0x4] sm:%s126] %v137
            %v139 = vld [vmem:[%s133 + $0x18] sm:%s126]
            %140 = vst [vmem:[%s134 + $0x8] sm:%s126] %v139
            %v141 = vld [vmem:[%s133 + $0x1c] sm:%s126]
            %142 = vst [vmem:[%s134 + $0xc] sm:%s126] %v141
            %v143 = vld [vmem:[%s133 + $0x30] sm:%s126]
            %144 = vst [vmem:[%s134 + $0x10] sm:%s126] %v143
            %v145 = vld [vmem:[%s133 + $0x34] sm:%s126]
            %146 = vst [vmem:[%s134 + $0x14] sm:%s126] %v145
            %v147 = vld [vmem:[%s133 + $0x48] sm:%s126]
            %148 = vst [vmem:[%s134 + $0x18] sm:%s126] %v147
            %v149 = vld [vmem:[%s133 + $0x4c] sm:%s126]
            %150 = vst [vmem:[%s134 + $0x1c] sm:%s126] %v149
          $region63: #{forward.8} parent=57 // loop_footer
            %s132 = sadd.s32 1, %s128
          $region64: #{forward.8} parent=57 // loop_footer_branch
            %127 = sbr.rel target = $region60
          $region65: #{forward.8} parent=57 // loop_exit
            _
        $region58: #{forward.8} parent=49 // pred_fallthru
          _
      $region50: #{forward.8} parent=45 // pred_fallthru
        _
      %187 = vnop
    $region46: #{forward.8} parent=1 // pred_fallthru
      _
    // Predicated region
    $region84: #{forward.8} parent=1 // pred_check
      _
    $region85: #{forward.8} parent=1 // pred_check_branch
      %189 = sbr.rel (0) target = $region87
    $region86: #{forward.8} parent=1 // pred_region
      _
    $region87: #{forward.8} parent=1 // pred_fallthru
      _
    // Predicated region
    $region88: #{forward.8} parent=1 // pred_check
      _
    $region89: #{forward.8} parent=1 // pred_check_branch
      %191 = sbr.rel (0) target = $region91
    $region90: #{forward.8} parent=1 // pred_region
      _
    $region91: #{forward.8} parent=1 // pred_fallthru
      _
    // Predicated region
    $region92: #{forward.8} parent=1 // pred_check
      _
    $region93: #{forward.8} parent=1 // pred_check_branch
      %193 = sbr.rel (0) target = $region95
    $region94: #{forward.8} parent=1 // pred_region
      _
    $region95: #{forward.8} parent=1 // pred_fallthru
      _
    // Predicated region
    $region96: #{forward.8} parent=1 // pred_check
      _
    $region97: #{forward.8} parent=1 // pred_check_branch
      %195 = sbr.rel (0) target = $region99
    $region98: #{forward.8} parent=1 // pred_region
      _
    $region99: #{forward.8} parent=1 // pred_fallthru
      _
    %s196 = sadd.s32 0, 1
    %s197 = smul.u32 %s196, 2
    %s198 = smul.u32 2, %s197
    %v200 = vld [vmem:[#allocation2] sm:$0xf]
    %v201 = vld [vmem:[#allocation2 + $0x4] sm:$0xf]
    %v202 = vld [vmem:[#allocation2 + $0x8] sm:$0xf]
    %v203 = vld [vmem:[#allocation2 + $0xc] sm:$0xf]
    %v204 = vld [vmem:[#allocation2 + $0x10] sm:$0xf]
    %v205 = vld [vmem:[#allocation2 + $0x14] sm:$0xf]
    %v206 = vld [vmem:[#allocation2 + $0x18] sm:$0xf]
    %v207 = vld [vmem:[#allocation2 + $0x1c] sm:$0xf]
    %v208 = vld [vmem:[#allocation2 + $0x20] sm:$0xf]
    %v209 = vld [vmem:[#allocation2 + $0x24] sm:$0xf]
    %v210 = vld [vmem:[#allocation2 + $0x28] sm:$0xf]
    %v211 = vld [vmem:[#allocation2 + $0x2c] sm:$0xf]
    %v212 = vld [vmem:[#allocation2 + $0x30] sm:$0xf]
    %v213 = vld [vmem:[#allocation2 + $0x34] sm:$0xf]
    %v214 = vld [vmem:[#allocation2 + $0x38] sm:$0xf]
    %v215 = vld [vmem:[#allocation2 + $0x3c] sm:$0xf]
    %v216 = vld [vmem:[#allocation3] sm:$0xf]
    %v217 = vld [vmem:[#allocation3 + $0x4] sm:$0xf]
    %v218 = vld [vmem:[#allocation3 + $0x8] sm:$0xf]
    %v219 = vld [vmem:[#allocation3 + $0xc] sm:$0xf]
    %v220 = vld [vmem:[#allocation3 + $0x10] sm:$0xf]
    %v221 = vld [vmem:[#allocation3 + $0x14] sm:$0xf]
    %v238 = vunpack.c.l.b16 %v200
    %v239 = vunpack.c.l.b16 %v201
    %v240 = vunpack.c.l.b16 %v202
    %v241 = vunpack.c.l.b16 %v203
    %v242 = vunpack.c.l.b16 %v204
    %v243 = vunpack.c.l.b16 %v205
    %v244 = vunpack.c.l.b16 %v206
    %v245 = vunpack.c.l.b16 %v207
    %v246 = vunpack.c.l.b16 %v208
    %v247 = vunpack.c.l.b16 %v209
    %v248 = vunpack.c.l.b16 %v210
    %v249 = vunpack.c.l.b16 %v211
    %v250 = vunpack.c.l.b16 %v212
    %v251 = vunpack.c.l.b16 %v213
    %v252 = vunpack.c.l.b16 %v214
    %v253 = vunpack.c.l.b16 %v215
    %v254 = vpack.c.b16 %v239, %v238
    %v255 = vpack.c.b16 %v241, %v240
    %v256 = vpack.c.b16 %v243, %v242
    %v257 = vpack.c.b16 %v245, %v244
    %v258 = vpack.c.b16 %v247, %v246
    %v259 = vpack.c.b16 %v249, %v248
    %v260 = vpack.c.b16 %v251, %v250
    %v261 = vpack.c.b16 %v253, %v252
    %v268 = vunpack.c.l.b16 %v216
    %v269 = vunpack.c.l.b16 %v217
    %v270 = vunpack.c.l.b16 %v218
    %v271 = vunpack.c.l.b16 %v219
    %v272 = vunpack.c.l.b16 %v220
    %v273 = vunpack.c.l.b16 %v221
    %v274 = vpack.c.b16 %v269, %v268
    %v275 = vpack.c.b16 %v271, %v270
    %v276 = vpack.c.b16 %v273, %v272
    %277 = vrot.lane.b32.xlu0 %v256, 64
    %v278 = vpop.permute.xlu0 %277
    %279 = vrot.lane.b32.xlu0 %v257, 64
    %v280 = vpop.permute.xlu0 %279
    %vm281 = vsmask.f32 7424
    %v283 = vshrl.u32 %v254, 16
    %v285 = vshll.u32 %v254, 16
    %v287 = vrot.slane %v285, 1
    %v288 = vor.u32 %v283, %v287
    %v290 = vshll.u32 %v255, 16
    %v292 = vrot.slane %v290, 1
    %v293 = vsel %vm281, %v288, %v292
    %v294 = vshrl.u32 %v255, 16
    %v296 = vor.u32 %v294, %v292
    %v298 = vshll.u32 %v274, 16
    %v300 = vrot.slane %v298, 1
    %v301 = vsel %vm281, %v296, %v300
    %302 = vrot.lane.b32.xlu0 %v258, 64
    %v303 = vpop.permute.xlu0 %302
    %304 = vrot.lane.b32.xlu0 %v259, 64
    %v305 = vpop.permute.xlu0 %304
    %v307 = vshrl.u32 %v258, 16
    %v309 = vshll.u32 %v258, 16
    %v311 = vrot.slane %v309, 1
    %v312 = vor.u32 %v307, %v311
    %v314 = vshll.u32 %v259, 16
    %v316 = vrot.slane %v314, 1
    %v317 = vsel %vm281, %v312, %v316
    %v318 = vshrl.u32 %v259, 16
    %v320 = vor.u32 %v318, %v316
    %v322 = vshll.u32 %v276, 16
    %v324 = vrot.slane %v322, 1
    %v325 = vsel %vm281, %v320, %v324
    %326 = vrot.lane.b32.xlu0 %v317, 64
    %v327 = vpop.permute.xlu0 %326
    %328 = vrot.lane.b32.xlu0 %v325, 64
    %v329 = vpop.permute.xlu0 %328
    %vm330 = vsmask.f32 6400
    %v331 = vrot.slane %v283, 1
    %v332 = vrot.slane %v285, 2
    %v333 = vor.u32 %v331, %v332
    %v334 = vrot.slane %v294, 1
    %v335 = vrot.slane %v290, 2
    %v336 = vor.u32 %v334, %v335
    %v337 = vsel %vm330, %v333, %v336
    %v338 = vshrl.u32 %v274, 16
    %v340 = vrot.slane %v338, 1
    %v341 = vrot.slane %v298, 2
    %v342 = vor.u32 %v340, %v341
    %v343 = vsel %vm330, %v336, %v342
    %v345 = vshrl.u32 %v256, 16
    %v347 = vrot.slane %v345, 1
    %v348 = vshll.u32 %v256, 16
    %v350 = vrot.slane %v348, 2
    %v351 = vor.u32 %v347, %v350
    %v353 = vshrl.u32 %v257, 16
    %v355 = vrot.slane %v353, 1
    %v356 = vshll.u32 %v257, 16
    %v358 = vrot.slane %v356, 2
    %v359 = vor.u32 %v355, %v358
    %v360 = vsel %vm330, %v351, %v359
    %v362 = vshrl.u32 %v275, 16
    %v364 = vrot.slane %v362, 1
    %v365 = vshll.u32 %v275, 16
    %v367 = vrot.slane %v365, 2
    %v368 = vor.u32 %v364, %v367
    %v369 = vsel %vm330, %v359, %v368
    %370 = vrot.lane.b32.xlu0 %v360, 64
    %v371 = vpop.permute.xlu0 %370
    %372 = vrot.lane.b32.xlu0 %v369, 64
    %v373 = vpop.permute.xlu0 %372
    %vm374 = vcmask 1045504
    %v375 = vrot.slane %v254, 2
    %v376 = vrot.slane %v255, 2
    %v377 = vsel %vm374, %v375, %v376
    %v378 = vrot.slane %v274, 2
    %v379 = vsel %vm374, %v376, %v378
    %vm380 = vcmask 523264
    %v382 = vsel %vm380, %v254, %v278
    %v385 = vsel %vm380, %v255, %v280
    %v389 = vsel %vm380, %v293, %v303
    %v393 = vsel %vm380, %v301, %v305
    %v397 = vsel %vm380, %v260, %v327
    %v401 = vsel %vm380, %v261, %v329
    %v405 = vsel %vm380, %v337, %v371
    %v409 = vsel %vm380, %v343, %v373
    %v411 = vld [vmem:[%s2] sm:$0xf]
    %v412 = vld [vmem:[%s2 + $0x4] sm:$0xf]
    %v413 = vld [vmem:[%s2 + $0x8] sm:$0xf]
    %v414 = vld [vmem:[%s2 + $0xc] sm:$0xf]
    %v415 = vld [vmem:[%s2 + $0x10] sm:$0xf]
    %v416 = vld [vmem:[%s2 + $0x14] sm:$0xf]
    %v417 = vld [vmem:[%s2 + $0x18] sm:$0xf]
    %v418 = vld [vmem:[%s2 + $0x1c] sm:$0xf]
    %v419 = vld [vmem:[%s2 + $0x20] sm:$0xf]
    %v420 = vld [vmem:[%s2 + $0x24] sm:$0xf]
    %v421 = vld [vmem:[%s2 + $0x28] sm:$0xf]
    %v422 = vld [vmem:[%s2 + $0x2c] sm:$0xf]
    %v423 = vld [vmem:[%s2 + $0x30] sm:$0xf]
    %v424 = vld [vmem:[%s2 + $0x34] sm:$0xf]
    %v425 = vld [vmem:[%s2 + $0x38] sm:$0xf]
    %v426 = vld [vmem:[%s2 + $0x3c] sm:$0xf]
    %v427 = vld [vmem:[%s2 + $0x40] sm:$0xf]
    %v428 = vld [vmem:[%s2 + $0x44] sm:$0xf]
    %v429 = vld [vmem:[%s2 + $0x48] sm:$0xf]
    %v430 = vld [vmem:[%s2 + $0x4c] sm:$0xf]
    %v431 = vld [vmem:[%s2 + $0x50] sm:$0xf]
    %v432 = vld [vmem:[%s2 + $0x54] sm:$0xf]
    %v433 = vld [vmem:[%s2 + $0x58] sm:$0xf]
    %v434 = vld [vmem:[%s2 + $0x5c] sm:$0xf]
    %v435 = vld [vmem:[%s2 + $0x60] sm:$0xf]
    %v436 = vld [vmem:[%s2 + $0x64] sm:$0xf]
    %v437 = vld [vmem:[%s2 + $0x68] sm:$0xf]
    %v438 = vld [vmem:[%s2 + $0x6c] sm:$0xf]
    %v439 = vld [vmem:[%s2 + $0x70] sm:$0xf]
    %v440 = vld [vmem:[%s2 + $0x74] sm:$0xf]
    %v441 = vld [vmem:[%s2 + $0x78] sm:$0xf]
    %v442 = vld [vmem:[%s2 + $0x7c] sm:$0xf]
    %v443 = vld [vmem:[%s2 + $0x80] sm:$0xf]
    %v444 = vld [vmem:[%s2 + $0x84] sm:$0xf]
    %v445 = vld [vmem:[%s2 + $0x88] sm:$0xf]
    %v446 = vld [vmem:[%s2 + $0x8c] sm:$0xf]
    %v447 = vld [vmem:[%s2 + $0x90] sm:$0xf]
    %v448 = vld [vmem:[%s2 + $0x94] sm:$0xf]
    %v449 = vld [vmem:[%s2 + $0x98] sm:$0xf]
    %v450 = vld [vmem:[%s2 + $0x9c] sm:$0xf]
    %v451 = vld [vmem:[%s2 + $0xa0] sm:$0xf]
    %v452 = vld [vmem:[%s2 + $0xa4] sm:$0xf]
    %v453 = vld [vmem:[%s2 + $0xa8] sm:$0xf]
    %v454 = vld [vmem:[%s2 + $0xac] sm:$0xf]
    %v455 = vld [vmem:[%s2 + $0xb0] sm:$0xf]
    %v456 = vld [vmem:[%s2 + $0xb4] sm:$0xf]
    %v457 = vld [vmem:[%s2 + $0xb8] sm:$0xf]
    %v458 = vld [vmem:[%s2 + $0xbc] sm:$0xf]
    %v459 = vld [vmem:[%s2 + $0xc0] sm:$0xf]
    %v460 = vld [vmem:[%s2 + $0xc4] sm:$0xf]
    %v461 = vld [vmem:[%s2 + $0xc8] sm:$0xf]
    %v462 = vld [vmem:[%s2 + $0xcc] sm:$0xf]
    %v463 = vld [vmem:[%s2 + $0xd0] sm:$0xf]
    %v464 = vld [vmem:[%s2 + $0xd4] sm:$0xf]
    %v465 = vld [vmem:[%s2 + $0xd8] sm:$0xf]
    %v466 = vld [vmem:[%s2 + $0xdc] sm:$0xf]
    %v467 = vld [vmem:[%s2 + $0xe0] sm:$0xf]
    %v468 = vld [vmem:[%s2 + $0xe4] sm:$0xf]
    %v469 = vld [vmem:[%s2 + $0xe8] sm:$0xf]
    %v470 = vld [vmem:[%s2 + $0xec] sm:$0xf]
    %v471 = vld [vmem:[%s2 + $0xf0] sm:$0xf]
    %v472 = vld [vmem:[%s2 + $0xf4] sm:$0xf]
    %v473 = vld [vmem:[%s2 + $0xf8] sm:$0xf]
    %v474 = vld [vmem:[%s2 + $0xfc] sm:$0xf]
    %v475 = vld [vmem:[%s2 + $0x100] sm:$0xf]
    %v476 = vld [vmem:[%s2 + $0x104] sm:$0xf]
    %v477 = vld [vmem:[%s2 + $0x108] sm:$0xf]
    %v478 = vld [vmem:[%s2 + $0x10c] sm:$0xf]
    %v479 = vld [vmem:[%s2 + $0x110] sm:$0xf]
    %v480 = vld [vmem:[%s2 + $0x114] sm:$0xf]
    %v481 = vld [vmem:[%s2 + $0x118] sm:$0xf]
    %v482 = vld [vmem:[%s2 + $0x11c] sm:$0xf]
    %v483 = vld [vmem:[%s3] sm:$0x1]
    %v485 = vperm.slane %v483, 0
    %v559 = vunpack.c.l.b16 %v411
    %v560 = vunpack.c.l.b16 %v412
    %v561 = vunpack.c.l.b16 %v413
    %v562 = vunpack.c.l.b16 %v414
    %v563 = vunpack.c.l.b16 %v415
    %v564 = vunpack.c.l.b16 %v416
    %v565 = vunpack.c.l.b16 %v417
    %v566 = vunpack.c.l.b16 %v418
    %v567 = vunpack.c.l.b16 %v419
    %v568 = vunpack.c.l.b16 %v420
    %v569 = vunpack.c.l.b16 %v421
    %v570 = vunpack.c.l.b16 %v422
    %v571 = vunpack.c.l.b16 %v423
    %v572 = vunpack.c.l.b16 %v424
    %v573 = vunpack.c.l.b16 %v425
    %v574 = vunpack.c.l.b16 %v426
    %v575 = vunpack.c.l.b16 %v427
    %v576 = vunpack.c.l.b16 %v428
    %v577 = vunpack.c.l.b16 %v429
    %v578 = vunpack.c.l.b16 %v430
    %v579 = vunpack.c.l.b16 %v431
    %v580 = vunpack.c.l.b16 %v432
    %v581 = vunpack.c.l.b16 %v433
    %v582 = vunpack.c.l.b16 %v434
    %v583 = vunpack.c.l.b16 %v435
    %v584 = vunpack.c.l.b16 %v436
    %v585 = vunpack.c.l.b16 %v437
    %v586 = vunpack.c.l.b16 %v438
    %v587 = vunpack.c.l.b16 %v439
    %v588 = vunpack.c.l.b16 %v440
    %v589 = vunpack.c.l.b16 %v441
    %v590 = vunpack.c.l.b16 %v442
    %v591 = vunpack.c.l.b16 %v443
    %v592 = vunpack.c.l.b16 %v444
    %v593 = vunpack.c.l.b16 %v445
    %v594 = vunpack.c.l.b16 %v446
    %v595 = vunpack.c.l.b16 %v447
    %v596 = vunpack.c.l.b16 %v448
    %v597 = vunpack.c.l.b16 %v449
    %v598 = vunpack.c.l.b16 %v450
    %v599 = vunpack.c.l.b16 %v451
    %v600 = vunpack.c.l.b16 %v452
    %v601 = vunpack.c.l.b16 %v453
    %v602 = vunpack.c.l.b16 %v454
    %v603 = vunpack.c.l.b16 %v455
    %v604 = vunpack.c.l.b16 %v456
    %v605 = vunpack.c.l.b16 %v457
    %v606 = vunpack.c.l.b16 %v458
    %v607 = vunpack.c.l.b16 %v459
    %v608 = vunpack.c.l.b16 %v460
    %v609 = vunpack.c.l.b16 %v461
    %v610 = vunpack.c.l.b16 %v462
    %v611 = vunpack.c.l.b16 %v463
    %v612 = vunpack.c.l.b16 %v464
    %v613 = vunpack.c.l.b16 %v465
    %v614 = vunpack.c.l.b16 %v466
    %v615 = vunpack.c.l.b16 %v467
    %v616 = vunpack.c.l.b16 %v468
    %v617 = vunpack.c.l.b16 %v469
    %v618 = vunpack.c.l.b16 %v470
    %v619 = vunpack.c.l.b16 %v471
    %v620 = vunpack.c.l.b16 %v472
    %v621 = vunpack.c.l.b16 %v473
    %v622 = vunpack.c.l.b16 %v474
    %v623 = vunpack.c.l.b16 %v475
    %v624 = vunpack.c.l.b16 %v476
    %v625 = vunpack.c.l.b16 %v477
    %v626 = vunpack.c.l.b16 %v478
    %v627 = vunpack.c.l.b16 %v479
    %v628 = vunpack.c.l.b16 %v480
    %v629 = vunpack.c.l.b16 %v481
    %v630 = vunpack.c.l.b16 %v482
    %v631 = vpack.c.b16 %v560, %v559
    %v632 = vpack.c.b16 %v562, %v561
    %v633 = vpack.c.b16 %v564, %v563
    %v634 = vpack.c.b16 %v566, %v565
    %v635 = vpack.c.b16 %v568, %v567
    %v636 = vpack.c.b16 %v570, %v569
    %v637 = vpack.c.b16 %v572, %v571
    %v638 = vpack.c.b16 %v574, %v573
    %v639 = vpack.c.b16 %v576, %v575
    %v640 = vpack.c.b16 %v578, %v577
    %v641 = vpack.c.b16 %v580, %v579
    %v642 = vpack.c.b16 %v582, %v581
    %v643 = vpack.c.b16 %v584, %v583
    %v644 = vpack.c.b16 %v586, %v585
    %v645 = vpack.c.b16 %v588, %v587
    %v646 = vpack.c.b16 %v590, %v589
    %v647 = vpack.c.b16 %v592, %v591
    %v648 = vpack.c.b16 %v594, %v593
    %v649 = vpack.c.b16 %v596, %v595
    %v650 = vpack.c.b16 %v598, %v597
    %v651 = vpack.c.b16 %v600, %v599
    %v652 = vpack.c.b16 %v602, %v601
    %v653 = vpack.c.b16 %v604, %v603
    %v654 = vpack.c.b16 %v606, %v605
    %v655 = vpack.c.b16 %v608, %v607
    %v656 = vpack.c.b16 %v610, %v609
    %v657 = vpack.c.b16 %v612, %v611
    %v658 = vpack.c.b16 %v614, %v613
    %v659 = vpack.c.b16 %v616, %v615
    %v660 = vpack.c.b16 %v618, %v617
    %v661 = vpack.c.b16 %v620, %v619
    %v662 = vpack.c.b16 %v622, %v621
    %v663 = vpack.c.b16 %v624, %v623
    %v664 = vpack.c.b16 %v626, %v625
    %v665 = vpack.c.b16 %v628, %v627
    %v666 = vpack.c.b16 %v630, %v629
    %v704 = vsel %vm380, %v377, 0
    %v707 = vsel %vm380, %v379, 0
    %709 = vmatpush.bf16.msra.mxu0 %v638
    %710 = vmatpush.bf16.msra.mxu0 %v637
    %711 = vmatpush.bf16.msra.mxu0 %v636
    %712 = vmatpush.bf16.msra.mxu0 %v635
    %713 = vmatpush.bf16.msra.mxu0 %v634
    %714 = vmatpush.bf16.msra.mxu0 %v633
    %715 = vmatpush.bf16.msra.mxu0 %v632
    %716 = vmatpush.bf16.msra.mxu0 %v631
    %717 = vmatmul.bf16.gmra.mxu0 %v382
    %v718 = vpop.f32.mrf.mxu0
    %v719 = vadd.f32 %v485, %v718
    %v720 = vpop.f32.mrf.mxu0
    %v721 = vadd.f32 %v485, %v720
    %722 = vmatmul.bf16.gmra.mxu0 %v385
    %v723 = vpop.f32.mrf.mxu0
    %v724 = vadd.f32 %v485, %v723
    %v725 = vpop.f32.mrf.mxu0
    %v726 = vadd.f32 %v485, %v725
    %727 = vdwg.mxu0
    %728 = vmatpush.bf16.msra.mxu0 %v646
    %729 = vmatpush.bf16.msra.mxu0 %v645
    %730 = vmatpush.bf16.msra.mxu0 %v644
    %731 = vmatpush.bf16.msra.mxu0 %v643
    %732 = vmatpush.bf16.msra.mxu0 %v642
    %733 = vmatpush.bf16.msra.mxu0 %v641
    %734 = vmatpush.bf16.msra.mxu0 %v640
    %735 = vmatpush.bf16.msra.mxu0 %v639
    %736 = vmatmul.bf16.gmra.mxu0 %v389
    %v737 = vpop.f32.mrf.mxu0
    %v738 = vadd.f32 %v719, %v737
    %v739 = vpop.f32.mrf.mxu0
    %v740 = vadd.f32 %v721, %v739
    %741 = vmatmul.bf16.gmra.mxu0 %v393
    %v742 = vpop.f32.mrf.mxu0
    %v743 = vadd.f32 %v724, %v742
    %v744 = vpop.f32.mrf.mxu0
    %v745 = vadd.f32 %v726, %v744
    %746 = vdwg.mxu0
    %747 = vmatpush.bf16.msra.mxu0 %v654
    %748 = vmatpush.bf16.msra.mxu0 %v653
    %749 = vmatpush.bf16.msra.mxu0 %v652
    %750 = vmatpush.bf16.msra.mxu0 %v651
    %751 = vmatpush.bf16.msra.mxu0 %v650
    %752 = vmatpush.bf16.msra.mxu0 %v649
    %753 = vmatpush.bf16.msra.mxu0 %v648
    %754 = vmatpush.bf16.msra.mxu0 %v647
    %755 = vmatmul.bf16.gmra.mxu0 %v397
    %v756 = vpop.f32.mrf.mxu0
    %v757 = vadd.f32 %v738, %v756
    %v758 = vpop.f32.mrf.mxu0
    %v759 = vadd.f32 %v740, %v758
    %760 = vmatmul.bf16.gmra.mxu0 %v401
    %v761 = vpop.f32.mrf.mxu0
    %v762 = vadd.f32 %v743, %v761
    %v763 = vpop.f32.mrf.mxu0
    %v764 = vadd.f32 %v745, %v763
    %765 = vdwg.mxu0
    %766 = vmatpush.bf16.msra.mxu0 %v662
    %767 = vmatpush.bf16.msra.mxu0 %v661
    %768 = vmatpush.bf16.msra.mxu0 %v660
    %769 = vmatpush.bf16.msra.mxu0 %v659
    %770 = vmatpush.bf16.msra.mxu0 %v658
    %771 = vmatpush.bf16.msra.mxu0 %v657
    %772 = vmatpush.bf16.msra.mxu0 %v656
    %773 = vmatpush.bf16.msra.mxu0 %v655
    %774 = vmatmul.bf16.gmra.mxu0 %v405
    %v775 = vpop.f32.mrf.mxu0
    %v776 = vadd.f32 %v757, %v775
    %v777 = vpop.f32.mrf.mxu0
    %v778 = vadd.f32 %v759, %v777
    %779 = vmatmul.bf16.gmra.mxu0 %v409
    %v780 = vpop.f32.mrf.mxu0
    %v781 = vadd.f32 %v762, %v780
    %v782 = vpop.f32.mrf.mxu0
    %v783 = vadd.f32 %v764, %v782
    %784 = vdwg.mxu0
    %785 = vmatpush.bf16.msra.mxu0 0
    %786 = vmatpush.bf16.msra.mxu0 0
    %787 = vmatpush.bf16.msra.mxu0 0
    %788 = vmatpush.bf16.msra.mxu0 0
    %789 = vmatpush.bf16.msra.mxu0 %v666
    %790 = vmatpush.bf16.msra.mxu0 %v665
    %791 = vmatpush.bf16.msra.mxu0 %v664
    %792 = vmatpush.bf16.msra.mxu0 %v663
    %793 = vmatmul.bf16.gmra.mxu0 %v704
    %v794 = vpop.f32.mrf.mxu0
    %v795 = vadd.f32 %v776, %v794
    %v796 = vpop.f32.mrf.mxu0
    %v797 = vadd.f32 %v778, %v796
    %798 = vmatmul.bf16.gmra.mxu0 %v707
    %v799 = vpop.f32.mrf.mxu0
    %v800 = vadd.f32 %v781, %v799
    %v801 = vpop.f32.mrf.mxu0
    %v802 = vadd.f32 %v783, %v801
    %803 = vdwg.mxu0
    %v804 = vmax.f32 %v795, 0.0
    %v805 = vmax.f32 %v797, 0.0
    %v806 = vmax.f32 %v800, 0.0
    %v807 = vmax.f32 %v802, 0.0
    %vm808 = vcmask 261120
    %809 = vst.msk [vmem:[%s4] sm:$0xff] %vm808, %v804
    %810 = vst.msk [vmem:[%s4 + $0x8] sm:$0xff] %vm808, %v805
    %811 = vst.msk [vmem:[%s4 + $0x10] sm:$0xff] %vm808, %v806
    %812 = vst.msk [vmem:[%s4 + $0x18] sm:$0xff] %vm808, %v807
    // Predicated region
    $region100: #{forward.8} parent=1 // pred_check
      _
    $region101: #{forward.8} parent=1 // pred_check_branch
      %814 = sbr.rel (0) target = $region103
    $region102: #{forward.8} parent=1 // pred_region
      _
    $region103: #{forward.8} parent=1 // pred_fallthru
      _
    // Predicated region
    $region104: #{forward.8} parent=1 // pred_check
      _
    $region105: #{forward.8} parent=1 // pred_check_branch
      %816 = sbr.rel (0) target = $region107
    $region106: #{forward.8} parent=1 // pred_region
      _
    $region107: #{forward.8} parent=1 // pred_fallthru
      _

// kernel: forward.9
$region0: #{forward.9}
  #allocation0 [shape = 'u32[]', space=smem, size = 0x4, offset = 0x4, fixed_abs, tag = 'smem constant byte address 0x4 - core index']
  #allocation1 [shape = 'u32[72,128]{1,0:T(1,128)}', space=vmem, size = 0x9000, scoped, tag = 'internal scratch']
  %s0 = inlined_call_operand.vmem [shape: bf16[1,32,32], index: 0, kind: input, shape index: {}, may-alias: {0,1}]
  %s1 = inlined_call_operand.vmem [shape: bf16[1,32,32], index: 1, kind: input, shape index: {}, may-alias: {0,1}]
  %s2 = inlined_call_operand.vmem [shape: bf16[32,64], index: 2, kind: input, shape index: {}]
  %s3 = inlined_call_operand.vmem [shape: bf16[64,64], index: 3, kind: input, shape index: {}]
  %s4 = inlined_call_operand.vmem [shape: bf16[64,64], index: 4, kind: input, shape index: {}]
  %s5 = inlined_call_operand.vmem [shape: bf16[128,64], index: 5, kind: input, shape index: {}]
  %s6 = inlined_call_operand.vmem [shape: f32[1,256], index: 6, kind: input, shape index: {}]
  %s7 = inlined_call_operand.vmem [shape: bf16[16,256], index: 7, kind: output, shape index: {}]
  %s8 = sld [smem:[#allocation0]]
  $region38: #{forward.9} parent=0
    _
  %s10 = ssub.s32 1, %s8
  %s11 = scalar_select 0, %s10, %s8
  // Predicated region
  $region2: #{forward.9} parent=0 // pred_check
    _
  $region3: #{forward.9} parent=0 // pred_check_branch
    %13 = sbr.rel (0) target = $region5
  $region4: #{forward.9} parent=0 // pred_region
    _
  $region5: #{forward.9} parent=0 // pred_fallthru
    _
  // Predicated region
  $region6: #{forward.9} parent=0 // pred_check
    _
  $region7: #{forward.9} parent=0 // pred_check_branch
    %15 = sbr.rel (0) target = $region9
  $region8: #{forward.9} parent=0 // pred_region
    %s16 = sadd.s32 0, 1
    %s17 = smul.u32 2, %s16
    %p18 = scmp.lt.s32.totalorder %s17, 3
    %s19 = scalar_select %p18, %s17, 3
    %s20 = smul.addr %s19, 4
    %s21 = scalar_lea.vmem %s1, %s20
    %s22 = sadd.s32 0, 1
    %s23 = smul.u32 2, %s22
  $region9: #{forward.9} parent=0 // pred_fallthru
    _
  // Predicated region
  $region10: #{forward.9} parent=0 // pred_check
    _
  $region11: #{forward.9} parent=0 // pred_check_branch
    %25 = sbr.rel (0) target = $region13
  $region12: #{forward.9} parent=0 // pred_region
    _
  $region13: #{forward.9} parent=0 // pred_fallthru
    _
  // Predicated region
  $region14: #{forward.9} parent=0 // pred_check
    _
  $region15: #{forward.9} parent=0 // pred_check_branch
    %27 = sbr.rel (0) target = $region17
  $region16: #{forward.9} parent=0 // pred_region
    _
  $region17: #{forward.9} parent=0 // pred_fallthru
    _
  // Predicated region
  $region18: #{forward.9} parent=0 // pred_check
    _
  $region19: #{forward.9} parent=0 // pred_check_branch
    %29 = sbr.rel (0) target = $region21
  $region20: #{forward.9} parent=0 // pred_region
    _
  $region21: #{forward.9} parent=0 // pred_fallthru
    _
  // Predicated region
  $region22: #{forward.9} parent=0 // pred_check
    _
  $region23: #{forward.9} parent=0 // pred_check_branch
    %31 = sbr.rel (0) target = $region25
  $region24: #{forward.9} parent=0 // pred_region
    _
  $region25: #{forward.9} parent=0 // pred_fallthru
    _
  // Predicated region
  $region26: #{forward.9} parent=0 // pred_check
    _
  $region27: #{forward.9} parent=0 // pred_check_branch
    %33 = sbr.rel (0) target = $region29
  $region28: #{forward.9} parent=0 // pred_region
    _
  $region29: #{forward.9} parent=0 // pred_fallthru
    _
  %s34 = sadd.s32 0, 1
  %s35 = smul.u32 2, %s34
  %p36 = scmp.lt.s32.totalorder %s35, 3
  %s37 = scalar_select %p36, %s35, 3
  %s38 = smul.addr %s37, 4
  %s39 = scalar_lea.vmem %s1, %s38
  %s40 = sadd.s32 0, 1
  %s41 = smul.u32 2, %s40
  %p42 = scmp.lt.s32.totalorder %s41, 3
  %s43 = scalar_select %p42, %s41, 3
  %s44 = smul.addr %s43, 4
  %s45 = scalar_lea.vmem %s1, %s44
  %s46 = sadd.s32 0, 1
  %s47 = smul.u32 2, %s46
  %v49 = vld [vmem:[%s0] sm:$0xf]
  %v50 = vld [vmem:[%s0 + $0x4] sm:$0xf]
  %v51 = vld [vmem:[%s45] sm:$0xf]
  %v52 = vld [vmem:[%s45 + $0x4] sm:$0xf]
  %v55 = vunpack.c.l.b16 %v49
  %v56 = vunpack.c.l.b16 %v50
  %v57 = vpack.c.b16 %v56, %v55
  %v60 = vunpack.c.l.b16 %v51
  %v61 = vunpack.c.l.b16 %v52
  %v62 = vpack.c.b16 %v61, %v60
  %v63 = vld [vmem:[%s2] sm:$0xf]
  %v64 = vld [vmem:[%s2 + $0x4] sm:$0xf]
  %v65 = vld [vmem:[%s2 + $0x8] sm:$0xf]
  %v66 = vld [vmem:[%s2 + $0xc] sm:$0xf]
  %v71 = vunpack.c.l.b16 %v63
  %v72 = vunpack.c.l.b16 %v64
  %v73 = vunpack.c.l.b16 %v65
  %v74 = vunpack.c.l.b16 %v66
  %v75 = vpack.c.b16 %v72, %v71
  %v76 = vpack.c.b16 %v74, %v73
  %vm79 = vcmask 261120
  %v81 = vsel %vm79, %v57, 0
  %83 = vmatpush.bf16.msra.mxu0 0
  %84 = vmatpush.bf16.msra.mxu0 0
  %85 = vmatpush.bf16.msra.mxu0 0
  %86 = vmatpush.bf16.msra.mxu0 0
  %87 = vmatpush.bf16.msra.mxu0 0
  %88 = vmatpush.bf16.msra.mxu0 0
  %89 = vmatpush.bf16.msra.mxu0 %v76
  %90 = vmatpush.bf16.msra.mxu0 %v75
  %91 = vmatmul.bf16.gmra.mxu0 %v81
  %v92 = vpop.f32.mrf.mxu0
  %v93 = vadd.f32 0.0, %v92
  %v94 = vpop.f32.mrf.mxu0
  %v95 = vadd.f32 0.0, %v94
  %96 = vdwg.mxu0
  %v97 = vshrl.u32 %v57, 16
  %v99 = vrot.slane %v97, 7
  %v100 = vshll.u32 %v57, 16
  %v102 = vor.u32 %v99, %v100
  %103 = vrot.lane.b32.xlu0 %v102, 32
  %v104 = vpop.permute.xlu0 %103
  %105 = vrot.lane.b32.xlu0 %v99, 32
  %v106 = vpop.permute.xlu0 %105
  %v108 = vsel %vm79, %v57, %v104
  %v111 = vsel %vm79, %v62, %v106
  %v112 = vld [vmem:[%s3] sm:$0xf]
  %v113 = vld [vmem:[%s3 + $0x4] sm:$0xf]
  %v114 = vld [vmem:[%s3 + $0x8] sm:$0xf]
  %v115 = vld [vmem:[%s3 + $0xc] sm:$0xf]
  %v116 = vld [vmem:[%s3 + $0x10] sm:$0xf]
  %v117 = vld [vmem:[%s3 + $0x14] sm:$0xf]
  %v118 = vld [vmem:[%s3 + $0x18] sm:$0xf]
  %v119 = vld [vmem:[%s3 + $0x1c] sm:$0xf]
  %vm120 = vsmask.f32 7424
  %v121 = vshrl.u32 %v108, 16
  %v123 = vshll.u32 %v108, 16
  %v125 = vrot.slane %v123, 1
  %v126 = vor.u32 %v121, %v125
  %v127 = vshll.u32 %v111, 16
  %v129 = vrot.slane %v127, 1
  %v130 = vsel %vm120, %v126, %v129
  %v139 = vunpack.c.l.b16 %v112
  %v140 = vunpack.c.l.b16 %v113
  %v141 = vunpack.c.l.b16 %v114
  %v142 = vunpack.c.l.b16 %v115
  %v143 = vunpack.c.l.b16 %v116
  %v144 = vunpack.c.l.b16 %v117
  %v145 = vunpack.c.l.b16 %v118
  %v146 = vunpack.c.l.b16 %v119
  %v147 = vpack.c.b16 %v140, %v139
  %v148 = vpack.c.b16 %v142, %v141
  %v149 = vpack.c.b16 %v144, %v143
  %v150 = vpack.c.b16 %v146, %v145
  %vm155 = vcmask 523264
  %v157 = vsel %vm155, %v130, 0
  %159 = vmatpush.bf16.msra.mxu0 0
  %160 = vmatpush.bf16.msra.mxu0 0
  %161 = vmatpush.bf16.msra.mxu0 0
  %162 = vmatpush.bf16.msra.mxu0 0
  %163 = vmatpush.bf16.msra.mxu0 %v150
  %164 = vmatpush.bf16.msra.mxu0 %v149
  %165 = vmatpush.bf16.msra.mxu0 %v148
  %166 = vmatpush.bf16.msra.mxu0 %v147
  %167 = vmatmul.bf16.gmra.mxu0 %v157
  %v168 = vpop.f32.mrf.mxu0
  %v169 = vadd.f32 0.0, %v168
  %v170 = vpop.f32.mrf.mxu0
  %v171 = vadd.f32 0.0, %v170
  %172 = vdwg.mxu0
  %v173 = vrot.slane %v57, 7
  %174 = vrot.lane.b32.xlu0 %v173, 32
  %v175 = vpop.permute.xlu0 %174
  %v177 = vsel %vm79, %v57, %v175
  %v178 = vsel %vm79, %v62, %v175
  %v179 = vld [vmem:[%s4] sm:$0xf]
  %v180 = vld [vmem:[%s4 + $0x4] sm:$0xf]
  %v181 = vld [vmem:[%s4 + $0x8] sm:$0xf]
  %v182 = vld [vmem:[%s4 + $0xc] sm:$0xf]
  %v183 = vld [vmem:[%s4 + $0x10] sm:$0xf]
  %v184 = vld [vmem:[%s4 + $0x14] sm:$0xf]
  %v185 = vld [vmem:[%s4 + $0x18] sm:$0xf]
  %v186 = vld [vmem:[%s4 + $0x1c] sm:$0xf]
  %vm189 = vcmask 1046528
  %v190 = vrot.slane %v177, 1
  %v191 = vrot.slane %v178, 1
  %v192 = vsel %vm189, %v190, %v191
  %v201 = vunpack.c.l.b16 %v179
  %v202 = vunpack.c.l.b16 %v180
  %v203 = vunpack.c.l.b16 %v181
  %v204 = vunpack.c.l.b16 %v182
  %v205 = vunpack.c.l.b16 %v183
  %v206 = vunpack.c.l.b16 %v184
  %v207 = vunpack.c.l.b16 %v185
  %v208 = vunpack.c.l.b16 %v186
  %v209 = vpack.c.b16 %v202, %v201
  %v210 = vpack.c.b16 %v204, %v203
  %v211 = vpack.c.b16 %v206, %v205
  %v212 = vpack.c.b16 %v208, %v207
  %v218 = vsel %vm155, %v192, 0
  %220 = vmatpush.bf16.msra.mxu0 0
  %221 = vmatpush.bf16.msra.mxu0 0
  %222 = vmatpush.bf16.msra.mxu0 0
  %223 = vmatpush.bf16.msra.mxu0 0
  %224 = vmatpush.bf16.msra.mxu0 %v212
  %225 = vmatpush.bf16.msra.mxu0 %v211
  %226 = vmatpush.bf16.msra.mxu0 %v210
  %227 = vmatpush.bf16.msra.mxu0 %v209
  %228 = vmatmul.bf16.gmra.mxu0 %v218
  %v229 = vpop.f32.mrf.mxu0
  %v230 = vadd.f32 0.0, %v229
  %v231 = vpop.f32.mrf.mxu0
  %v232 = vadd.f32 0.0, %v231
  %233 = vdwg.mxu0
  %vm234 = vsmask.f32 256
  %v235 = vshrl.u32 %v62, 16
  %v237 = vrot.slane %v235, 7
  %v238 = vshll.u32 %v62, 16
  %v240 = vor.u32 %v237, %v238
  %v241 = vsel %vm234, %v99, %v240
  %242 = vrot.lane.b32.xlu0 %v241, 32
  %v243 = vpop.permute.xlu0 %242
  %vm244 = vcmask 1040384
  %v245 = vrot.slane %v62, 7
  %v246 = vsel %vm244, %v173, %v245
  %247 = vrot.lane.b32.xlu0 %v173, 64
  %v248 = vpop.permute.xlu0 %247
  %249 = vrot.lane.b32.xlu0 %v246, 64
  %v250 = vpop.permute.xlu0 %249
  %v251 = vrot.slane %v97, 6
  %v252 = vrot.slane %v100, 7
  %v253 = vor.u32 %v251, %v252
  %254 = vrot.lane.b32.xlu0 %v253, 96
  %v255 = vpop.permute.xlu0 %254
  %v257 = vsel %vm79, %v62, %v243
  %v259 = vsel %vm155, %v108, %v248
  %v261 = vsel %vm155, %v257, %v250
  %vm262 = vcmask 785408
  %v264 = vsel %vm262, %v259, %v255
  %v265 = vsel %vm262, %v261, %v255
  %v266 = vld [vmem:[%s5] sm:$0xf]
  %v267 = vld [vmem:[%s5 + $0x4] sm:$0xf]
  %v268 = vld [vmem:[%s5 + $0x8] sm:$0xf]
  %v269 = vld [vmem:[%s5 + $0xc] sm:$0xf]
  %v270 = vld [vmem:[%s5 + $0x10] sm:$0xf]
  %v271 = vld [vmem:[%s5 + $0x14] sm:$0xf]
  %v272 = vld [vmem:[%s5 + $0x18] sm:$0xf]
  %v273 = vld [vmem:[%s5 + $0x1c] sm:$0xf]
  %v274 = vld [vmem:[%s5 + $0x20] sm:$0xf]
  %v275 = vld [vmem:[%s5 + $0x24] sm:$0xf]
  %v276 = vld [vmem:[%s5 + $0x28] sm:$0xf]
  %v277 = vld [vmem:[%s5 + $0x2c] sm:$0xf]
  %v278 = vld [vmem:[%s5 + $0x30] sm:$0xf]
  %v279 = vld [vmem:[%s5 + $0x34] sm:$0xf]
  %v280 = vld [vmem:[%s5 + $0x38] sm:$0xf]
  %v281 = vld [vmem:[%s5 + $0x3c] sm:$0xf]
  %vm282 = vsmask.f32 6400
  %v283 = vshrl.u32 %v264, 16
  %v285 = vrot.slane %v283, 1
  %v286 = vshll.u32 %v264, 16
  %v288 = vrot.slane %v286, 2
  %v289 = vor.u32 %v285, %v288
  %v290 = vshrl.u32 %v265, 16
  %v292 = vrot.slane %v290, 1
  %v293 = vshll.u32 %v265, 16
  %v295 = vrot.slane %v293, 2
  %v296 = vor.u32 %v292, %v295
  %v297 = vsel %vm282, %v289, %v296
  %v315 = vunpack.c.l.b16 %v266
  %v316 = vunpack.c.l.b16 %v267
  %v317 = vunpack.c.l.b16 %v268
  %v318 = vunpack.c.l.b16 %v269
  %v319 = vunpack.c.l.b16 %v270
  %v320 = vunpack.c.l.b16 %v271
  %v321 = vunpack.c.l.b16 %v272
  %v322 = vunpack.c.l.b16 %v273
  %v323 = vunpack.c.l.b16 %v274
  %v324 = vunpack.c.l.b16 %v275
  %v325 = vunpack.c.l.b16 %v276
  %v326 = vunpack.c.l.b16 %v277
  %v327 = vunpack.c.l.b16 %v278
  %v328 = vunpack.c.l.b16 %v279
  %v329 = vunpack.c.l.b16 %v280
  %v330 = vunpack.c.l.b16 %v281
  %v331 = vpack.c.b16 %v316, %v315
  %v332 = vpack.c.b16 %v318, %v317
  %v333 = vpack.c.b16 %v320, %v319
  %v334 = vpack.c.b16 %v322, %v321
  %v335 = vpack.c.b16 %v324, %v323
  %v336 = vpack.c.b16 %v326, %v325
  %v337 = vpack.c.b16 %v328, %v327
  %v338 = vpack.c.b16 %v330, %v329
  %347 = vmatpush.bf16.msra.mxu0 %v338
  %348 = vmatpush.bf16.msra.mxu0 %v337
  %349 = vmatpush.bf16.msra.mxu0 %v336
  %350 = vmatpush.bf16.msra.mxu0 %v335
  %351 = vmatpush.bf16.msra.mxu0 %v334
  %352 = vmatpush.bf16.msra.mxu0 %v333
  %353 = vmatpush.bf16.msra.mxu0 %v332
  %354 = vmatpush.bf16.msra.mxu0 %v331
  %355 = vmatmul.bf16.gmra.mxu0 %v297
  %v356 = vpop.f32.mrf.mxu0
  %v357 = vadd.f32 0.0, %v356
  %v358 = vpop.f32.mrf.mxu0
  %v359 = vadd.f32 0.0, %v358
  %360 = vdwg.mxu0
  %363 = vrot.lane.b32.xlu0 %v169, 64
  %v364 = vpop.permute.xlu0 %363
  %365 = vrot.lane.b32.xlu0 %v171, 64
  %v366 = vpop.permute.xlu0 %365
  %371 = vrot.lane.b32.xlu0 %v357, 64
  %v372 = vpop.permute.xlu0 %371
  %373 = vrot.lane.b32.xlu0 %v359, 64
  %v374 = vpop.permute.xlu0 %373
  %v377 = vsel %vm155, %v93, %v364
  %v378 = vsel %vm155, %v95, %v366
  %v379 = vsel %vm155, %v230, %v372
  %v380 = vsel %vm155, %v232, %v374
  %v381 = vld [vmem:[%s6] sm:$0x3]
  %v383 = vperm.slane %v381, 0
  %v384 = vperm.slane %v381, 1
  %v387 = vadd.f32 %v377, %v383
  %v388 = vadd.f32 %v379, %v384
  %v389 = vadd.f32 %v378, %v383
  %v390 = vadd.f32 %v380, %v384
  %v391 = vmax.f32 %v387, 0.0
  %v392 = vmax.f32 %v388, 0.0
  %v393 = vmax.f32 %v389, 0.0
  %v394 = vmax.f32 %v390, 0.0
  %v395 = vpack.c.bf16 %v392, %v391
  %v396 = vpack.c.bf16 %v394, %v393
  %397 = vst [vmem:[%s7] sm:$0xff] %v395
  %398 = vst [vmem:[%s7 + $0x8] sm:$0xff] %v396
  // Predicated region
  $region30: #{forward.9} parent=0 // pred_check
    _
  $region31: #{forward.9} parent=0 // pred_check_branch
    %400 = sbr.rel (0) target = $region33
  $region32: #{forward.9} parent=0 // pred_region
    _
  $region33: #{forward.9} parent=0 // pred_fallthru
    _
  // Predicated region
  $region34: #{forward.9} parent=0 // pred_check
    _
  $region35: #{forward.9} parent=0 // pred_check_branch
    %402 = sbr.rel (0) target = $region37
  $region36: #{forward.9} parent=0 // pred_region
    _
  $region37: #{forward.9} parent=0 // pred_fallthru
    _

// kernel: forward.10
$region0: #{forward.10}
  #allocation0 [shape = 'u32[]', space=smem, size = 0x4, offset = 0x4, fixed_abs, tag = 'smem constant byte address 0x4 - core index']
  #allocation1 [shape = 'u32[72,128]{1,0:T(1,128)}', space=vmem, size = 0x9000, scoped, tag = 'internal scratch']
  %s0 = inlined_call_operand.vmem [shape: bf16[1,80,64], index: 0, kind: input, shape index: {}, may-alias: {0,1}]
  %s1 = inlined_call_operand.vmem [shape: bf16[1,80,64], index: 1, kind: input, shape index: {}, may-alias: {0,1}]
  %s2 = inlined_call_operand.vmem [shape: bf16[256,32], index: 2, kind: input, shape index: {}]
  %s3 = inlined_call_operand.vmem [shape: bf16[128,32], index: 3, kind: input, shape index: {}]
  %s4 = inlined_call_operand.vmem [shape: bf16[128,32], index: 4, kind: input, shape index: {}]
  %s5 = inlined_call_operand.vmem [shape: bf16[64,32], index: 5, kind: input, shape index: {}]
  %s6 = inlined_call_operand.vmem [shape: f32[1,128], index: 6, kind: input, shape index: {}]
  %s7 = inlined_call_operand.vmem [shape: bf16[64,128], index: 7, kind: output, shape index: {}]
  %s8 = sld [smem:[#allocation0]]
  $region38: #{forward.10} parent=0
    _
  %s10 = ssub.s32 1, %s8
  %s11 = scalar_select 0, %s10, %s8
  // Predicated region
  $region2: #{forward.10} parent=0 // pred_check
    _
  $region3: #{forward.10} parent=0 // pred_check_branch
    %13 = sbr.rel (0) target = $region5
  $region4: #{forward.10} parent=0 // pred_region
    _
  $region5: #{forward.10} parent=0 // pred_fallthru
    _
  // Predicated region
  $region6: #{forward.10} parent=0 // pred_check
    _
  $region7: #{forward.10} parent=0 // pred_check_branch
    %15 = sbr.rel (0) target = $region9
  $region8: #{forward.10} parent=0 // pred_region
    %s16 = sadd.s32 0, 1
    %s17 = smul.u32 %s16, 4
    %s18 = smul.u32 2, %s17
    %p19 = scmp.lt.s32.totalorder %s18, 9
    %s20 = scalar_select %p19, %s18, 9
    %s21 = smul.addr %s20, 4
    %s22 = scalar_lea.vmem %s1, %s21
    %s23 = sadd.s32 0, 1
    %s24 = smul.u32 %s23, 4
    %s25 = smul.u32 2, %s24
  $region9: #{forward.10} parent=0 // pred_fallthru
    _
  // Predicated region
  $region10: #{forward.10} parent=0 // pred_check
    _
  $region11: #{forward.10} parent=0 // pred_check_branch
    %27 = sbr.rel (0) target = $region13
  $region12: #{forward.10} parent=0 // pred_region
    _
  $region13: #{forward.10} parent=0 // pred_fallthru
    _
  // Predicated region
  $region14: #{forward.10} parent=0 // pred_check
    _
  $region15: #{forward.10} parent=0 // pred_check_branch
    %29 = sbr.rel (0) target = $region17
  $region16: #{forward.10} parent=0 // pred_region
    _
  $region17: #{forward.10} parent=0 // pred_fallthru
    _
  // Predicated region
  $region18: #{forward.10} parent=0 // pred_check
    _
  $region19: #{forward.10} parent=0 // pred_check_branch
    %31 = sbr.rel (0) target = $region21
  $region20: #{forward.10} parent=0 // pred_region
    _
  $region21: #{forward.10} parent=0 // pred_fallthru
    _
  // Predicated region
  $region22: #{forward.10} parent=0 // pred_check
    _
  $region23: #{forward.10} parent=0 // pred_check_branch
    %33 = sbr.rel (0) target = $region25
  $region24: #{forward.10} parent=0 // pred_region
    _
  $region25: #{forward.10} parent=0 // pred_fallthru
    _
  // Predicated region
  $region26: #{forward.10} parent=0 // pred_check
    _
  $region27: #{forward.10} parent=0 // pred_check_branch
    %35 = sbr.rel (0) target = $region29
  $region28: #{forward.10} parent=0 // pred_region
    _
  $region29: #{forward.10} parent=0 // pred_fallthru
    _
  %s36 = sadd.s32 0, 1
  %s37 = smul.u32 %s36, 4
  %s38 = smul.u32 2, %s37
  %p39 = scmp.lt.s32.totalorder %s38, 9
  %s40 = scalar_select %p39, %s38, 9
  %s41 = smul.addr %s40, 4
  %s42 = scalar_lea.vmem %s1, %s41
  %s43 = sadd.s32 0, 1
  %s44 = smul.u32 %s43, 4
  %s45 = smul.u32 2, %s44
  %p46 = scmp.lt.s32.totalorder %s45, 9
  %s47 = scalar_select %p46, %s45, 9
  %s48 = smul.addr %s47, 4
  %s49 = scalar_lea.vmem %s1, %s48
  %s50 = sadd.s32 0, 1
  %s51 = smul.u32 %s50, 4
  %s52 = smul.u32 2, %s51
  %v54 = vld [vmem:[%s0] sm:$0xf]
  %v55 = vld [vmem:[%s0 + $0x4] sm:$0xf]
  %v56 = vld [vmem:[%s0 + $0x8] sm:$0xf]
  %v57 = vld [vmem:[%s0 + $0xc] sm:$0xf]
  %v58 = vld [vmem:[%s0 + $0x10] sm:$0xf]
  %v59 = vld [vmem:[%s0 + $0x14] sm:$0xf]
  %v60 = vld [vmem:[%s0 + $0x18] sm:$0xf]
  %v61 = vld [vmem:[%s0 + $0x1c] sm:$0xf]
  %v62 = vld [vmem:[%s49] sm:$0xf]
  %v63 = vld [vmem:[%s49 + $0x4] sm:$0xf]
  %v72 = vunpack.c.l.b16 %v54
  %v73 = vunpack.c.l.b16 %v55
  %v74 = vunpack.c.l.b16 %v56
  %v75 = vunpack.c.l.b16 %v57
  %v76 = vunpack.c.l.b16 %v58
  %v77 = vunpack.c.l.b16 %v59
  %v78 = vunpack.c.l.b16 %v60
  %v79 = vunpack.c.l.b16 %v61
  %v80 = vpack.c.b16 %v73, %v72
  %v81 = vpack.c.b16 %v75, %v74
  %v82 = vpack.c.b16 %v77, %v76
  %v83 = vpack.c.b16 %v79, %v78
  %v86 = vunpack.c.l.b16 %v62
  %v87 = vunpack.c.l.b16 %v63
  %v88 = vpack.c.b16 %v87, %v86
  %vm89 = vsmask.f32 256
  %v91 = vshrl.u32 %v80, 16
  %v93 = vrot.slane %v91, 7
  %v94 = vshll.u32 %v80, 16
  %v96 = vor.u32 %v93, %v94
  %v98 = vshrl.u32 %v81, 16
  %v100 = vrot.slane %v98, 7
  %v101 = vshll.u32 %v81, 16
  %v103 = vor.u32 %v100, %v101
  %v104 = vsel %vm89, %v93, %v103
  %v106 = vshrl.u32 %v82, 16
  %v108 = vrot.slane %v106, 7
  %v109 = vshll.u32 %v82, 16
  %v111 = vor.u32 %v108, %v109
  %v112 = vsel %vm89, %v100, %v111
  %v114 = vshrl.u32 %v83, 16
  %v116 = vrot.slane %v114, 7
  %v117 = vshll.u32 %v83, 16
  %v119 = vor.u32 %v116, %v117
  %v120 = vsel %vm89, %v108, %v119
  %v122 = vshrl.u32 %v88, 16
  %v124 = vrot.slane %v122, 7
  %v125 = vshll.u32 %v88, 16
  %v127 = vor.u32 %v124, %v125
  %v128 = vsel %vm89, %v116, %v127
  %129 = vrot.lane.b32.xlu0 %v96, 64
  %v130 = vpop.permute.xlu0 %129
  %131 = vrot.lane.b32.xlu0 %v104, 64
  %v132 = vpop.permute.xlu0 %131
  %133 = vrot.lane.b32.xlu0 %v112, 64
  %v134 = vpop.permute.xlu0 %133
  %135 = vrot.lane.b32.xlu0 %v120, 64
  %v136 = vpop.permute.xlu0 %135
  %137 = vrot.lane.b32.xlu0 %v128, 64
  %v138 = vpop.permute.xlu0 %137
  %vm139 = vsmask.f32 2304
  %v140 = vrot.slane %v91, 5
  %v141 = vrot.slane %v94, 6
  %v142 = vor.u32 %v140, %v141
  %v143 = vrot.slane %v98, 5
  %v144 = vrot.slane %v101, 6
  %v145 = vor.u32 %v143, %v144
  %v146 = vsel %vm139, %v142, %v145
  %v147 = vrot.slane %v106, 5
  %v148 = vrot.slane %v109, 6
  %v149 = vor.u32 %v147, %v148
  %v150 = vsel %vm139, %v145, %v149
  %v151 = vrot.slane %v114, 5
  %v152 = vrot.slane %v117, 6
  %v153 = vor.u32 %v151, %v152
  %v154 = vsel %vm139, %v149, %v153
  %v155 = vrot.slane %v125, 6
  %v156 = vsel %vm139, %v153, %v155
  %vm157 = vcmask 1042432
  %v158 = vrot.slane %v80, 5
  %v159 = vrot.slane %v81, 5
  %v160 = vsel %vm157, %v158, %v159
  %v161 = vrot.slane %v82, 5
  %v162 = vsel %vm157, %v159, %v161
  %v163 = vrot.slane %v83, 5
  %v164 = vsel %vm157, %v161, %v163
  %165 = vrot.lane.b32.xlu0 %v158, 64
  %v166 = vpop.permute.xlu0 %165
  %167 = vrot.lane.b32.xlu0 %v160, 64
  %v168 = vpop.permute.xlu0 %167
  %169 = vrot.lane.b32.xlu0 %v162, 64
  %v170 = vpop.permute.xlu0 %169
  %171 = vrot.lane.b32.xlu0 %v164, 64
  %v172 = vpop.permute.xlu0 %171
  %173 = vrot.lane.b32.xlu0 %v163, 64
  %v174 = vpop.permute.xlu0 %173
  %vm175 = vcmask 523264
  %v177 = vsel %vm175, %v80, %v130
  %v179 = vsel %vm175, %v81, %v132
  %v181 = vsel %vm175, %v82, %v134
  %v183 = vsel %vm175, %v83, %v136
  %v185 = vsel %vm175, %v88, %v138
  %v188 = vsel %vm175, %v142, %v166
  %v191 = vsel %vm175, %v146, %v168
  %v194 = vsel %vm175, %v150, %v170
  %v197 = vsel %vm175, %v154, %v172
  %v200 = vsel %vm175, %v156, %v174
  %v201 = vld [vmem:[%s2] sm:$0xf]
  %v202 = vld [vmem:[%s2 + $0x4] sm:$0xf]
  %v203 = vld [vmem:[%s2 + $0x8] sm:$0xf]
  %v204 = vld [vmem:[%s2 + $0xc] sm:$0xf]
  %v205 = vld [vmem:[%s2 + $0x10] sm:$0xf]
  %v206 = vld [vmem:[%s2 + $0x14] sm:$0xf]
  %v207 = vld [vmem:[%s2 + $0x18] sm:$0xf]
  %v208 = vld [vmem:[%s2 + $0x1c] sm:$0xf]
  %v209 = vld [vmem:[%s2 + $0x20] sm:$0xf]
  %v210 = vld [vmem:[%s2 + $0x24] sm:$0xf]
  %v211 = vld [vmem:[%s2 + $0x28] sm:$0xf]
  %v212 = vld [vmem:[%s2 + $0x2c] sm:$0xf]
  %v213 = vld [vmem:[%s2 + $0x30] sm:$0xf]
  %v214 = vld [vmem:[%s2 + $0x34] sm:$0xf]
  %v215 = vld [vmem:[%s2 + $0x38] sm:$0xf]
  %v216 = vld [vmem:[%s2 + $0x3c] sm:$0xf]
  %v217 = vld [vmem:[%s2 + $0x40] sm:$0xf]
  %v218 = vld [vmem:[%s2 + $0x44] sm:$0xf]
  %v219 = vld [vmem:[%s2 + $0x48] sm:$0xf]
  %v220 = vld [vmem:[%s2 + $0x4c] sm:$0xf]
  %v221 = vld [vmem:[%s2 + $0x50] sm:$0xf]
  %v222 = vld [vmem:[%s2 + $0x54] sm:$0xf]
  %v223 = vld [vmem:[%s2 + $0x58] sm:$0xf]
  %v224 = vld [vmem:[%s2 + $0x5c] sm:$0xf]
  %v225 = vld [vmem:[%s2 + $0x60] sm:$0xf]
  %v226 = vld [vmem:[%s2 + $0x64] sm:$0xf]
  %v227 = vld [vmem:[%s2 + $0x68] sm:$0xf]
  %v228 = vld [vmem:[%s2 + $0x6c] sm:$0xf]
  %v229 = vld [vmem:[%s2 + $0x70] sm:$0xf]
  %v230 = vld [vmem:[%s2 + $0x74] sm:$0xf]
  %v231 = vld [vmem:[%s2 + $0x78] sm:$0xf]
  %v232 = vld [vmem:[%s2 + $0x7c] sm:$0xf]
  %vm243 = vcmask 1044480
  %v244 = vrot.slane %v177, 3
  %v245 = vrot.slane %v179, 3
  %v246 = vsel %vm243, %v244, %v245
  %v247 = vrot.slane %v188, 3
  %v248 = vrot.slane %v191, 3
  %v249 = vsel %vm243, %v247, %v248
  %v250 = vrot.slane %v181, 3
  %v251 = vsel %vm243, %v245, %v250
  %v252 = vrot.slane %v194, 3
  %v253 = vsel %vm243, %v248, %v252
  %v254 = vrot.slane %v183, 3
  %v255 = vsel %vm243, %v250, %v254
  %v256 = vrot.slane %v197, 3
  %v257 = vsel %vm243, %v252, %v256
  %v258 = vrot.slane %v185, 3
  %v259 = vsel %vm243, %v254, %v258
  %v260 = vrot.slane %v200, 3
  %v261 = vsel %vm243, %v256, %v260
  %v302 = vunpack.c.l.b16 %v201
  %v303 = vunpack.c.l.b16 %v202
  %v304 = vunpack.c.l.b16 %v203
  %v305 = vunpack.c.l.b16 %v204
  %v306 = vunpack.c.l.b16 %v205
  %v307 = vunpack.c.l.b16 %v206
  %v308 = vunpack.c.l.b16 %v207
  %v309 = vunpack.c.l.b16 %v208
  %v310 = vunpack.c.l.b16 %v209
  %v311 = vunpack.c.l.b16 %v210
  %v312 = vunpack.c.l.b16 %v211
  %v313 = vunpack.c.l.b16 %v212
  %v314 = vunpack.c.l.b16 %v213
  %v315 = vunpack.c.l.b16 %v214
  %v316 = vunpack.c.l.b16 %v215
  %v317 = vunpack.c.l.b16 %v216
  %v318 = vunpack.c.l.b16 %v217
  %v319 = vunpack.c.l.b16 %v218
  %v320 = vunpack.c.l.b16 %v219
  %v321 = vunpack.c.l.b16 %v220
  %v322 = vunpack.c.l.b16 %v221
  %v323 = vunpack.c.l.b16 %v222
  %v324 = vunpack.c.l.b16 %v223
  %v325 = vunpack.c.l.b16 %v224
  %v326 = vunpack.c.l.b16 %v225
  %v327 = vunpack.c.l.b16 %v226
  %v328 = vunpack.c.l.b16 %v227
  %v329 = vunpack.c.l.b16 %v228
  %v330 = vunpack.c.l.b16 %v229
  %v331 = vunpack.c.l.b16 %v230
  %v332 = vunpack.c.l.b16 %v231
  %v333 = vunpack.c.l.b16 %v232
  %v334 = vpack.c.b16 %v303, %v302
  %v335 = vpack.c.b16 %v305, %v304
  %v336 = vpack.c.b16 %v307, %v306
  %v337 = vpack.c.b16 %v309, %v308
  %v338 = vpack.c.b16 %v311, %v310
  %v339 = vpack.c.b16 %v313, %v312
  %v340 = vpack.c.b16 %v315, %v314
  %v341 = vpack.c.b16 %v317, %v316
  %v342 = vpack.c.b16 %v319, %v318
  %v343 = vpack.c.b16 %v321, %v320
  %v344 = vpack.c.b16 %v323, %v322
  %v345 = vpack.c.b16 %v325, %v324
  %v346 = vpack.c.b16 %v327, %v326
  %v347 = vpack.c.b16 %v329, %v328
  %v348 = vpack.c.b16 %v331, %v330
  %v349 = vpack.c.b16 %v333, %v332
  %366 = vmatpush.bf16.msra.mxu0 %v341
  %367 = vmatpush.bf16.msra.mxu0 %v340
  %368 = vmatpush.bf16.msra.mxu0 %v339
  %369 = vmatpush.bf16.msra.mxu0 %v338
  %370 = vmatpush.bf16.msra.mxu0 %v337
  %371 = vmatpush.bf16.msra.mxu0 %v336
  %372 = vmatpush.bf16.msra.mxu0 %v335
  %373 = vmatpush.bf16.msra.mxu0 %v334
  %374 = vmatmul.bf16.gmra.mxu0 %v246
  %v375 = vpop.f32.mrf.mxu0
  %v376 = vadd.f32 0.0, %v375
  %v377 = vpop.f32.mrf.mxu0
  %v378 = vadd.f32 0.0, %v377
  %379 = vmatmul.bf16.gmra.mxu0 %v251
  %v380 = vpop.f32.mrf.mxu0
  %v381 = vadd.f32 0.0, %v380
  %v382 = vpop.f32.mrf.mxu0
  %v383 = vadd.f32 0.0, %v382
  %384 = vmatmul.bf16.gmra.mxu0 %v255
  %v385 = vpop.f32.mrf.mxu0
  %v386 = vadd.f32 0.0, %v385
  %v387 = vpop.f32.mrf.mxu0
  %v388 = vadd.f32 0.0, %v387
  %389 = vmatmul.bf16.gmra.mxu0 %v259
  %v390 = vpop.f32.mrf.mxu0
  %v391 = vadd.f32 0.0, %v390
  %v392 = vpop.f32.mrf.mxu0
  %v393 = vadd.f32 0.0, %v392
  %394 = vdwg.mxu0
  %395 = vmatpush.bf16.msra.mxu0 %v349
  %396 = vmatpush.bf16.msra.mxu0 %v348
  %397 = vmatpush.bf16.msra.mxu0 %v347
  %398 = vmatpush.bf16.msra.mxu0 %v346
  %399 = vmatpush.bf16.msra.mxu0 %v345
  %400 = vmatpush.bf16.msra.mxu0 %v344
  %401 = vmatpush.bf16.msra.mxu0 %v343
  %402 = vmatpush.bf16.msra.mxu0 %v342
  %403 = vmatmul.bf16.gmra.mxu0 %v249
  %v404 = vpop.f32.mrf.mxu0
  %v405 = vadd.f32 %v376, %v404
  %v406 = vpop.f32.mrf.mxu0
  %v407 = vadd.f32 %v378, %v406
  %408 = vmatmul.bf16.gmra.mxu0 %v253
  %v409 = vpop.f32.mrf.mxu0
  %v410 = vadd.f32 %v381, %v409
  %v411 = vpop.f32.mrf.mxu0
  %v412 = vadd.f32 %v383, %v411
  %413 = vmatmul.bf16.gmra.mxu0 %v257
  %v414 = vpop.f32.mrf.mxu0
  %v415 = vadd.f32 %v386, %v414
  %v416 = vpop.f32.mrf.mxu0
  %v417 = vadd.f32 %v388, %v416
  %418 = vmatmul.bf16.gmra.mxu0 %v261
  %v419 = vpop.f32.mrf.mxu0
  %v420 = vadd.f32 %v391, %v419
  %v421 = vpop.f32.mrf.mxu0
  %v422 = vadd.f32 %v393, %v421
  %423 = vdwg.mxu0
  %424 = vrot.lane.b32.xlu0 %v142, 64
  %v425 = vpop.permute.xlu0 %424
  %426 = vrot.lane.b32.xlu0 %v146, 64
  %v427 = vpop.permute.xlu0 %426
  %428 = vrot.lane.b32.xlu0 %v150, 64
  %v429 = vpop.permute.xlu0 %428
  %430 = vrot.lane.b32.xlu0 %v154, 64
  %v431 = vpop.permute.xlu0 %430
  %432 = vrot.lane.b32.xlu0 %v156, 64
  %v433 = vpop.permute.xlu0 %432
  %v435 = vsel %vm175, %v80, %v425
  %v437 = vsel %vm175, %v81, %v427
  %v439 = vsel %vm175, %v82, %v429
  %v441 = vsel %vm175, %v83, %v431
  %v443 = vsel %vm175, %v88, %v433
  %v444 = vld [vmem:[%s3] sm:$0xf]
  %v445 = vld [vmem:[%s3 + $0x4] sm:$0xf]
  %v446 = vld [vmem:[%s3 + $0x8] sm:$0xf]
  %v447 = vld [vmem:[%s3 + $0xc] sm:$0xf]
  %v448 = vld [vmem:[%s3 + $0x10] sm:$0xf]
  %v449 = vld [vmem:[%s3 + $0x14] sm:$0xf]
  %v450 = vld [vmem:[%s3 + $0x18] sm:$0xf]
  %v451 = vld [vmem:[%s3 + $0x1c] sm:$0xf]
  %v452 = vld [vmem:[%s3 + $0x20] sm:$0xf]
  %v453 = vld [vmem:[%s3 + $0x24] sm:$0xf]
  %v454 = vld [vmem:[%s3 + $0x28] sm:$0xf]
  %v455 = vld [vmem:[%s3 + $0x2c] sm:$0xf]
  %v456 = vld [vmem:[%s3 + $0x30] sm:$0xf]
  %v457 = vld [vmem:[%s3 + $0x34] sm:$0xf]
  %v458 = vld [vmem:[%s3 + $0x38] sm:$0xf]
  %v459 = vld [vmem:[%s3 + $0x3c] sm:$0xf]
  %v465 = vrot.slane %v435, 3
  %v466 = vrot.slane %v437, 3
  %v467 = vsel %vm243, %v465, %v466
  %v468 = vrot.slane %v439, 3
  %v469 = vsel %vm243, %v466, %v468
  %v470 = vrot.slane %v441, 3
  %v471 = vsel %vm243, %v468, %v470
  %v472 = vrot.slane %v443, 3
  %v473 = vsel %vm243, %v470, %v472
  %v494 = vunpack.c.l.b16 %v444
  %v495 = vunpack.c.l.b16 %v445
  %v496 = vunpack.c.l.b16 %v446
  %v497 = vunpack.c.l.b16 %v447
  %v498 = vunpack.c.l.b16 %v448
  %v499 = vunpack.c.l.b16 %v449
  %v500 = vunpack.c.l.b16 %v450
  %v501 = vunpack.c.l.b16 %v451
  %v502 = vunpack.c.l.b16 %v452
  %v503 = vunpack.c.l.b16 %v453
  %v504 = vunpack.c.l.b16 %v454
  %v505 = vunpack.c.l.b16 %v455
  %v506 = vunpack.c.l.b16 %v456
  %v507 = vunpack.c.l.b16 %v457
  %v508 = vunpack.c.l.b16 %v458
  %v509 = vunpack.c.l.b16 %v459
  %v510 = vpack.c.b16 %v495, %v494
  %v511 = vpack.c.b16 %v497, %v496
  %v512 = vpack.c.b16 %v499, %v498
  %v513 = vpack.c.b16 %v501, %v500
  %v514 = vpack.c.b16 %v503, %v502
  %v515 = vpack.c.b16 %v505, %v504
  %v516 = vpack.c.b16 %v507, %v506
  %v517 = vpack.c.b16 %v509, %v508
  %526 = vmatpush.bf16.msra.mxu0 %v517
  %527 = vmatpush.bf16.msra.mxu0 %v516
  %528 = vmatpush.bf16.msra.mxu0 %v515
  %529 = vmatpush.bf16.msra.mxu0 %v514
  %530 = vmatpush.bf16.msra.mxu0 %v513
  %531 = vmatpush.bf16.msra.mxu0 %v512
  %532 = vmatpush.bf16.msra.mxu0 %v511
  %533 = vmatpush.bf16.msra.mxu0 %v510
  %534 = vmatmul.bf16.gmra.mxu0 %v467
  %v535 = vpop.f32.mrf.mxu0
  %v536 = vadd.f32 0.0, %v535
  %v537 = vpop.f32.mrf.mxu0
  %v538 = vadd.f32 0.0, %v537
  %539 = vmatmul.bf16.gmra.mxu0 %v469
  %v540 = vpop.f32.mrf.mxu0
  %v541 = vadd.f32 0.0, %v540
  %v542 = vpop.f32.mrf.mxu0
  %v543 = vadd.f32 0.0, %v542
  %544 = vmatmul.bf16.gmra.mxu0 %v471
  %v545 = vpop.f32.mrf.mxu0
  %v546 = vadd.f32 0.0, %v545
  %v547 = vpop.f32.mrf.mxu0
  %v548 = vadd.f32 0.0, %v547
  %549 = vmatmul.bf16.gmra.mxu0 %v473
  %v550 = vpop.f32.mrf.mxu0
  %v551 = vadd.f32 0.0, %v550
  %v552 = vpop.f32.mrf.mxu0
  %v553 = vadd.f32 0.0, %v552
  %554 = vdwg.mxu0
  %v555 = vld [vmem:[%s4] sm:$0xf]
  %v556 = vld [vmem:[%s4 + $0x4] sm:$0xf]
  %v557 = vld [vmem:[%s4 + $0x8] sm:$0xf]
  %v558 = vld [vmem:[%s4 + $0xc] sm:$0xf]
  %v559 = vld [vmem:[%s4 + $0x10] sm:$0xf]
  %v560 = vld [vmem:[%s4 + $0x14] sm:$0xf]
  %v561 = vld [vmem:[%s4 + $0x18] sm:$0xf]
  %v562 = vld [vmem:[%s4 + $0x1c] sm:$0xf]
  %v563 = vld [vmem:[%s4 + $0x20] sm:$0xf]
  %v564 = vld [vmem:[%s4 + $0x24] sm:$0xf]
  %v565 = vld [vmem:[%s4 + $0x28] sm:$0xf]
  %v566 = vld [vmem:[%s4 + $0x2c] sm:$0xf]
  %v567 = vld [vmem:[%s4 + $0x30] sm:$0xf]
  %v568 = vld [vmem:[%s4 + $0x34] sm:$0xf]
  %v569 = vld [vmem:[%s4 + $0x38] sm:$0xf]
  %v570 = vld [vmem:[%s4 + $0x3c] sm:$0xf]
  %v587 = vunpack.c.l.b16 %v555
  %v588 = vunpack.c.l.b16 %v556
  %v589 = vunpack.c.l.b16 %v557
  %v590 = vunpack.c.l.b16 %v558
  %v591 = vunpack.c.l.b16 %v559
  %v592 = vunpack.c.l.b16 %v560
  %v593 = vunpack.c.l.b16 %v561
  %v594 = vunpack.c.l.b16 %v562
  %v595 = vunpack.c.l.b16 %v563
  %v596 = vunpack.c.l.b16 %v564
  %v597 = vunpack.c.l.b16 %v565
  %v598 = vunpack.c.l.b16 %v566
  %v599 = vunpack.c.l.b16 %v567
  %v600 = vunpack.c.l.b16 %v568
  %v601 = vunpack.c.l.b16 %v569
  %v602 = vunpack.c.l.b16 %v570
  %v603 = vpack.c.b16 %v588, %v587
  %v604 = vpack.c.b16 %v590, %v589
  %v605 = vpack.c.b16 %v592, %v591
  %v606 = vpack.c.b16 %v594, %v593
  %v607 = vpack.c.b16 %v596, %v595
  %v608 = vpack.c.b16 %v598, %v597
  %v609 = vpack.c.b16 %v600, %v599
  %v610 = vpack.c.b16 %v602, %v601
  %619 = vmatpush.bf16.msra.mxu0 %v610
  %620 = vmatpush.bf16.msra.mxu0 %v609
  %621 = vmatpush.bf16.msra.mxu0 %v608
  %622 = vmatpush.bf16.msra.mxu0 %v607
  %623 = vmatpush.bf16.msra.mxu0 %v606
  %624 = vmatpush.bf16.msra.mxu0 %v605
  %625 = vmatpush.bf16.msra.mxu0 %v604
  %626 = vmatpush.bf16.msra.mxu0 %v603
  %627 = vmatmul.bf16.gmra.mxu0 %v246
  %v628 = vpop.f32.mrf.mxu0
  %v629 = vadd.f32 0.0, %v628
  %v630 = vpop.f32.mrf.mxu0
  %v631 = vadd.f32 0.0, %v630
  %632 = vmatmul.bf16.gmra.mxu0 %v251
  %v633 = vpop.f32.mrf.mxu0
  %v634 = vadd.f32 0.0, %v633
  %v635 = vpop.f32.mrf.mxu0
  %v636 = vadd.f32 0.0, %v635
  %637 = vmatmul.bf16.gmra.mxu0 %v255
  %v638 = vpop.f32.mrf.mxu0
  %v639 = vadd.f32 0.0, %v638
  %v640 = vpop.f32.mrf.mxu0
  %v641 = vadd.f32 0.0, %v640
  %642 = vmatmul.bf16.gmra.mxu0 %v259
  %v643 = vpop.f32.mrf.mxu0
  %v644 = vadd.f32 0.0, %v643
  %v645 = vpop.f32.mrf.mxu0
  %v646 = vadd.f32 0.0, %v645
  %647 = vdwg.mxu0
  %v648 = vld [vmem:[%s5] sm:$0xf]
  %v649 = vld [vmem:[%s5 + $0x4] sm:$0xf]
  %v650 = vld [vmem:[%s5 + $0x8] sm:$0xf]
  %v651 = vld [vmem:[%s5 + $0xc] sm:$0xf]
  %v652 = vld [vmem:[%s5 + $0x10] sm:$0xf]
  %v653 = vld [vmem:[%s5 + $0x14] sm:$0xf]
  %v654 = vld [vmem:[%s5 + $0x18] sm:$0xf]
  %v655 = vld [vmem:[%s5 + $0x1c] sm:$0xf]
  %v656 = vrot.slane %v80, 3
  %v657 = vrot.slane %v81, 3
  %v658 = vsel %vm243, %v656, %v657
  %v659 = vrot.slane %v82, 3
  %v660 = vsel %vm243, %v657, %v659
  %v661 = vrot.slane %v83, 3
  %v662 = vsel %vm243, %v659, %v661
  %v663 = vrot.slane %v88, 3
  %v664 = vsel %vm243, %v661, %v663
  %v673 = vunpack.c.l.b16 %v648
  %v674 = vunpack.c.l.b16 %v649
  %v675 = vunpack.c.l.b16 %v650
  %v676 = vunpack.c.l.b16 %v651
  %v677 = vunpack.c.l.b16 %v652
  %v678 = vunpack.c.l.b16 %v653
  %v679 = vunpack.c.l.b16 %v654
  %v680 = vunpack.c.l.b16 %v655
  %v681 = vpack.c.b16 %v674, %v673
  %v682 = vpack.c.b16 %v676, %v675
  %v683 = vpack.c.b16 %v678, %v677
  %v684 = vpack.c.b16 %v680, %v679
  %v690 = vsel %vm175, %v658, 0
  %v693 = vsel %vm175, %v660, 0
  %v696 = vsel %vm175, %v662, 0
  %v699 = vsel %vm175, %v664, 0
  %701 = vmatpush.bf16.msra.mxu0 0
  %702 = vmatpush.bf16.msra.mxu0 0
  %703 = vmatpush.bf16.msra.mxu0 0
  %704 = vmatpush.bf16.msra.mxu0 0
  %705 = vmatpush.bf16.msra.mxu0 %v684
  %706 = vmatpush.bf16.msra.mxu0 %v683
  %707 = vmatpush.bf16.msra.mxu0 %v682
  %708 = vmatpush.bf16.msra.mxu0 %v681
  %709 = vmatmul.bf16.gmra.mxu0 %v690
  %v710 = vpop.f32.mrf.mxu0
  %v711 = vadd.f32 0.0, %v710
  %v712 = vpop.f32.mrf.mxu0
  %v713 = vadd.f32 0.0, %v712
  %714 = vmatmul.bf16.gmra.mxu0 %v693
  %v715 = vpop.f32.mrf.mxu0
  %v716 = vadd.f32 0.0, %v715
  %v717 = vpop.f32.mrf.mxu0
  %v718 = vadd.f32 0.0, %v717
  %719 = vmatmul.bf16.gmra.mxu0 %v696
  %v720 = vpop.f32.mrf.mxu0
  %v721 = vadd.f32 0.0, %v720
  %v722 = vpop.f32.mrf.mxu0
  %v723 = vadd.f32 0.0, %v722
  %724 = vmatmul.bf16.gmra.mxu0 %v699
  %v725 = vpop.f32.mrf.mxu0
  %v726 = vadd.f32 0.0, %v725
  %v727 = vpop.f32.mrf.mxu0
  %v728 = vadd.f32 0.0, %v727
  %729 = vdwg.mxu0
  %738 = vrot.lane.b32.xlu0 %v536, 32
  %v739 = vpop.permute.xlu0 %738
  %740 = vrot.lane.b32.xlu0 %v538, 32
  %v741 = vpop.permute.xlu0 %740
  %742 = vrot.lane.b32.xlu0 %v541, 32
  %v743 = vpop.permute.xlu0 %742
  %744 = vrot.lane.b32.xlu0 %v543, 32
  %v745 = vpop.permute.xlu0 %744
  %746 = vrot.lane.b32.xlu0 %v546, 32
  %v747 = vpop.permute.xlu0 %746
  %748 = vrot.lane.b32.xlu0 %v548, 32
  %v749 = vpop.permute.xlu0 %748
  %750 = vrot.lane.b32.xlu0 %v551, 32
  %v751 = vpop.permute.xlu0 %750
  %752 = vrot.lane.b32.xlu0 %v553, 32
  %v753 = vpop.permute.xlu0 %752
  %770 = vrot.lane.b32.xlu0 %v629, 64
  %v771 = vpop.permute.xlu0 %770
  %772 = vrot.lane.b32.xlu0 %v631, 64
  %v773 = vpop.permute.xlu0 %772
  %774 = vrot.lane.b32.xlu0 %v634, 64
  %v775 = vpop.permute.xlu0 %774
  %776 = vrot.lane.b32.xlu0 %v636, 64
  %v777 = vpop.permute.xlu0 %776
  %778 = vrot.lane.b32.xlu0 %v639, 64
  %v779 = vpop.permute.xlu0 %778
  %780 = vrot.lane.b32.xlu0 %v641, 64
  %v781 = vpop.permute.xlu0 %780
  %782 = vrot.lane.b32.xlu0 %v644, 64
  %v783 = vpop.permute.xlu0 %782
  %784 = vrot.lane.b32.xlu0 %v646, 64
  %v785 = vpop.permute.xlu0 %784
  %802 = vrot.lane.b32.xlu0 %v711, 96
  %v803 = vpop.permute.xlu0 %802
  %804 = vrot.lane.b32.xlu0 %v713, 96
  %v805 = vpop.permute.xlu0 %804
  %806 = vrot.lane.b32.xlu0 %v716, 96
  %v807 = vpop.permute.xlu0 %806
  %808 = vrot.lane.b32.xlu0 %v718, 96
  %v809 = vpop.permute.xlu0 %808
  %810 = vrot.lane.b32.xlu0 %v721, 96
  %v811 = vpop.permute.xlu0 %810
  %812 = vrot.lane.b32.xlu0 %v723, 96
  %v813 = vpop.permute.xlu0 %812
  %814 = vrot.lane.b32.xlu0 %v726, 96
  %v815 = vpop.permute.xlu0 %814
  %816 = vrot.lane.b32.xlu0 %v728, 96
  %v817 = vpop.permute.xlu0 %816
  %vm826 = vcmask 261120
  %v827 = vsel %vm826, %v405, %v739
  %v828 = vsel %vm826, %v407, %v741
  %v829 = vsel %vm826, %v410, %v743
  %v830 = vsel %vm826, %v412, %v745
  %v831 = vsel %vm826, %v415, %v747
  %v832 = vsel %vm826, %v417, %v749
  %v833 = vsel %vm826, %v420, %v751
  %v834 = vsel %vm826, %v422, %v753
  %v835 = vsel %vm175, %v827, %v771
  %v836 = vsel %vm175, %v828, %v773
  %v837 = vsel %vm175, %v829, %v775
  %v838 = vsel %vm175, %v830, %v777
  %v839 = vsel %vm175, %v831, %v779
  %v840 = vsel %vm175, %v832, %v781
  %v841 = vsel %vm175, %v833, %v783
  %v842 = vsel %vm175, %v834, %v785
  %vm843 = vcmask 785408
  %v844 = vsel %vm843, %v835, %v803
  %v845 = vsel %vm843, %v836, %v805
  %v846 = vsel %vm843, %v837, %v807
  %v847 = vsel %vm843, %v838, %v809
  %v848 = vsel %vm843, %v839, %v811
  %v849 = vsel %vm843, %v840, %v813
  %v850 = vsel %vm843, %v841, %v815
  %v851 = vsel %vm843, %v842, %v817
  %v852 = vld [vmem:[%s6] sm:$0x1]
  %v854 = vperm.slane %v852, 0
  %v856 = vadd.f32 %v844, %v854
  %v857 = vadd.f32 %v845, %v854
  %v858 = vadd.f32 %v846, %v854
  %v859 = vadd.f32 %v847, %v854
  %v860 = vadd.f32 %v848, %v854
  %v861 = vadd.f32 %v849, %v854
  %v862 = vadd.f32 %v850, %v854
  %v863 = vadd.f32 %v851, %v854
  %v864 = vmax.f32 %v856, 0.0
  %v865 = vmax.f32 %v857, 0.0
  %v866 = vmax.f32 %v858, 0.0
  %v867 = vmax.f32 %v859, 0.0
  %v868 = vmax.f32 %v860, 0.0
  %v869 = vmax.f32 %v861, 0.0
  %v870 = vmax.f32 %v862, 0.0
  %v871 = vmax.f32 %v863, 0.0
  %v872 = vpack.c.bf16 %v864, %v864
  %v873 = vpack.c.bf16 %v865, %v865
  %v874 = vpack.c.bf16 %v866, %v866
  %v875 = vpack.c.bf16 %v867, %v867
  %v876 = vpack.c.bf16 %v868, %v868
  %v877 = vpack.c.bf16 %v869, %v869
  %v878 = vpack.c.bf16 %v870, %v870
  %v879 = vpack.c.bf16 %v871, %v871
  %880 = vst [vmem:[%s7] sm:$0xf] %v872
  %881 = vst [vmem:[%s7 + $0x4] sm:$0xf] %v873
  %882 = vst [vmem:[%s7 + $0x8] sm:$0xf] %v874
  %883 = vst [vmem:[%s7 + $0xc] sm:$0xf] %v875
  %884 = vst [vmem:[%s7 + $0x10] sm:$0xf] %v876
  %885 = vst [vmem:[%s7 + $0x14] sm:$0xf] %v877
  %886 = vst [vmem:[%s7 + $0x18] sm:$0xf] %v878
  %887 = vst [vmem:[%s7 + $0x1c] sm:$0xf] %v879
  // Predicated region
  $region30: #{forward.10} parent=0 // pred_check
    _
  $region31: #{forward.10} parent=0 // pred_check_branch
    %889 = sbr.rel (0) target = $region33
  $region32: #{forward.10} parent=0 // pred_region
    _
  $region33: #{forward.10} parent=0 // pred_fallthru
    _
  // Predicated region
  $region34: #{forward.10} parent=0 // pred_check
    _
  $region35: #{forward.10} parent=0 // pred_check_branch
    %891 = sbr.rel (0) target = $region37
  $region36: #{forward.10} parent=0 // pred_region
    _
  $region37: #{forward.10} parent=0 // pred_fallthru
    _

// kernel: forward.11
$region0: #{forward.11}
  #allocation0 [shape = 'u32[]', space=smem, size = 0x4, offset = 0x4, fixed_abs, tag = 'smem constant byte address 0x4 - core index']
  #allocation1 [shape = 'u32[72,128]{1,0:T(1,128)}', space=vmem, size = 0x9000, scoped, tag = 'internal scratch']
  %s0 = inlined_call_operand.vmem [shape: bf16[1,128,32], index: 0, kind: input, shape index: {}, may-alias: {0,1}]
  %s1 = inlined_call_operand.vmem [shape: bf16[1,128,32], index: 1, kind: input, shape index: {}, may-alias: {0,1}]
  %s2 = inlined_call_operand.vmem [shape: bf16[32,3], index: 2, kind: input, shape index: {}]
  %s3 = inlined_call_operand.vmem [shape: bf16[32,3], index: 3, kind: input, shape index: {}]
  %s4 = inlined_call_operand.vmem [shape: bf16[32,3], index: 4, kind: input, shape index: {}]
  %s5 = inlined_call_operand.vmem [shape: bf16[32,3], index: 5, kind: input, shape index: {}]
  %s6 = inlined_call_operand.vmem [shape: f32[1,12], index: 6, kind: input, shape index: {}]
  %s7 = inlined_call_operand.vmem [shape: f32[112,12], index: 7, kind: output, shape index: {}]
  %s8 = sld [smem:[#allocation0]]
  $region38: #{forward.11} parent=0
    _
  %s10 = ssub.s32 1, %s8
  %s11 = scalar_select 0, %s10, %s8
  // Predicated region
  $region2: #{forward.11} parent=0 // pred_check
    _
  $region3: #{forward.11} parent=0 // pred_check_branch
    %13 = sbr.rel (0) target = $region5
  $region4: #{forward.11} parent=0 // pred_region
    _
  $region5: #{forward.11} parent=0 // pred_fallthru
    _
  // Predicated region
  $region6: #{forward.11} parent=0 // pred_check
    _
  $region7: #{forward.11} parent=0 // pred_check_branch
    %15 = sbr.rel (0) target = $region9
  $region8: #{forward.11} parent=0 // pred_region
    %s16 = sadd.s32 0, 1
    %s17 = smul.u32 %s16, 7
    %s18 = smul.u32 2, %s17
    %p19 = scmp.lt.s32.totalorder %s18, 15
    %s20 = scalar_select %p19, %s18, 15
    %s21 = smul.addr %s20, 4
    %s22 = scalar_lea.vmem %s1, %s21
    %s23 = sadd.s32 0, 1
    %s24 = smul.u32 %s23, 7
    %s25 = smul.u32 2, %s24
  $region9: #{forward.11} parent=0 // pred_fallthru
    _
  // Predicated region
  $region10: #{forward.11} parent=0 // pred_check
    _
  $region11: #{forward.11} parent=0 // pred_check_branch
    %27 = sbr.rel (0) target = $region13
  $region12: #{forward.11} parent=0 // pred_region
    _
  $region13: #{forward.11} parent=0 // pred_fallthru
    _
  // Predicated region
  $region14: #{forward.11} parent=0 // pred_check
    _
  $region15: #{forward.11} parent=0 // pred_check_branch
    %29 = sbr.rel (0) target = $region17
  $region16: #{forward.11} parent=0 // pred_region
    _
  $region17: #{forward.11} parent=0 // pred_fallthru
    _
  // Predicated region
  $region18: #{forward.11} parent=0 // pred_check
    _
  $region19: #{forward.11} parent=0 // pred_check_branch
    %31 = sbr.rel (0) target = $region21
  $region20: #{forward.11} parent=0 // pred_region
    _
  $region21: #{forward.11} parent=0 // pred_fallthru
    _
  // Predicated region
  $region22: #{forward.11} parent=0 // pred_check
    _
  $region23: #{forward.11} parent=0 // pred_check_branch
    %33 = sbr.rel (0) target = $region25
  $region24: #{forward.11} parent=0 // pred_region
    _
  $region25: #{forward.11} parent=0 // pred_fallthru
    _
  // Predicated region
  $region26: #{forward.11} parent=0 // pred_check
    _
  $region27: #{forward.11} parent=0 // pred_check_branch
    %35 = sbr.rel (0) target = $region29
  $region28: #{forward.11} parent=0 // pred_region
    _
  $region29: #{forward.11} parent=0 // pred_fallthru
    _
  %s36 = sadd.s32 0, 1
  %s37 = smul.u32 %s36, 7
  %s38 = smul.u32 2, %s37
  %p39 = scmp.lt.s32.totalorder %s38, 15
  %s40 = scalar_select %p39, %s38, 15
  %s41 = smul.addr %s40, 4
  %s42 = scalar_lea.vmem %s1, %s41
  %s43 = sadd.s32 0, 1
  %s44 = smul.u32 %s43, 7
  %s45 = smul.u32 2, %s44
  %p46 = scmp.lt.s32.totalorder %s45, 15
  %s47 = scalar_select %p46, %s45, 15
  %s48 = smul.addr %s47, 4
  %s49 = scalar_lea.vmem %s1, %s48
  %s50 = sadd.s32 0, 1
  %s51 = smul.u32 %s50, 7
  %s52 = smul.u32 2, %s51
  %v54 = vld [vmem:[%s0] sm:$0xf]
  %v55 = vld [vmem:[%s0 + $0x4] sm:$0xf]
  %v56 = vld [vmem:[%s0 + $0x8] sm:$0xf]
  %v57 = vld [vmem:[%s0 + $0xc] sm:$0xf]
  %v58 = vld [vmem:[%s0 + $0x10] sm:$0xf]
  %v59 = vld [vmem:[%s0 + $0x14] sm:$0xf]
  %v60 = vld [vmem:[%s0 + $0x18] sm:$0xf]
  %v61 = vld [vmem:[%s0 + $0x1c] sm:$0xf]
  %v62 = vld [vmem:[%s0 + $0x20] sm:$0xf]
  %v63 = vld [vmem:[%s0 + $0x24] sm:$0xf]
  %v64 = vld [vmem:[%s0 + $0x28] sm:$0xf]
  %v65 = vld [vmem:[%s0 + $0x2c] sm:$0xf]
  %v66 = vld [vmem:[%s0 + $0x30] sm:$0xf]
  %v67 = vld [vmem:[%s0 + $0x34] sm:$0xf]
  %v68 = vld [vmem:[%s49] sm:$0xf]
  %v69 = vld [vmem:[%s49 + $0x4] sm:$0xf]
  %v84 = vunpack.c.l.b16 %v54
  %v85 = vunpack.c.l.b16 %v55
  %v86 = vunpack.c.l.b16 %v56
  %v87 = vunpack.c.l.b16 %v57
  %v88 = vunpack.c.l.b16 %v58
  %v89 = vunpack.c.l.b16 %v59
  %v90 = vunpack.c.l.b16 %v60
  %v91 = vunpack.c.l.b16 %v61
  %v92 = vunpack.c.l.b16 %v62
  %v93 = vunpack.c.l.b16 %v63
  %v94 = vunpack.c.l.b16 %v64
  %v95 = vunpack.c.l.b16 %v65
  %v96 = vunpack.c.l.b16 %v66
  %v97 = vunpack.c.l.b16 %v67
  %v98 = vpack.c.b16 %v85, %v84
  %v99 = vpack.c.b16 %v87, %v86
  %v100 = vpack.c.b16 %v89, %v88
  %v101 = vpack.c.b16 %v91, %v90
  %v102 = vpack.c.b16 %v93, %v92
  %v103 = vpack.c.b16 %v95, %v94
  %v104 = vpack.c.b16 %v97, %v96
  %v107 = vunpack.c.l.b16 %v68
  %v108 = vunpack.c.l.b16 %v69
  %v109 = vpack.c.b16 %v108, %v107
  %v110 = vld [vmem:[%s2] sm:$0xf]
  %v111 = vld [vmem:[%s2 + $0x4] sm:$0xf]
  %v112 = vld [vmem:[%s2 + $0x8] sm:$0xf]
  %v113 = vld [vmem:[%s2 + $0xc] sm:$0xf]
  %v118 = vunpack.c.l.b16 %v110
  %v119 = vunpack.c.l.b16 %v111
  %v120 = vunpack.c.l.b16 %v112
  %v121 = vunpack.c.l.b16 %v113
  %v122 = vpack.c.b16 %v119, %v118
  %v123 = vpack.c.b16 %v121, %v120
  %vm126 = vcmask 261120
  %v128 = vsel %vm126, %v98, 0
  %v131 = vsel %vm126, %v99, 0
  %v134 = vsel %vm126, %v100, 0
  %v137 = vsel %vm126, %v101, 0
  %v140 = vsel %vm126, %v102, 0
  %v143 = vsel %vm126, %v103, 0
  %v146 = vsel %vm126, %v104, 0
  %148 = vmatpush.bf16.msra.mxu0 0
  %149 = vmatpush.bf16.msra.mxu0 0
  %150 = vmatpush.bf16.msra.mxu0 0
  %151 = vmatpush.bf16.msra.mxu0 0
  %152 = vmatpush.bf16.msra.mxu0 0
  %153 = vmatpush.bf16.msra.mxu0 0
  %154 = vmatpush.bf16.msra.mxu0 %v123
  %155 = vmatpush.bf16.msra.mxu0 %v122
  %156 = vmatmul.bf16.gmra.mxu0 %v128
  %v157 = vpop.f32.mrf.mxu0
  %v158 = vadd.f32 0.0, %v157
  %v159 = vpop.f32.mrf.mxu0
  %v160 = vadd.f32 0.0, %v159
  %161 = vmatmul.bf16.gmra.mxu0 %v131
  %v162 = vpop.f32.mrf.mxu0
  %v163 = vadd.f32 0.0, %v162
  %v164 = vpop.f32.mrf.mxu0
  %v165 = vadd.f32 0.0, %v164
  %166 = vmatmul.bf16.gmra.mxu0 %v134
  %v167 = vpop.f32.mrf.mxu0
  %v168 = vadd.f32 0.0, %v167
  %v169 = vpop.f32.mrf.mxu0
  %v170 = vadd.f32 0.0, %v169
  %171 = vmatmul.bf16.gmra.mxu0 %v137
  %v172 = vpop.f32.mrf.mxu0
  %v173 = vadd.f32 0.0, %v172
  %v174 = vpop.f32.mrf.mxu0
  %v175 = vadd.f32 0.0, %v174
  %176 = vmatmul.bf16.gmra.mxu0 %v140
  %v177 = vpop.f32.mrf.mxu0
  %v178 = vadd.f32 0.0, %v177
  %v179 = vpop.f32.mrf.mxu0
  %v180 = vadd.f32 0.0, %v179
  %181 = vmatmul.bf16.gmra.mxu0 %v143
  %v182 = vpop.f32.mrf.mxu0
  %v183 = vadd.f32 0.0, %v182
  %v184 = vpop.f32.mrf.mxu0
  %v185 = vadd.f32 0.0, %v184
  %186 = vmatmul.bf16.gmra.mxu0 %v146
  %v187 = vpop.f32.mrf.mxu0
  %v188 = vadd.f32 0.0, %v187
  %v189 = vpop.f32.mrf.mxu0
  %v190 = vadd.f32 0.0, %v189
  %191 = vdwg.mxu0
  %v192 = vld [vmem:[%s3] sm:$0xf]
  %v193 = vld [vmem:[%s3 + $0x4] sm:$0xf]
  %v194 = vld [vmem:[%s3 + $0x8] sm:$0xf]
  %v195 = vld [vmem:[%s3 + $0xc] sm:$0xf]
  %vm196 = vsmask.f32 7424
  %v197 = vshrl.u32 %v98, 16
  %v199 = vshll.u32 %v98, 16
  %v201 = vrot.slane %v199, 1
  %v202 = vor.u32 %v197, %v201
  %v203 = vshll.u32 %v99, 16
  %v205 = vrot.slane %v203, 1
  %v206 = vsel %vm196, %v202, %v205
  %v207 = vshrl.u32 %v99, 16
  %v209 = vor.u32 %v207, %v205
  %v210 = vshll.u32 %v100, 16
  %v212 = vrot.slane %v210, 1
  %v213 = vsel %vm196, %v209, %v212
  %v214 = vshrl.u32 %v100, 16
  %v216 = vor.u32 %v214, %v212
  %v217 = vshll.u32 %v101, 16
  %v219 = vrot.slane %v217, 1
  %v220 = vsel %vm196, %v216, %v219
  %v221 = vshrl.u32 %v101, 16
  %v223 = vor.u32 %v221, %v219
  %v224 = vshll.u32 %v102, 16
  %v226 = vrot.slane %v224, 1
  %v227 = vsel %vm196, %v223, %v226
  %v228 = vshrl.u32 %v102, 16
  %v230 = vor.u32 %v228, %v226
  %v231 = vshll.u32 %v103, 16
  %v233 = vrot.slane %v231, 1
  %v234 = vsel %vm196, %v230, %v233
  %v235 = vshrl.u32 %v103, 16
  %v237 = vor.u32 %v235, %v233
  %v238 = vshll.u32 %v104, 16
  %v240 = vrot.slane %v238, 1
  %v241 = vsel %vm196, %v237, %v240
  %v242 = vshrl.u32 %v104, 16
  %v244 = vor.u32 %v242, %v240
  %v246 = vshll.u32 %v109, 16
  %v248 = vrot.slane %v246, 1
  %v249 = vsel %vm196, %v244, %v248
  %v254 = vunpack.c.l.b16 %v192
  %v255 = vunpack.c.l.b16 %v193
  %v256 = vunpack.c.l.b16 %v194
  %v257 = vunpack.c.l.b16 %v195
  %v258 = vpack.c.b16 %v255, %v254
  %v259 = vpack.c.b16 %v257, %v256
  %v263 = vsel %vm126, %v206, 0
  %v266 = vsel %vm126, %v213, 0
  %v269 = vsel %vm126, %v220, 0
  %v272 = vsel %vm126, %v227, 0
  %v275 = vsel %vm126, %v234, 0
  %v278 = vsel %vm126, %v241, 0
  %v281 = vsel %vm126, %v249, 0
  %283 = vmatpush.bf16.msra.mxu0 0
  %284 = vmatpush.bf16.msra.mxu0 0
  %285 = vmatpush.bf16.msra.mxu0 0
  %286 = vmatpush.bf16.msra.mxu0 0
  %287 = vmatpush.bf16.msra.mxu0 0
  %288 = vmatpush.bf16.msra.mxu0 0
  %289 = vmatpush.bf16.msra.mxu0 %v259
  %290 = vmatpush.bf16.msra.mxu0 %v258
  %291 = vmatmul.bf16.gmra.mxu0 %v263
  %v292 = vpop.f32.mrf.mxu0
  %v293 = vadd.f32 0.0, %v292
  %v294 = vpop.f32.mrf.mxu0
  %v295 = vadd.f32 0.0, %v294
  %296 = vmatmul.bf16.gmra.mxu0 %v266
  %v297 = vpop.f32.mrf.mxu0
  %v298 = vadd.f32 0.0, %v297
  %v299 = vpop.f32.mrf.mxu0
  %v300 = vadd.f32 0.0, %v299
  %301 = vmatmul.bf16.gmra.mxu0 %v269
  %v302 = vpop.f32.mrf.mxu0
  %v303 = vadd.f32 0.0, %v302
  %v304 = vpop.f32.mrf.mxu0
  %v305 = vadd.f32 0.0, %v304
  %306 = vmatmul.bf16.gmra.mxu0 %v272
  %v307 = vpop.f32.mrf.mxu0
  %v308 = vadd.f32 0.0, %v307
  %v309 = vpop.f32.mrf.mxu0
  %v310 = vadd.f32 0.0, %v309
  %311 = vmatmul.bf16.gmra.mxu0 %v275
  %v312 = vpop.f32.mrf.mxu0
  %v313 = vadd.f32 0.0, %v312
  %v314 = vpop.f32.mrf.mxu0
  %v315 = vadd.f32 0.0, %v314
  %316 = vmatmul.bf16.gmra.mxu0 %v278
  %v317 = vpop.f32.mrf.mxu0
  %v318 = vadd.f32 0.0, %v317
  %v319 = vpop.f32.mrf.mxu0
  %v320 = vadd.f32 0.0, %v319
  %321 = vmatmul.bf16.gmra.mxu0 %v281
  %v322 = vpop.f32.mrf.mxu0
  %v323 = vadd.f32 0.0, %v322
  %v324 = vpop.f32.mrf.mxu0
  %v325 = vadd.f32 0.0, %v324
  %326 = vdwg.mxu0
  %v327 = vld [vmem:[%s4] sm:$0xf]
  %v328 = vld [vmem:[%s4 + $0x4] sm:$0xf]
  %v329 = vld [vmem:[%s4 + $0x8] sm:$0xf]
  %v330 = vld [vmem:[%s4 + $0xc] sm:$0xf]
  %vm331 = vsmask.f32 4352
  %v332 = vrot.slane %v197, 3
  %v333 = vrot.slane %v199, 4
  %v334 = vor.u32 %v332, %v333
  %v335 = vrot.slane %v207, 3
  %v336 = vrot.slane %v203, 4
  %v337 = vor.u32 %v335, %v336
  %v338 = vsel %vm331, %v334, %v337
  %v339 = vrot.slane %v214, 3
  %v340 = vrot.slane %v210, 4
  %v341 = vor.u32 %v339, %v340
  %v342 = vsel %vm331, %v337, %v341
  %v343 = vrot.slane %v221, 3
  %v344 = vrot.slane %v217, 4
  %v345 = vor.u32 %v343, %v344
  %v346 = vsel %vm331, %v341, %v345
  %v347 = vrot.slane %v228, 3
  %v348 = vrot.slane %v224, 4
  %v349 = vor.u32 %v347, %v348
  %v350 = vsel %vm331, %v345, %v349
  %v351 = vrot.slane %v235, 3
  %v352 = vrot.slane %v231, 4
  %v353 = vor.u32 %v351, %v352
  %v354 = vsel %vm331, %v349, %v353
  %v355 = vrot.slane %v242, 3
  %v356 = vrot.slane %v238, 4
  %v357 = vor.u32 %v355, %v356
  %v358 = vsel %vm331, %v353, %v357
  %v359 = vshrl.u32 %v109, 16
  %v361 = vrot.slane %v359, 3
  %v362 = vrot.slane %v246, 4
  %v363 = vor.u32 %v361, %v362
  %v364 = vsel %vm331, %v357, %v363
  %v369 = vunpack.c.l.b16 %v327
  %v370 = vunpack.c.l.b16 %v328
  %v371 = vunpack.c.l.b16 %v329
  %v372 = vunpack.c.l.b16 %v330
  %v373 = vpack.c.b16 %v370, %v369
  %v374 = vpack.c.b16 %v372, %v371
  %v378 = vsel %vm126, %v338, 0
  %v381 = vsel %vm126, %v342, 0
  %v384 = vsel %vm126, %v346, 0
  %v387 = vsel %vm126, %v350, 0
  %v390 = vsel %vm126, %v354, 0
  %v393 = vsel %vm126, %v358, 0
  %v396 = vsel %vm126, %v364, 0
  %398 = vmatpush.bf16.msra.mxu0 0
  %399 = vmatpush.bf16.msra.mxu0 0
  %400 = vmatpush.bf16.msra.mxu0 0
  %401 = vmatpush.bf16.msra.mxu0 0
  %402 = vmatpush.bf16.msra.mxu0 0
  %403 = vmatpush.bf16.msra.mxu0 0
  %404 = vmatpush.bf16.msra.mxu0 %v374
  %405 = vmatpush.bf16.msra.mxu0 %v373
  %406 = vmatmul.bf16.gmra.mxu0 %v378
  %v407 = vpop.f32.mrf.mxu0
  %v408 = vadd.f32 0.0, %v407
  %v409 = vpop.f32.mrf.mxu0
  %v410 = vadd.f32 0.0, %v409
  %411 = vmatmul.bf16.gmra.mxu0 %v381
  %v412 = vpop.f32.mrf.mxu0
  %v413 = vadd.f32 0.0, %v412
  %v414 = vpop.f32.mrf.mxu0
  %v415 = vadd.f32 0.0, %v414
  %416 = vmatmul.bf16.gmra.mxu0 %v384
  %v417 = vpop.f32.mrf.mxu0
  %v418 = vadd.f32 0.0, %v417
  %v419 = vpop.f32.mrf.mxu0
  %v420 = vadd.f32 0.0, %v419
  %421 = vmatmul.bf16.gmra.mxu0 %v387
  %v422 = vpop.f32.mrf.mxu0
  %v423 = vadd.f32 0.0, %v422
  %v424 = vpop.f32.mrf.mxu0
  %v425 = vadd.f32 0.0, %v424
  %426 = vmatmul.bf16.gmra.mxu0 %v390
  %v427 = vpop.f32.mrf.mxu0
  %v428 = vadd.f32 0.0, %v427
  %v429 = vpop.f32.mrf.mxu0
  %v430 = vadd.f32 0.0, %v429
  %431 = vmatmul.bf16.gmra.mxu0 %v393
  %v432 = vpop.f32.mrf.mxu0
  %v433 = vadd.f32 0.0, %v432
  %v434 = vpop.f32.mrf.mxu0
  %v435 = vadd.f32 0.0, %v434
  %436 = vmatmul.bf16.gmra.mxu0 %v396
  %v437 = vpop.f32.mrf.mxu0
  %v438 = vadd.f32 0.0, %v437
  %v439 = vpop.f32.mrf.mxu0
  %v440 = vadd.f32 0.0, %v439
  %441 = vdwg.mxu0
  %v442 = vld [vmem:[%s5] sm:$0xf]
  %v443 = vld [vmem:[%s5 + $0x4] sm:$0xf]
  %v444 = vld [vmem:[%s5 + $0x8] sm:$0xf]
  %v445 = vld [vmem:[%s5 + $0xc] sm:$0xf]
  %vm446 = vcmask 1043456
  %v447 = vrot.slane %v98, 4
  %v448 = vrot.slane %v99, 4
  %v449 = vsel %vm446, %v447, %v448
  %v450 = vrot.slane %v100, 4
  %v451 = vsel %vm446, %v448, %v450
  %v452 = vrot.slane %v101, 4
  %v453 = vsel %vm446, %v450, %v452
  %v454 = vrot.slane %v102, 4
  %v455 = vsel %vm446, %v452, %v454
  %v456 = vrot.slane %v103, 4
  %v457 = vsel %vm446, %v454, %v456
  %v458 = vrot.slane %v104, 4
  %v459 = vsel %vm446, %v456, %v458
  %v460 = vrot.slane %v109, 4
  %v461 = vsel %vm446, %v458, %v460
  %v466 = vunpack.c.l.b16 %v442
  %v467 = vunpack.c.l.b16 %v443
  %v468 = vunpack.c.l.b16 %v444
  %v469 = vunpack.c.l.b16 %v445
  %v470 = vpack.c.b16 %v467, %v466
  %v471 = vpack.c.b16 %v469, %v468
  %v475 = vsel %vm126, %v449, 0
  %v478 = vsel %vm126, %v451, 0
  %v481 = vsel %vm126, %v453, 0
  %v484 = vsel %vm126, %v455, 0
  %v487 = vsel %vm126, %v457, 0
  %v490 = vsel %vm126, %v459, 0
  %v493 = vsel %vm126, %v461, 0
  %495 = vmatpush.bf16.msra.mxu0 0
  %496 = vmatpush.bf16.msra.mxu0 0
  %497 = vmatpush.bf16.msra.mxu0 0
  %498 = vmatpush.bf16.msra.mxu0 0
  %499 = vmatpush.bf16.msra.mxu0 0
  %500 = vmatpush.bf16.msra.mxu0 0
  %501 = vmatpush.bf16.msra.mxu0 %v471
  %502 = vmatpush.bf16.msra.mxu0 %v470
  %503 = vmatmul.bf16.gmra.mxu0 %v475
  %v504 = vpop.f32.mrf.mxu0
  %v505 = vadd.f32 0.0, %v504
  %v506 = vpop.f32.mrf.mxu0
  %v507 = vadd.f32 0.0, %v506
  %508 = vmatmul.bf16.gmra.mxu0 %v478
  %v509 = vpop.f32.mrf.mxu0
  %v510 = vadd.f32 0.0, %v509
  %v511 = vpop.f32.mrf.mxu0
  %v512 = vadd.f32 0.0, %v511
  %513 = vmatmul.bf16.gmra.mxu0 %v481
  %v514 = vpop.f32.mrf.mxu0
  %v515 = vadd.f32 0.0, %v514
  %v516 = vpop.f32.mrf.mxu0
  %v517 = vadd.f32 0.0, %v516
  %518 = vmatmul.bf16.gmra.mxu0 %v484
  %v519 = vpop.f32.mrf.mxu0
  %v520 = vadd.f32 0.0, %v519
  %v521 = vpop.f32.mrf.mxu0
  %v522 = vadd.f32 0.0, %v521
  %523 = vmatmul.bf16.gmra.mxu0 %v487
  %v524 = vpop.f32.mrf.mxu0
  %v525 = vadd.f32 0.0, %v524
  %v526 = vpop.f32.mrf.mxu0
  %v527 = vadd.f32 0.0, %v526
  %528 = vmatmul.bf16.gmra.mxu0 %v490
  %v529 = vpop.f32.mrf.mxu0
  %v530 = vadd.f32 0.0, %v529
  %v531 = vpop.f32.mrf.mxu0
  %v532 = vadd.f32 0.0, %v531
  %533 = vmatmul.bf16.gmra.mxu0 %v493
  %v534 = vpop.f32.mrf.mxu0
  %v535 = vadd.f32 0.0, %v534
  %v536 = vpop.f32.mrf.mxu0
  %v537 = vadd.f32 0.0, %v536
  %538 = vdwg.mxu0
  %553 = vrot.lane.b32.xlu0 %v293, 3
  %v554 = vpop.permute.xlu0 %553
  %555 = vrot.lane.b32.xlu0 %v295, 3
  %v556 = vpop.permute.xlu0 %555
  %557 = vrot.lane.b32.xlu0 %v298, 3
  %v558 = vpop.permute.xlu0 %557
  %559 = vrot.lane.b32.xlu0 %v300, 3
  %v560 = vpop.permute.xlu0 %559
  %561 = vrot.lane.b32.xlu0 %v303, 3
  %v562 = vpop.permute.xlu0 %561
  %563 = vrot.lane.b32.xlu0 %v305, 3
  %v564 = vpop.permute.xlu0 %563
  %565 = vrot.lane.b32.xlu0 %v308, 3
  %v566 = vpop.permute.xlu0 %565
  %567 = vrot.lane.b32.xlu0 %v310, 3
  %v568 = vpop.permute.xlu0 %567
  %569 = vrot.lane.b32.xlu0 %v313, 3
  %v570 = vpop.permute.xlu0 %569
  %571 = vrot.lane.b32.xlu0 %v315, 3
  %v572 = vpop.permute.xlu0 %571
  %573 = vrot.lane.b32.xlu0 %v318, 3
  %v574 = vpop.permute.xlu0 %573
  %575 = vrot.lane.b32.xlu0 %v320, 3
  %v576 = vpop.permute.xlu0 %575
  %577 = vrot.lane.b32.xlu0 %v323, 3
  %v578 = vpop.permute.xlu0 %577
  %579 = vrot.lane.b32.xlu0 %v325, 3
  %v580 = vpop.permute.xlu0 %579
  %609 = vrot.lane.b32.xlu0 %v408, 6
  %v610 = vpop.permute.xlu0 %609
  %611 = vrot.lane.b32.xlu0 %v410, 6
  %v612 = vpop.permute.xlu0 %611
  %613 = vrot.lane.b32.xlu0 %v413, 6
  %v614 = vpop.permute.xlu0 %613
  %615 = vrot.lane.b32.xlu0 %v415, 6
  %v616 = vpop.permute.xlu0 %615
  %617 = vrot.lane.b32.xlu0 %v418, 6
  %v618 = vpop.permute.xlu0 %617
  %619 = vrot.lane.b32.xlu0 %v420, 6
  %v620 = vpop.permute.xlu0 %619
  %621 = vrot.lane.b32.xlu0 %v423, 6
  %v622 = vpop.permute.xlu0 %621
  %623 = vrot.lane.b32.xlu0 %v425, 6
  %v624 = vpop.permute.xlu0 %623
  %625 = vrot.lane.b32.xlu0 %v428, 6
  %v626 = vpop.permute.xlu0 %625
  %627 = vrot.lane.b32.xlu0 %v430, 6
  %v628 = vpop.permute.xlu0 %627
  %629 = vrot.lane.b32.xlu0 %v433, 6
  %v630 = vpop.permute.xlu0 %629
  %631 = vrot.lane.b32.xlu0 %v435, 6
  %v632 = vpop.permute.xlu0 %631
  %633 = vrot.lane.b32.xlu0 %v438, 6
  %v634 = vpop.permute.xlu0 %633
  %635 = vrot.lane.b32.xlu0 %v440, 6
  %v636 = vpop.permute.xlu0 %635
  %665 = vrot.lane.b32.xlu0 %v505, 9
  %v666 = vpop.permute.xlu0 %665
  %667 = vrot.lane.b32.xlu0 %v507, 9
  %v668 = vpop.permute.xlu0 %667
  %669 = vrot.lane.b32.xlu0 %v510, 9
  %v670 = vpop.permute.xlu0 %669
  %671 = vrot.lane.b32.xlu0 %v512, 9
  %v672 = vpop.permute.xlu0 %671
  %673 = vrot.lane.b32.xlu0 %v515, 9
  %v674 = vpop.permute.xlu0 %673
  %675 = vrot.lane.b32.xlu0 %v517, 9
  %v676 = vpop.permute.xlu0 %675
  %677 = vrot.lane.b32.xlu0 %v520, 9
  %v678 = vpop.permute.xlu0 %677
  %679 = vrot.lane.b32.xlu0 %v522, 9
  %v680 = vpop.permute.xlu0 %679
  %681 = vrot.lane.b32.xlu0 %v525, 9
  %v682 = vpop.permute.xlu0 %681
  %683 = vrot.lane.b32.xlu0 %v527, 9
  %v684 = vpop.permute.xlu0 %683
  %685 = vrot.lane.b32.xlu0 %v530, 9
  %v686 = vpop.permute.xlu0 %685
  %687 = vrot.lane.b32.xlu0 %v532, 9
  %v688 = vpop.permute.xlu0 %687
  %689 = vrot.lane.b32.xlu0 %v535, 9
  %v690 = vpop.permute.xlu0 %689
  %691 = vrot.lane.b32.xlu0 %v537, 9
  %v692 = vpop.permute.xlu0 %691
  %vm707 = vcmask 23552
  %v708 = vsel %vm707, %v158, %v554
  %v709 = vsel %vm707, %v160, %v556
  %v710 = vsel %vm707, %v163, %v558
  %v711 = vsel %vm707, %v165, %v560
  %v712 = vsel %vm707, %v168, %v562
  %v713 = vsel %vm707, %v170, %v564
  %v714 = vsel %vm707, %v173, %v566
  %v715 = vsel %vm707, %v175, %v568
  %v716 = vsel %vm707, %v178, %v570
  %v717 = vsel %vm707, %v180, %v572
  %v718 = vsel %vm707, %v183, %v574
  %v719 = vsel %vm707, %v185, %v576
  %v720 = vsel %vm707, %v188, %v578
  %v721 = vsel %vm707, %v190, %v580
  %vm722 = vcmask 48128
  %v723 = vsel %vm722, %v708, %v610
  %v724 = vsel %vm722, %v709, %v612
  %v725 = vsel %vm722, %v710, %v614
  %v726 = vsel %vm722, %v711, %v616
  %v727 = vsel %vm722, %v712, %v618
  %v728 = vsel %vm722, %v713, %v620
  %v729 = vsel %vm722, %v714, %v622
  %v730 = vsel %vm722, %v715, %v624
  %v731 = vsel %vm722, %v716, %v626
  %v732 = vsel %vm722, %v717, %v628
  %v733 = vsel %vm722, %v718, %v630
  %v734 = vsel %vm722, %v719, %v632
  %v735 = vsel %vm722, %v720, %v634
  %v736 = vsel %vm722, %v721, %v636
  %vm737 = vcmask 72704
  %v738 = vsel %vm737, %v723, %v666
  %v739 = vsel %vm737, %v724, %v668
  %v740 = vsel %vm737, %v725, %v670
  %v741 = vsel %vm737, %v726, %v672
  %v742 = vsel %vm737, %v727, %v674
  %v743 = vsel %vm737, %v728, %v676
  %v744 = vsel %vm737, %v729, %v678
  %v745 = vsel %vm737, %v730, %v680
  %v746 = vsel %vm737, %v731, %v682
  %v747 = vsel %vm737, %v732, %v684
  %v748 = vsel %vm737, %v733, %v686
  %v749 = vsel %vm737, %v734, %v688
  %v750 = vsel %vm737, %v735, %v690
  %v751 = vsel %vm737, %v736, %v692
  %v752 = vld [vmem:[%s6] sm:$0x1]
  %v754 = vperm.slane %v752, 0
  %v756 = vadd.f32 %v738, %v754
  %v757 = vadd.f32 %v739, %v754
  %v758 = vadd.f32 %v740, %v754
  %v759 = vadd.f32 %v741, %v754
  %v760 = vadd.f32 %v742, %v754
  %v761 = vadd.f32 %v743, %v754
  %v762 = vadd.f32 %v744, %v754
  %v763 = vadd.f32 %v745, %v754
  %v764 = vadd.f32 %v746, %v754
  %v765 = vadd.f32 %v747, %v754
  %v766 = vadd.f32 %v748, %v754
  %v767 = vadd.f32 %v749, %v754
  %v768 = vadd.f32 %v750, %v754
  %v769 = vadd.f32 %v751, %v754
  %v770 = vtanh.pop %v756
  %v771 = vtanh.pop %v757
  %v772 = vtanh.pop %v758
  %v773 = vtanh.pop %v759
  %v774 = vtanh.pop %v760
  %v775 = vtanh.pop %v761
  %v776 = vtanh.pop %v762
  %v777 = vtanh.pop %v763
  %v778 = vtanh.pop %v764
  %v779 = vtanh.pop %v765
  %v780 = vtanh.pop %v766
  %v781 = vtanh.pop %v767
  %v782 = vtanh.pop %v768
  %v783 = vtanh.pop %v769
  %vm784 = vcmask 97280
  %785 = vst.msk [vmem:[%s7] sm:$0xff] %vm784, %v770
  %786 = vst.msk [vmem:[%s7 + $0x8] sm:$0xff] %vm784, %v771
  %787 = vst.msk [vmem:[%s7 + $0x10] sm:$0xff] %vm784, %v772
  %788 = vst.msk [vmem:[%s7 + $0x18] sm:$0xff] %vm784, %v773
  %789 = vst.msk [vmem:[%s7 + $0x20] sm:$0xff] %vm784, %v774
  %790 = vst.msk [vmem:[%s7 + $0x28] sm:$0xff] %vm784, %v775
  %791 = vst.msk [vmem:[%s7 + $0x30] sm:$0xff] %vm784, %v776
  %792 = vst.msk [vmem:[%s7 + $0x38] sm:$0xff] %vm784, %v777
  %793 = vst.msk [vmem:[%s7 + $0x40] sm:$0xff] %vm784, %v778
  %794 = vst.msk [vmem:[%s7 + $0x48] sm:$0xff] %vm784, %v779
  %795 = vst.msk [vmem:[%s7 + $0x50] sm:$0xff] %vm784, %v780
  %796 = vst.msk [vmem:[%s7 + $0x58] sm:$0xff] %vm784, %v781
  %797 = vst.msk [vmem:[%s7 + $0x60] sm:$0xff] %vm784, %v782
  %798 = vst.msk [vmem:[%s7 + $0x68] sm:$0xff] %vm784, %v783
  // Predicated region
  $region30: #{forward.11} parent=0 // pred_check
    _
  $region31: #{forward.11} parent=0 // pred_check_branch
    %800 = sbr.rel (0) target = $region33
  $region32: #{forward.11} parent=0 // pred_region
    _
  $region33: #{forward.11} parent=0 // pred_fallthru
    _
  // Predicated region
  $region34: #{forward.11} parent=0 // pred_check
    _
  $region35: #{forward.11} parent=0 // pred_check_branch
    %802 = sbr.rel (0) target = $region37
  $region36: #{forward.11} parent=0 // pred_region
    _
  $region37: #{forward.11} parent=0 // pred_fallthru
    _

</llo_original>
